<compile_context>
chip_gen: v6e
topology: v6e:2x2x1
jax: 0.10.0
libtpu: 0.0.40
codegen_flags: <defaults>
</compile_context>

<pallas_src>
import math
from functools import partial

import jax
import jax.numpy as jnp
from jax.experimental import pallas as pl
from jax.experimental.pallas import tpu as pltpu

LANE = 128


def _round_up(x, m):
    return ((x + m - 1) // m) * m


# ----------------------------------------------------------------------------
# Fused kernel: fc0+ReLU -> nlayers x (GCNII conv + ReLU) -> fc1+sigmoid
# ----------------------------------------------------------------------------
def _gcnii_fused_kernel(scal_ref, x_ref, adj_ref, fc0w_ref, fc0b_ref,
                        convw_ref, fc1w_ref, fc1b_ref, o_ref,
                        h_ref, h0_ref, *, nlayers):
    # --- fc0 + ReLU ;  h0 = _layers[0] ---
    h = jnp.dot(x_ref[...], fc0w_ref[...], preferred_element_type=jnp.float32)
    h = jnp.maximum(h + fc0b_ref[...], 0.0)
    h_ref[...] = h
    h0_ref[...] = h

    # --- GraphConvolution(variant=False, residual=True) + ReLU, unrolled ---
    #   hi      = adj @ h
    #   support = (1-alpha)*hi + alpha*h0
    #   out     = theta*(support @ W_l) + (1-theta)*support + h   (residual)
    #   h       = relu(out)
    for l in range(nlayers):
        theta = scal_ref[2 * l]
        alpha = scal_ref[2 * l + 1]
        h = h_ref[...]
        hi = jnp.dot(adj_ref[...], h.astype(jnp.bfloat16),
                     preferred_element_type=jnp.float32)
        support = (1.0 - alpha) * hi + alpha * h0_ref[...]
        proj = jnp.dot(support.astype(jnp.bfloat16), convw_ref[l],
                       preferred_element_type=jnp.float32)
        out = theta * proj + (1.0 - theta) * support + h
        h_ref[...] = jnp.maximum(out, 0.0)

    # --- fc1 + sigmoid ---
    y = jnp.dot(h_ref[...].astype(jnp.bfloat16), fc1w_ref[...],
                preferred_element_type=jnp.float32)
    y = y + fc1b_ref[...]
    o_ref[...] = 1.0 / (1.0 + jnp.exp(-y))


# ----------------------------------------------------------------------------
# pallas_call wrapper
# ----------------------------------------------------------------------------
def gcnii_ppi_forward(params, x_p, adj_p, scalars, *, nlayers):
    n_p = adj_p.shape[0]
    nfeat_p = x_p.shape[1]
    nhid_p = params["fc0_w"].shape[1]
    ncls_p = params["fc1_w"].shape[1]

    flops = (2 * n_p * nfeat_p * nhid_p
             + nlayers * (2 * n_p * n_p * nhid_p + 2 * n_p * nhid_p * nhid_p)
             + 2 * n_p * nhid_p * ncls_p)
    bytes_accessed = (x_p.size * 2 + adj_p.size * 2
                      + params["conv_w"].size * 2
                      + params["fc0_w"].size * 2 + params["fc1_w"].size * 2
                      + (params["fc0_b"].size + params["fc1_b"].size) * 4
                      + n_p * ncls_p * 4)

    vmem = pltpu.MemorySpace.VMEM
    return pl.pallas_call(
        partial(_gcnii_fused_kernel, nlayers=nlayers),
        out_shape=jax.ShapeDtypeStruct((n_p, ncls_p), jnp.float32),
        in_specs=[
            pl.BlockSpec(memory_space=pltpu.MemorySpace.SMEM),  # (theta,alpha)*L
            pl.BlockSpec(memory_space=vmem),                    # x
            pl.BlockSpec(memory_space=vmem),                    # adj
            pl.BlockSpec(memory_space=vmem),                    # fc0_w
            pl.BlockSpec(memory_space=vmem),                    # fc0_b
            pl.BlockSpec(memory_space=vmem),                    # conv_w (stacked)
            pl.BlockSpec(memory_space=vmem),                    # fc1_w
            pl.BlockSpec(memory_space=vmem),                    # fc1_b
        ],
        out_specs=pl.BlockSpec(memory_space=vmem),
        scratch_shapes=[
            pltpu.VMEM((n_p, nhid_p), jnp.float32),   # h  (f32 across layers)
            pltpu.VMEM((n_p, nhid_p), jnp.float32),   # h0 (f32, written once)
        ],
        cost_estimate=pl.CostEstimate(
            flops=flops, transcendentals=n_p * ncls_p,
            bytes_accessed=bytes_accessed),
    )(scalars, x_p, adj_p, params["fc0_w"], params["fc0_b"],
      params["conv_w"], params["fc1_w"], params["fc1_b"])


# ----------------------------------------------------------------------------
# Parameters (zero-padded to lane-multiple feature dims)
# ----------------------------------------------------------------------------
def init_params(key, nfeat, nlayers, nhidden, nclass, nfeat_p, nhid_p, ncls_p):
    keys = jax.random.split(key, 4 + nlayers)

    def pad2(a, r, c):
        return jnp.pad(a, ((0, r - a.shape[0]), (0, c - a.shape[1])))

    # fcs[0]: Linear(nfeat, nhidden), torch init U(-1/sqrt(nfeat), 1/sqrt(nfeat))
    s0 = 1.0 / math.sqrt(nfeat)
    w0 = jax.random.uniform(keys[0], (nfeat, nhidden), jnp.float32, -s0, s0)
    b0 = jax.random.uniform(keys[1], (1, nhidden), jnp.float32, -s0, s0)

    # fcs[1]: Linear(nhidden, nclass)
    s1 = 1.0 / math.sqrt(nhidden)
    w1 = jax.random.uniform(keys[2], (nhidden, nclass), jnp.float32, -s1, s1)
    b1 = jax.random.uniform(keys[3], (1, nclass), jnp.float32, -s1, s1)

    # convs[i]: GraphConvolution weight (nhidden, nhidden), U(-1/sqrt(out), .)
    sc = 1.0 / math.sqrt(nhidden)
    conv_ws = [
        jax.random.uniform(keys[4 + i], (nhidden, nhidden), jnp.float32, -sc, sc)
        for i in range(nlayers)
    ]

    return {
        "fc0_w": pad2(w0, nfeat_p, nhid_p).astype(jnp.bfloat16),
        "fc0_b": pad2(b0, 1, nhid_p),                              # f32
        "fc1_w": pad2(w1, nhid_p, ncls_p).astype(jnp.bfloat16),
        "fc1_b": pad2(b1, 1, ncls_p),                              # f32
        "conv_w": jnp.stack([pad2(w, nhid_p, nhid_p) for w in conv_ws]
                            ).astype(jnp.bfloat16),                # (L, d, d)
    }


# ----------------------------------------------------------------------------
# Pure-JAX reference mirroring the kernel's arithmetic (bf16 MXU operands,
# f32 accumulation) -- used only for the correctness check in __main__.
# ----------------------------------------------------------------------------
def gcnii_ppi_reference(params, x_p, adj_p, scalars, nlayers):
    f32, bf16 = jnp.float32, jnp.bfloat16
    h = jnp.dot(x_p.astype(f32), params["fc0_w"].astype(f32))
    h = jnp.maximum(h + params["fc0_b"], 0.0)
    h0 = h
    adj = adj_p.astype(f32)
    for l in range(nlayers):
        theta = scalars[2 * l]
        alpha = scalars[2 * l + 1]
        hi = jnp.dot(adj, h.astype(bf16).astype(f32))
        support = (1.0 - alpha) * hi + alpha * h0
        proj = jnp.dot(support.astype(bf16).astype(f32),
                       params["conv_w"][l].astype(f32))
        out = theta * proj + (1.0 - theta) * support + h
        h = jnp.maximum(out, 0.0)
    y = jnp.dot(h.astype(bf16).astype(f32), params["fc1_w"].astype(f32))
    y = y + params["fc1_b"]
    return 1.0 / (1.0 + jnp.exp(-y))


# ----------------------------------------------------------------------------
# main
# ----------------------------------------------------------------------------
if __name__ == "__main__":
    # Logical (unpadded) problem sizes.
    N = 200
    NFEAT = 50
    NHIDDEN = 64
    NCLASS = 10
    NLAYERS = 3
    LAMDA = 0.5
    ALPHA = 0.1

    # Padded sizes: rows and feature dims to 128-lane multiples.
    N_P = _round_up(N, LANE)           # 256
    NFEAT_P = _round_up(NFEAT, LANE)   # 128
    NHID_P = _round_up(NHIDDEN, LANE)  # 128
    NCLS_P = _round_up(NCLASS, LANE)   # 128

    key = jax.random.PRNGKey(0)
    k_x, k_adj, k_p = jax.random.split(key, 3)

    x = jax.random.normal(k_x, (N, NFEAT), dtype=jnp.float32)

    # Dense adjacency with self loops, row-normalized (torch.spmm -> dense mm).
    a = (jax.random.uniform(k_adj, (N, N)) > 0.7).astype(jnp.float32)
    a = a + jnp.eye(N, dtype=jnp.float32)
    adj = a / jnp.sum(a, axis=1, keepdims=True)

    # Zero-pad and cast MXU operands to bf16. Padded adj rows/cols are zero so
    # nothing from padded node rows leaks into the [:N, :NCLASS] slice.
    x_p = jnp.pad(x, ((0, N_P - N), (0, NFEAT_P - NFEAT))).astype(jnp.bfloat16)
    adj_p = jnp.pad(adj, ((0, N_P - N), (0, N_P - N))).astype(jnp.bfloat16)

    params = init_params(k_p, NFEAT, NLAYERS, NHIDDEN, NCLASS,
                         NFEAT_P, NHID_P, NCLS_P)

    # Per-layer (theta, alpha) flattened for SMEM; theta = log(lamda/l + 1).
    scalars = jnp.asarray(
        [v for l in range(NLAYERS)
         for v in (math.log(LAMDA / (l + 1) + 1.0), ALPHA)],
        dtype=jnp.float32)

    fwd = jax.jit(partial(gcnii_ppi_forward, nlayers=NLAYERS))
    out_padded = jax.block_until_ready(fwd(params, x_p, adj_p, scalars))

    out = out_padded[:N, :NCLASS]
    assert out.shape == (N, NCLASS)
    assert bool(jnp.all(jnp.isfinite(out)))

    # Loose numeric check against a pure-JAX reference of the same arithmetic.
    ref = gcnii_ppi_reference(params, x_p, adj_p, scalars, NLAYERS)[:N, :NCLASS]
    max_err = float(jnp.max(jnp.abs(out - ref)))
    assert max_err < 5e-2, f"max abs error vs reference: {max_err}"

    print("KERNEL_OK")
</pallas_src>

<mosaic_0001>
module attributes {stable_mosaic.version = 11 : i64} {
  func.func @_gcnii_fused_kernel(%arg0: memref<6xf32, #tpu.memory_space<smem>>, %arg1: memref<256x128xbf16, #tpu.memory_space<vmem>>, %arg2: memref<256x256xbf16, #tpu.memory_space<vmem>>, %arg3: memref<128x128xbf16, #tpu.memory_space<vmem>>, %arg4: memref<1x128xf32, #tpu.memory_space<vmem>>, %arg5: memref<3x128x128xbf16, #tpu.memory_space<vmem>>, %arg6: memref<128x128xbf16, #tpu.memory_space<vmem>>, %arg7: memref<1x128xf32, #tpu.memory_space<vmem>>, %arg8: memref<256x128xf32, #tpu.memory_space<vmem>>, %arg9: memref<256x128xf32, #tpu.memory_space<vmem>>, %arg10: memref<256x128xf32, #tpu.memory_space<vmem>>) attributes {dimension_semantics = [], scalar_prefetch = 0 : i64, scratch_operands = 2 : i64, tpu.core_type = #tpu.core_type<tc>} {
    %c0 = arith.constant 0 : index
    %c0_0 = arith.constant 0 : index
    %0 = vector.load %arg1[%c0, %c0_0] : memref<256x128xbf16, #tpu.memory_space<vmem>>, vector<256x128xbf16>
    %c0_1 = arith.constant 0 : index
    %c0_2 = arith.constant 0 : index
    %1 = vector.load %arg3[%c0_1, %c0_2] : memref<128x128xbf16, #tpu.memory_space<vmem>>, vector<128x128xbf16>
    %cst = arith.constant dense<0.000000e+00> : vector<256x128xf32>
    %2 = tpu.matmul %0, %1, %cst {dimension_numbers = #tpu.dot_dimension_numbers<[1], [0], [0], [1], [0, 0, 1, 1], [], []>} : vector<256x128xbf16>, vector<128x128xbf16>, vector<256x128xf32> -> vector<256x128xf32>
    %c0_3 = arith.constant 0 : index
    %c0_4 = arith.constant 0 : index
    %3 = vector.load %arg4[%c0_3, %c0_4] : memref<1x128xf32, #tpu.memory_space<vmem>>, vector<1x128xf32>
    %4 = vector.broadcast %3 : vector<1x128xf32> to vector<256x128xf32>
    %5 = arith.addf %2, %4 : vector<256x128xf32>
    %cst_5 = arith.constant 0.000000e+00 : f32
    %6 = vector.broadcast %cst_5 : f32 to vector<256x128xf32>
    %7 = arith.maximumf %5, %6 : vector<256x128xf32>
    %c0_6 = arith.constant 0 : index
    %c0_7 = arith.constant 0 : index
    %8 = vector.load %arg9[%c0_6, %c0_7] : memref<256x128xf32, #tpu.memory_space<vmem>>, vector<256x128xf32>
    tpu.vector_store %arg9[%c0_6, %c0_7], %7 {strides = array<i32>} : memref<256x128xf32, #tpu.memory_space<vmem>>, vector<256x128xf32>,
    %c0_8 = arith.constant 0 : index
    %c0_9 = arith.constant 0 : index
    %9 = vector.load %arg10[%c0_8, %c0_9] : memref<256x128xf32, #tpu.memory_space<vmem>>, vector<256x128xf32>
    tpu.vector_store %arg10[%c0_8, %c0_9], %7 {strides = array<i32>} : memref<256x128xf32, #tpu.memory_space<vmem>>, vector<256x128xf32>,
    %c0_10 = arith.constant 0 : index
    %10 = memref.load %arg0[%c0_10] : memref<6xf32, #tpu.memory_space<smem>>
    %c1 = arith.constant 1 : index
    %11 = memref.load %arg0[%c1] : memref<6xf32, #tpu.memory_space<smem>>
    %c0_11 = arith.constant 0 : index
    %c0_12 = arith.constant 0 : index
    %12 = vector.load %arg9[%c0_11, %c0_12] : memref<256x128xf32, #tpu.memory_space<vmem>>, vector<256x128xf32>
    %c0_13 = arith.constant 0 : index
    %c0_14 = arith.constant 0 : index
    %13 = vector.load %arg2[%c0_13, %c0_14] : memref<256x256xbf16, #tpu.memory_space<vmem>>, vector<256x256xbf16>
    %14 = arith.truncf %12 : vector<256x128xf32> to vector<256x128xbf16>
    %cst_15 = arith.constant dense<0.000000e+00> : vector<256x128xf32>
    %15 = tpu.matmul %13, %14, %cst_15 {dimension_numbers = #tpu.dot_dimension_numbers<[1], [0], [0], [1], [0, 0, 1, 1], [], []>} : vector<256x256xbf16>, vector<256x128xbf16>, vector<256x128xf32> -> vector<256x128xf32>
    %cst_16 = arith.constant 1.000000e+00 : f32
    %16 = arith.subf %cst_16, %11 : f32
    %17 = vector.broadcast %16 : f32 to vector<256x128xf32>
    %18 = arith.mulf %17, %15 : vector<256x128xf32>
    %c0_17 = arith.constant 0 : index
    %c0_18 = arith.constant 0 : index
    %19 = vector.load %arg10[%c0_17, %c0_18] : memref<256x128xf32, #tpu.memory_space<vmem>>, vector<256x128xf32>
    %20 = vector.broadcast %11 : f32 to vector<256x128xf32>
    %21 = arith.mulf %20, %19 : vector<256x128xf32>
    %22 = arith.addf %18, %21 : vector<256x128xf32>
    %23 = arith.truncf %22 : vector<256x128xf32> to vector<256x128xbf16>
    %c0_19 = arith.constant 0 : index
    %c0_20 = arith.constant 0 : index
    %c0_21 = arith.constant 0 : index
    %24 = vector.load %arg5[%c0_19, %c0_20, %c0_21] : memref<3x128x128xbf16, #tpu.memory_space<vmem>>, vector<1x128x128xbf16>
    %25 = vector.shape_cast %24 : vector<1x128x128xbf16> to vector<128x128xbf16>
    %cst_22 = arith.constant dense<0.000000e+00> : vector<256x128xf32>
    %26 = tpu.matmul %23, %25, %cst_22 {dimension_numbers = #tpu.dot_dimension_numbers<[1], [0], [0], [1], [0, 0, 1, 1], [], []>} : vector<256x128xbf16>, vector<128x128xbf16>, vector<256x128xf32> -> vector<256x128xf32>
    %27 = vector.broadcast %10 : f32 to vector<256x128xf32>
    %28 = arith.mulf %27, %26 : vector<256x128xf32>
    %cst_23 = arith.constant 1.000000e+00 : f32
    %29 = arith.subf %cst_23, %10 : f32
    %30 = vector.broadcast %29 : f32 to vector<256x128xf32>
    %31 = arith.mulf %30, %22 : vector<256x128xf32>
    %32 = arith.addf %28, %31 : vector<256x128xf32>
    %33 = arith.addf %32, %12 : vector<256x128xf32>
    %cst_24 = arith.constant 0.000000e+00 : f32
    %34 = vector.broadcast %cst_24 : f32 to vector<256x128xf32>
    %35 = arith.maximumf %33, %34 : vector<256x128xf32>
    %c0_25 = arith.constant 0 : index
    %c0_26 = arith.constant 0 : index
    %36 = vector.load %arg9[%c0_25, %c0_26] : memref<256x128xf32, #tpu.memory_space<vmem>>, vector<256x128xf32>
    tpu.vector_store %arg9[%c0_25, %c0_26], %35 {strides = array<i32>} : memref<256x128xf32, #tpu.memory_space<vmem>>, vector<256x128xf32>,
    %c2 = arith.constant 2 : index
    %37 = memref.load %arg0[%c2] : memref<6xf32, #tpu.memory_space<smem>>
    %c3 = arith.constant 3 : index
    %38 = memref.load %arg0[%c3] : memref<6xf32, #tpu.memory_space<smem>>
    %c0_27 = arith.constant 0 : index
    %c0_28 = arith.constant 0 : index
    %39 = vector.load %arg9[%c0_27, %c0_28] : memref<256x128xf32, #tpu.memory_space<vmem>>, vector<256x128xf32>
    %c0_29 = arith.constant 0 : index
    %c0_30 = arith.constant 0 : index
    %40 = vector.load %arg2[%c0_29, %c0_30] : memref<256x256xbf16, #tpu.memory_space<vmem>>, vector<256x256xbf16>
    %41 = arith.truncf %39 : vector<256x128xf32> to vector<256x128xbf16>
    %cst_31 = arith.constant dense<0.000000e+00> : vector<256x128xf32>
    %42 = tpu.matmul %40, %41, %cst_31 {dimension_numbers = #tpu.dot_dimension_numbers<[1], [0], [0], [1], [0, 0, 1, 1], [], []>} : vector<256x256xbf16>, vector<256x128xbf16>, vector<256x128xf32> -> vector<256x128xf32>
    %cst_32 = arith.constant 1.000000e+00 : f32
    %43 = arith.subf %cst_32, %38 : f32
    %44 = vector.broadcast %43 : f32 to vector<256x128xf32>
    %45 = arith.mulf %44, %42 : vector<256x128xf32>
    %c0_33 = arith.constant 0 : index
    %c0_34 = arith.constant 0 : index
    %46 = vector.load %arg10[%c0_33, %c0_34] : memref<256x128xf32, #tpu.memory_space<vmem>>, vector<256x128xf32>
    %47 = vector.broadcast %38 : f32 to vector<256x128xf32>
    %48 = arith.mulf %47, %46 : vector<256x128xf32>
    %49 = arith.addf %45, %48 : vector<256x128xf32>
    %50 = arith.truncf %49 : vector<256x128xf32> to vector<256x128xbf16>
    %c1_35 = arith.constant 1 : index
    %c0_36 = arith.constant 0 : index
    %c0_37 = arith.constant 0 : index
    %51 = vector.load %arg5[%c1_35, %c0_36, %c0_37] : memref<3x128x128xbf16, #tpu.memory_space<vmem>>, vector<1x128x128xbf16>
    %52 = vector.shape_cast %51 : vector<1x128x128xbf16> to vector<128x128xbf16>
    %cst_38 = arith.constant dense<0.000000e+00> : vector<256x128xf32>
    %53 = tpu.matmul %50, %52, %cst_38 {dimension_numbers = #tpu.dot_dimension_numbers<[1], [0], [0], [1], [0, 0, 1, 1], [], []>} : vector<256x128xbf16>, vector<128x128xbf16>, vector<256x128xf32> -> vector<256x128xf32>
    %54 = vector.broadcast %37 : f32 to vector<256x128xf32>
    %55 = arith.mulf %54, %53 : vector<256x128xf32>
    %cst_39 = arith.constant 1.000000e+00 : f32
    %56 = arith.subf %cst_39, %37 : f32
    %57 = vector.broadcast %56 : f32 to vector<256x128xf32>
    %58 = arith.mulf %57, %49 : vector<256x128xf32>
    %59 = arith.addf %55, %58 : vector<256x128xf32>
    %60 = arith.addf %59, %39 : vector<256x128xf32>
    %cst_40 = arith.constant 0.000000e+00 : f32
    %61 = vector.broadcast %cst_40 : f32 to vector<256x128xf32>
    %62 = arith.maximumf %60, %61 : vector<256x128xf32>
    %c0_41 = arith.constant 0 : index
    %c0_42 = arith.constant 0 : index
    %63 = vector.load %arg9[%c0_41, %c0_42] : memref<256x128xf32, #tpu.memory_space<vmem>>, vector<256x128xf32>
    tpu.vector_store %arg9[%c0_41, %c0_42], %62 {strides = array<i32>} : memref<256x128xf32, #tpu.memory_space<vmem>>, vector<256x128xf32>,
    %c4 = arith.constant 4 : index
    %64 = memref.load %arg0[%c4] : memref<6xf32, #tpu.memory_space<smem>>
    %c5 = arith.constant 5 : index
    %65 = memref.load %arg0[%c5] : memref<6xf32, #tpu.memory_space<smem>>
    %c0_43 = arith.constant 0 : index
    %c0_44 = arith.constant 0 : index
    %66 = vector.load %arg9[%c0_43, %c0_44] : memref<256x128xf32, #tpu.memory_space<vmem>>, vector<256x128xf32>
    %c0_45 = arith.constant 0 : index
    %c0_46 = arith.constant 0 : index
    %67 = vector.load %arg2[%c0_45, %c0_46] : memref<256x256xbf16, #tpu.memory_space<vmem>>, vector<256x256xbf16>
    %68 = arith.truncf %66 : vector<256x128xf32> to vector<256x128xbf16>
    %cst_47 = arith.constant dense<0.000000e+00> : vector<256x128xf32>
    %69 = tpu.matmul %67, %68, %cst_47 {dimension_numbers = #tpu.dot_dimension_numbers<[1], [0], [0], [1], [0, 0, 1, 1], [], []>} : vector<256x256xbf16>, vector<256x128xbf16>, vector<256x128xf32> -> vector<256x128xf32>
    %cst_48 = arith.constant 1.000000e+00 : f32
    %70 = arith.subf %cst_48, %65 : f32
    %71 = vector.broadcast %70 : f32 to vector<256x128xf32>
    %72 = arith.mulf %71, %69 : vector<256x128xf32>
    %c0_49 = arith.constant 0 : index
    %c0_50 = arith.constant 0 : index
    %73 = vector.load %arg10[%c0_49, %c0_50] : memref<256x128xf32, #tpu.memory_space<vmem>>, vector<256x128xf32>
    %74 = vector.broadcast %65 : f32 to vector<256x128xf32>
    %75 = arith.mulf %74, %73 : vector<256x128xf32>
    %76 = arith.addf %72, %75 : vector<256x128xf32>
    %77 = arith.truncf %76 : vector<256x128xf32> to vector<256x128xbf16>
    %c2_51 = arith.constant 2 : index
    %c0_52 = arith.constant 0 : index
    %c0_53 = arith.constant 0 : index
    %78 = vector.load %arg5[%c2_51, %c0_52, %c0_53] : memref<3x128x128xbf16, #tpu.memory_space<vmem>>, vector<1x128x128xbf16>
    %79 = vector.shape_cast %78 : vector<1x128x128xbf16> to vector<128x128xbf16>
    %cst_54 = arith.constant dense<0.000000e+00> : vector<256x128xf32>
    %80 = tpu.matmul %77, %79, %cst_54 {dimension_numbers = #tpu.dot_dimension_numbers<[1], [0], [0], [1], [0, 0, 1, 1], [], []>} : vector<256x128xbf16>, vector<128x128xbf16>, vector<256x128xf32> -> vector<256x128xf32>
    %81 = vector.broadcast %64 : f32 to vector<256x128xf32>
    %82 = arith.mulf %81, %80 : vector<256x128xf32>
    %cst_55 = arith.constant 1.000000e+00 : f32
    %83 = arith.subf %cst_55, %64 : f32
    %84 = vector.broadcast %83 : f32 to vector<256x128xf32>
    %85 = arith.mulf %84, %76 : vector<256x128xf32>
    %86 = arith.addf %82, %85 : vector<256x128xf32>
    %87 = arith.addf %86, %66 : vector<256x128xf32>
    %cst_56 = arith.constant 0.000000e+00 : f32
    %88 = vector.broadcast %cst_56 : f32 to vector<256x128xf32>
    %89 = arith.maximumf %87, %88 : vector<256x128xf32>
    %c0_57 = arith.constant 0 : index
    %c0_58 = arith.constant 0 : index
    %90 = vector.load %arg9[%c0_57, %c0_58] : memref<256x128xf32, #tpu.memory_space<vmem>>, vector<256x128xf32>
    tpu.vector_store %arg9[%c0_57, %c0_58], %89 {strides = array<i32>} : memref<256x128xf32, #tpu.memory_space<vmem>>, vector<256x128xf32>,
    %c0_59 = arith.constant 0 : index
    %c0_60 = arith.constant 0 : index
    %91 = vector.load %arg9[%c0_59, %c0_60] : memref<256x128xf32, #tpu.memory_space<vmem>>, vector<256x128xf32>
    %92 = arith.truncf %91 : vector<256x128xf32> to vector<256x128xbf16>
    %c0_61 = arith.constant 0 : index
    %c0_62 = arith.constant 0 : index
    %93 = vector.load %arg6[%c0_61, %c0_62] : memref<128x128xbf16, #tpu.memory_space<vmem>>, vector<128x128xbf16>
    %cst_63 = arith.constant dense<0.000000e+00> : vector<256x128xf32>
    %94 = tpu.matmul %92, %93, %cst_63 {dimension_numbers = #tpu.dot_dimension_numbers<[1], [0], [0], [1], [0, 0, 1, 1], [], []>} : vector<256x128xbf16>, vector<128x128xbf16>, vector<256x128xf32> -> vector<256x128xf32>
    %c0_64 = arith.constant 0 : index
    %c0_65 = arith.constant 0 : index
    %95 = vector.load %arg7[%c0_64, %c0_65] : memref<1x128xf32, #tpu.memory_space<vmem>>, vector<1x128xf32>
    %96 = vector.broadcast %95 : vector<1x128xf32> to vector<256x128xf32>
    %97 = arith.addf %94, %96 : vector<256x128xf32>
    %cst_66 = arith.constant 0.000000e+00 : f32
    %98 = vector.broadcast %cst_66 : f32 to vector<256x128xf32>
    %99 = arith.subf %98, %97 : vector<256x128xf32>
    %100 = math.exp %99 : vector<256x128xf32>
    %cst_67 = arith.constant 1.000000e+00 : f32
    %101 = vector.broadcast %cst_67 : f32 to vector<256x128xf32>
    %102 = arith.addf %101, %100 : vector<256x128xf32>
    %cst_68 = arith.constant 1.000000e+00 : f32
    %103 = vector.broadcast %cst_68 : f32 to vector<256x128xf32>
    %104 = arith.divf %103, %102 : vector<256x128xf32>
    %c0_69 = arith.constant 0 : index
    %c0_70 = arith.constant 0 : index
    %105 = vector.load %arg8[%c0_69, %c0_70] : memref<256x128xf32, #tpu.memory_space<vmem>>, vector<256x128xf32>
    tpu.vector_store %arg8[%c0_69, %c0_70], %104 {strides = array<i32>} : memref<256x128xf32, #tpu.memory_space<vmem>>, vector<256x128xf32>,
    return
  }
}

</mosaic_0001>

<llo_original>
// kernel: gcnii_ppi_forward.1
$region0: #{gcnii_ppi_forward.1}
  #allocation0 [shape = 'u32[]', space=smem, size = 0x4, offset = 0x4, fixed_abs, tag = 'smem constant byte address 0x4 - core index']
  #allocation1 [shape = 'u32[144,128]{1,0:T(1,128)}', space=vmem, size = 0x12000, scoped, tag = 'internal scratch']
  #allocation2 [shape = 'f32[256,128]{1,0:T(8,128)}', space=vmem, size = 0x20000, scoped, tag = 'scratch operand']
  #allocation3 [shape = 'f32[256,128]{1,0:T(8,128)}', space=vmem, size = 0x20000, scoped, tag = 'scratch operand']
  %s0 = inlined_call_operand.vmem [shape: f32[6], index: 0, kind: input, shape index: {}]
  %s1 = inlined_call_operand.hbm [shape: bf16[256,128], index: 1, kind: input, shape index: {}]
  %s2 = inlined_call_operand.hbm [shape: bf16[256,256], index: 2, kind: input, shape index: {}]
  %s3 = inlined_call_operand.hbm [shape: bf16[128,128], index: 3, kind: input, shape index: {}]
  %s4 = inlined_call_operand.hbm [shape: f32[1,128], index: 4, kind: input, shape index: {}]
  %s5 = inlined_call_operand.hbm [shape: bf16[3,128,128], index: 5, kind: input, shape index: {}]
  %s6 = inlined_call_operand.hbm [shape: bf16[128,128], index: 6, kind: input, shape index: {}]
  %s7 = inlined_call_operand.vmem [shape: f32[1,128], index: 7, kind: input, shape index: {}]
  %s8 = inlined_call_operand.hbm [shape: f32[256,128], index: 8, kind: output, shape index: {}]
  %s9 = sld [smem:[#allocation0]]
  $region70: #{gcnii_ppi_forward.1} parent=0
    _
  %s11 = ssub.s32 1, %s9
  %s12 = scalar_select 0, %s11, %s9
  $region1: #{gcnii_ppi_forward.1} parent=0
    #allocation4 [shape = 'u8[512]{0}', space=smem, size = 0x200, scoped, tag = 'input window, operand 0, single buffered']
    #allocation5 [shape = 's32[1]{0}', space=sflag, size = 0x4, scoped, tag = 'scoped memory for gcnii_ppi_forward.1']
    #allocation6 [shape = 's32[1]{0}', space=sflag, size = 0x4, scoped, tag = 'scoped memory for gcnii_ppi_forward.1']
    #allocation7 [shape = 's32[1]{0}', space=sflag, size = 0x4, scoped, tag = 'scoped memory for gcnii_ppi_forward.1']
    #allocation8 [shape = 'u8[65536]{0}', space=vmem, size = 0x10000, scoped, tag = 'input window, operand 1, single buffered']
    #allocation9 [shape = 'u8[131072]{0}', space=vmem, size = 0x20000, scoped, tag = 'input window, operand 2, single buffered']
    #allocation10 [shape = 's32[1]{0}', space=sflag, size = 0x4, scoped, tag = 'scoped memory for gcnii_ppi_forward.1']
    #allocation11 [shape = 'u8[32768]{0}', space=vmem, size = 0x8000, scoped, tag = 'input window, operand 3, single buffered']
    #allocation12 [shape = 'u8[512]{0}', space=vmem, size = 0x400, scoped, tag = 'input window, operand 4, single buffered']
    #allocation13 [shape = 's32[1]{0}', space=sflag, size = 0x4, scoped, tag = 'scoped memory for gcnii_ppi_forward.1']
    #allocation14 [shape = 'u8[98304]{0}', space=vmem, size = 0x18000, scoped, tag = 'input window, operand 5, single buffered']
    #allocation15 [shape = 'u8[32768]{0}', space=vmem, size = 0x8000, scoped, tag = 'input window, operand 6, single buffered']
    #allocation16 [shape = 's32[1]{0}', space=sflag, size = 0x4, scoped, tag = 'scoped memory for gcnii_ppi_forward.1']
    #allocation17 [shape = 'u8[131072]{0}', space=vmem, size = 0x20000, scoped, tag = 'output window, operand 0, single buffered']
    %13 = vsyncpa [#allocation7], 0
    %14 = vsyncpa [#allocation5], 0
    %15 = vsyncpa [#allocation10], 0
    %16 = vsyncpa [#allocation13], 0
    %17 = vsyncpa [#allocation16], 0
    %18 = vsyncpa [#allocation6], 0
    // Predicated region
    $region2: #{gcnii_ppi_forward.1} parent=1 // pred_check
      _
    $region3: #{gcnii_ppi_forward.1} parent=1 // pred_check_branch
      %20 = sbr.rel (0) target = $region5
    $region4: #{gcnii_ppi_forward.1} parent=1 // pred_region
      %s22 = ssub.s32 16, 16
      %23 = vsyncadd [#allocation7], %s22
      %s25 = sshll.u32 %s0, 4
      %s26 = int_to_ptr.vmem [resolvable:$true] %s25
      %28 = dma.vmem_to_smem %s26, 16, [#allocation4], [#allocation7]
    $region5: #{gcnii_ppi_forward.1} parent=1 // pred_fallthru
      _
    // Predicated region
    $region6: #{gcnii_ppi_forward.1} parent=1 // pred_check
      _
    $region7: #{gcnii_ppi_forward.1} parent=1 // pred_check_branch
      %30 = sbr.rel (0) target = $region9
    $region8: #{gcnii_ppi_forward.1} parent=1 // pred_region
      %s32 = ssub.s32 2048, 2048
      %33 = vsyncadd [#allocation5], %s32
      %s34 = sshll.u32 [#allocation8], 4
      %s35 = int_to_ptr.vmem [resolvable:$true] %s34
      %40 = dma.hbm_to_vmem [thread:$0]  %s1, 2048, %s35, [#allocation5], 64, 64, 4
    $region9: #{gcnii_ppi_forward.1} parent=1 // pred_fallthru
      _
    // Predicated region
    $region10: #{gcnii_ppi_forward.1} parent=1 // pred_check
      _
    $region11: #{gcnii_ppi_forward.1} parent=1 // pred_check_branch
      %42 = sbr.rel (0) target = $region13
    $region12: #{gcnii_ppi_forward.1} parent=1 // pred_region
      %s44 = ssub.s32 4096, 4096
      %45 = vsyncadd [#allocation10], %s44
      %s46 = sshll.u32 [#allocation9], 4
      %s47 = int_to_ptr.vmem [resolvable:$true] %s46
      %52 = dma.hbm_to_vmem [thread:$0]  %s2, 4096, %s47, [#allocation10], 128, 128, 8
    $region13: #{gcnii_ppi_forward.1} parent=1 // pred_fallthru
      _
    // Predicated region
    $region14: #{gcnii_ppi_forward.1} parent=1 // pred_check
      _
    $region15: #{gcnii_ppi_forward.1} parent=1 // pred_check_branch
      %54 = sbr.rel (0) target = $region17
    $region16: #{gcnii_ppi_forward.1} parent=1 // pred_region
      %s56 = ssub.s32 1024, 1024
      %57 = vsyncadd [#allocation10], %s56
      %s58 = sshll.u32 [#allocation11], 4
      %s59 = int_to_ptr.vmem [resolvable:$true] %s58
      %64 = dma.hbm_to_vmem [thread:$0]  %s3, 1024, %s59, [#allocation10], 64, 64, 4
    $region17: #{gcnii_ppi_forward.1} parent=1 // pred_fallthru
      _
    // Predicated region
    $region18: #{gcnii_ppi_forward.1} parent=1 // pred_check
      _
    $region19: #{gcnii_ppi_forward.1} parent=1 // pred_check_branch
      %66 = sbr.rel (0) target = $region21
    $region20: #{gcnii_ppi_forward.1} parent=1 // pred_region
      %s68 = ssub.s32 16, 16
      %69 = vsyncadd [#allocation13], %s68
      %s71 = sshll.u32 [#allocation12], 4
      %s72 = int_to_ptr.vmem [resolvable:$true] %s71
      %74 = dma.hbm_to_vmem [thread:$0]  %s4, 16, %s72, [#allocation13]
    $region21: #{gcnii_ppi_forward.1} parent=1 // pred_fallthru
      _
    // Predicated region
    $region22: #{gcnii_ppi_forward.1} parent=1 // pred_check
      _
    $region23: #{gcnii_ppi_forward.1} parent=1 // pred_check_branch
      %76 = sbr.rel (0) target = $region25
    $region24: #{gcnii_ppi_forward.1} parent=1 // pred_region
      %s78 = ssub.s32 3072, 3072
      %79 = vsyncadd [#allocation13], %s78
      %s80 = sshll.u32 [#allocation14], 4
      %s81 = int_to_ptr.vmem [resolvable:$true] %s80
      %86 = dma.hbm_to_vmem [thread:$0]  %s5, 3072, %s81, [#allocation13], 64, 64, 4
    $region25: #{gcnii_ppi_forward.1} parent=1 // pred_fallthru
      _
    // Predicated region
    $region26: #{gcnii_ppi_forward.1} parent=1 // pred_check
      _
    $region27: #{gcnii_ppi_forward.1} parent=1 // pred_check_branch
      %88 = sbr.rel (0) target = $region29
    $region28: #{gcnii_ppi_forward.1} parent=1 // pred_region
      %s90 = ssub.s32 1024, 1024
      %91 = vsyncadd [#allocation16], %s90
      %s92 = sshll.u32 [#allocation15], 4
      %s93 = int_to_ptr.vmem [resolvable:$true] %s92
      %98 = dma.hbm_to_vmem [thread:$0]  %s6, 1024, %s93, [#allocation16], 64, 64, 4
    $region29: #{gcnii_ppi_forward.1} parent=1 // pred_fallthru
      _
    // Predicated region
    $region30: #{gcnii_ppi_forward.1} parent=1 // pred_check
      _
    $region31: #{gcnii_ppi_forward.1} parent=1 // pred_check_branch
      %100 = sbr.rel (0) target = $region33
    $region32: #{gcnii_ppi_forward.1} parent=1 // pred_region
      _
    $region33: #{gcnii_ppi_forward.1} parent=1 // pred_fallthru
      _
    // Predicated region
    $region34: #{gcnii_ppi_forward.1} parent=1 // pred_check
      _
    $region35: #{gcnii_ppi_forward.1} parent=1 // pred_check_branch
      %102 = sbr.rel (0) target = $region37
    $region36: #{gcnii_ppi_forward.1} parent=1 // pred_region
      %103 = dma.done [#allocation7], 16
    $region37: #{gcnii_ppi_forward.1} parent=1 // pred_fallthru
      _
    // Predicated region
    $region38: #{gcnii_ppi_forward.1} parent=1 // pred_check
      _
    $region39: #{gcnii_ppi_forward.1} parent=1 // pred_check_branch
      %105 = sbr.rel (0) target = $region41
    $region40: #{gcnii_ppi_forward.1} parent=1 // pred_region
      %106 = dma.done [#allocation5], 2048
    $region41: #{gcnii_ppi_forward.1} parent=1 // pred_fallthru
      _
    // Predicated region
    $region42: #{gcnii_ppi_forward.1} parent=1 // pred_check
      _
    $region43: #{gcnii_ppi_forward.1} parent=1 // pred_check_branch
      %108 = sbr.rel (0) target = $region45
    $region44: #{gcnii_ppi_forward.1} parent=1 // pred_region
      %109 = dma.done [#allocation10], 4096
    $region45: #{gcnii_ppi_forward.1} parent=1 // pred_fallthru
      _
    // Predicated region
    $region46: #{gcnii_ppi_forward.1} parent=1 // pred_check
      _
    $region47: #{gcnii_ppi_forward.1} parent=1 // pred_check_branch
      %111 = sbr.rel (0) target = $region49
    $region48: #{gcnii_ppi_forward.1} parent=1 // pred_region
      %112 = dma.done [#allocation10], 1024
    $region49: #{gcnii_ppi_forward.1} parent=1 // pred_fallthru
      _
    // Predicated region
    $region50: #{gcnii_ppi_forward.1} parent=1 // pred_check
      _
    $region51: #{gcnii_ppi_forward.1} parent=1 // pred_check_branch
      %114 = sbr.rel (0) target = $region53
    $region52: #{gcnii_ppi_forward.1} parent=1 // pred_region
      %115 = dma.done [#allocation13], 16
    $region53: #{gcnii_ppi_forward.1} parent=1 // pred_fallthru
      _
    // Predicated region
    $region54: #{gcnii_ppi_forward.1} parent=1 // pred_check
      _
    $region55: #{gcnii_ppi_forward.1} parent=1 // pred_check_branch
      %117 = sbr.rel (0) target = $region57
    $region56: #{gcnii_ppi_forward.1} parent=1 // pred_region
      %118 = dma.done [#allocation13], 3072
    $region57: #{gcnii_ppi_forward.1} parent=1 // pred_fallthru
      _
    // Predicated region
    $region58: #{gcnii_ppi_forward.1} parent=1 // pred_check
      _
    $region59: #{gcnii_ppi_forward.1} parent=1 // pred_check_branch
      %120 = sbr.rel (0) target = $region61
    $region60: #{gcnii_ppi_forward.1} parent=1 // pred_region
      %121 = dma.done [#allocation16], 1024
    $region61: #{gcnii_ppi_forward.1} parent=1 // pred_fallthru
      _
    %122 = sfence
    %v124 = vld [vmem:[#allocation8] sm:$0xf]
    %v125 = vld [vmem:[#allocation8 + $0x4] sm:$0xf]
    %v126 = vld [vmem:[#allocation8 + $0x8] sm:$0xf]
    %v127 = vld [vmem:[#allocation8 + $0xc] sm:$0xf]
    %v128 = vld [vmem:[#allocation8 + $0x10] sm:$0xf]
    %v129 = vld [vmem:[#allocation8 + $0x14] sm:$0xf]
    %v130 = vld [vmem:[#allocation8 + $0x18] sm:$0xf]
    %v131 = vld [vmem:[#allocation8 + $0x1c] sm:$0xf]
    %v132 = vld [vmem:[#allocation8 + $0x20] sm:$0xf]
    %v133 = vld [vmem:[#allocation8 + $0x24] sm:$0xf]
    %v134 = vld [vmem:[#allocation8 + $0x28] sm:$0xf]
    %v135 = vld [vmem:[#allocation8 + $0x2c] sm:$0xf]
    %v136 = vld [vmem:[#allocation8 + $0x30] sm:$0xf]
    %v137 = vld [vmem:[#allocation8 + $0x34] sm:$0xf]
    %v138 = vld [vmem:[#allocation8 + $0x38] sm:$0xf]
    %v139 = vld [vmem:[#allocation8 + $0x3c] sm:$0xf]
    %v140 = vld [vmem:[#allocation8 + $0x40] sm:$0xf]
    %v141 = vld [vmem:[#allocation8 + $0x44] sm:$0xf]
    %v142 = vld [vmem:[#allocation8 + $0x48] sm:$0xf]
    %v143 = vld [vmem:[#allocation8 + $0x4c] sm:$0xf]
    %v144 = vld [vmem:[#allocation8 + $0x50] sm:$0xf]
    %v145 = vld [vmem:[#allocation8 + $0x54] sm:$0xf]
    %v146 = vld [vmem:[#allocation8 + $0x58] sm:$0xf]
    %v147 = vld [vmem:[#allocation8 + $0x5c] sm:$0xf]
    %v148 = vld [vmem:[#allocation8 + $0x60] sm:$0xf]
    %v149 = vld [vmem:[#allocation8 + $0x64] sm:$0xf]
    %v150 = vld [vmem:[#allocation8 + $0x68] sm:$0xf]
    %v151 = vld [vmem:[#allocation8 + $0x6c] sm:$0xf]
    %v152 = vld [vmem:[#allocation8 + $0x70] sm:$0xf]
    %v153 = vld [vmem:[#allocation8 + $0x74] sm:$0xf]
    %v154 = vld [vmem:[#allocation8 + $0x78] sm:$0xf]
    %v155 = vld [vmem:[#allocation8 + $0x7c] sm:$0xf]
    %v156 = vld [vmem:[#allocation11] sm:$0xf]
    %v157 = vld [vmem:[#allocation11 + $0x4] sm:$0xf]
    %v158 = vld [vmem:[#allocation11 + $0x8] sm:$0xf]
    %v159 = vld [vmem:[#allocation11 + $0xc] sm:$0xf]
    %v160 = vld [vmem:[#allocation11 + $0x10] sm:$0xf]
    %v161 = vld [vmem:[#allocation11 + $0x14] sm:$0xf]
    %v162 = vld [vmem:[#allocation11 + $0x18] sm:$0xf]
    %v163 = vld [vmem:[#allocation11 + $0x1c] sm:$0xf]
    %v164 = vld [vmem:[#allocation11 + $0x20] sm:$0xf]
    %v165 = vld [vmem:[#allocation11 + $0x24] sm:$0xf]
    %v166 = vld [vmem:[#allocation11 + $0x28] sm:$0xf]
    %v167 = vld [vmem:[#allocation11 + $0x2c] sm:$0xf]
    %v168 = vld [vmem:[#allocation11 + $0x30] sm:$0xf]
    %v169 = vld [vmem:[#allocation11 + $0x34] sm:$0xf]
    %v170 = vld [vmem:[#allocation11 + $0x38] sm:$0xf]
    %v171 = vld [vmem:[#allocation11 + $0x3c] sm:$0xf]
    %v172 = vld [vmem:[#allocation12] sm:$0x1]
    %v174 = vlaneseq
    %v175 = vshrl.u32 %v174, 7
    %v176 = vsub.s32 0, %v175
    %v177 = vrot.slane %v172, %v176
    %v211 = vunpack.c.l.b16 %v124
    %v212 = vunpack.c.l.b16 %v125
    %v213 = vunpack.c.l.b16 %v126
    %v214 = vunpack.c.l.b16 %v127
    %v215 = vunpack.c.l.b16 %v128
    %v216 = vunpack.c.l.b16 %v129
    %v217 = vunpack.c.l.b16 %v130
    %v218 = vunpack.c.l.b16 %v131
    %v219 = vunpack.c.l.b16 %v132
    %v220 = vunpack.c.l.b16 %v133
    %v221 = vunpack.c.l.b16 %v134
    %v222 = vunpack.c.l.b16 %v135
    %v223 = vunpack.c.l.b16 %v136
    %v224 = vunpack.c.l.b16 %v137
    %v225 = vunpack.c.l.b16 %v138
    %v226 = vunpack.c.l.b16 %v139
    %v227 = vunpack.c.l.b16 %v140
    %v228 = vunpack.c.l.b16 %v141
    %v229 = vunpack.c.l.b16 %v142
    %v230 = vunpack.c.l.b16 %v143
    %v231 = vunpack.c.l.b16 %v144
    %v232 = vunpack.c.l.b16 %v145
    %v233 = vunpack.c.l.b16 %v146
    %v234 = vunpack.c.l.b16 %v147
    %v235 = vunpack.c.l.b16 %v148
    %v236 = vunpack.c.l.b16 %v149
    %v237 = vunpack.c.l.b16 %v150
    %v238 = vunpack.c.l.b16 %v151
    %v239 = vunpack.c.l.b16 %v152
    %v240 = vunpack.c.l.b16 %v153
    %v241 = vunpack.c.l.b16 %v154
    %v242 = vunpack.c.l.b16 %v155
    %v243 = vpack.c.b16 %v212, %v211
    %v244 = vpack.c.b16 %v214, %v213
    %v245 = vpack.c.b16 %v216, %v215
    %v246 = vpack.c.b16 %v218, %v217
    %v247 = vpack.c.b16 %v220, %v219
    %v248 = vpack.c.b16 %v222, %v221
    %v249 = vpack.c.b16 %v224, %v223
    %v250 = vpack.c.b16 %v226, %v225
    %v251 = vpack.c.b16 %v228, %v227
    %v252 = vpack.c.b16 %v230, %v229
    %v253 = vpack.c.b16 %v232, %v231
    %v254 = vpack.c.b16 %v234, %v233
    %v255 = vpack.c.b16 %v236, %v235
    %v256 = vpack.c.b16 %v238, %v237
    %v257 = vpack.c.b16 %v240, %v239
    %v258 = vpack.c.b16 %v242, %v241
    %v291 = vunpack.c.l.b16 %v156
    %v292 = vunpack.c.l.b16 %v157
    %v293 = vunpack.c.l.b16 %v158
    %v294 = vunpack.c.l.b16 %v159
    %v295 = vunpack.c.l.b16 %v160
    %v296 = vunpack.c.l.b16 %v161
    %v297 = vunpack.c.l.b16 %v162
    %v298 = vunpack.c.l.b16 %v163
    %v299 = vunpack.c.l.b16 %v164
    %v300 = vunpack.c.l.b16 %v165
    %v301 = vunpack.c.l.b16 %v166
    %v302 = vunpack.c.l.b16 %v167
    %v303 = vunpack.c.l.b16 %v168
    %v304 = vunpack.c.l.b16 %v169
    %v305 = vunpack.c.l.b16 %v170
    %v306 = vunpack.c.l.b16 %v171
    %v307 = vpack.c.b16 %v292, %v291
    %v308 = vpack.c.b16 %v294, %v293
    %v309 = vpack.c.b16 %v296, %v295
    %v310 = vpack.c.b16 %v298, %v297
    %v311 = vpack.c.b16 %v300, %v299
    %v312 = vpack.c.b16 %v302, %v301
    %v313 = vpack.c.b16 %v304, %v303
    %v314 = vpack.c.b16 %v306, %v305
    %323 = vmatprep.subr.bf16.mxu0 0
    %324 = vmatpush1.bf16.msra.mxu0 %v314
    %325 = vmatprep.subr.bf16.mxu0 0
    %326 = vmatpush1.bf16.msra.mxu0 %v313
    %327 = vmatprep.subr.bf16.mxu0 0
    %328 = vmatpush1.bf16.msra.mxu0 %v312
    %329 = vmatprep.subr.bf16.mxu0 0
    %330 = vmatpush1.bf16.msra.mxu0 %v311
    %331 = vmatprep.subr.bf16.mxu0 0
    %332 = vmatpush1.bf16.msra.mxu0 %v310
    %333 = vmatprep.subr.bf16.mxu0 0
    %334 = vmatpush1.bf16.msra.mxu0 %v309
    %335 = vmatprep.subr.bf16.mxu0 0
    %336 = vmatpush1.bf16.msra.mxu0 %v308
    %337 = vmatprep.subr.bf16.mxu0 0
    %338 = vmatpush1.bf16.msra.mxu0 %v307
    %339 = vmatprep.subr.bf16.mxu0 0
    %340 = vmatpush2.bf16.msra.mxu0 0
    %341 = vmatprep.subr.bf16.mxu0 0
    %342 = vmatpush2.bf16.msra.mxu0 0
    %343 = vmatprep.subr.bf16.mxu0 0
    %344 = vmatpush2.bf16.msra.mxu0 0
    %345 = vmatprep.subr.bf16.mxu0 0
    %346 = vmatpush2.bf16.msra.mxu0 0
    %347 = vmatprep.subr.bf16.mxu0 0
    %348 = vmatpush2.bf16.msra.mxu0 0
    %349 = vmatprep.subr.bf16.mxu0 0
    %350 = vmatpush2.bf16.msra.mxu0 0
    %351 = vmatprep.subr.bf16.mxu0 0
    %352 = vmatpush2.bf16.msra.mxu0 0
    %353 = vmatprep.subr.bf16.mxu0 0
    %354 = vmatpush2.bf16.msra.mxu0 0
    %355 = vmatprep.mubr.bf16.mxu0 0
    %356 = vmatmul.mubr.bf16.gmra.mxu0 %v243
    %v357 = vpop.f32.mrf.mxu0
    %v358 = vadd.f32 %v177, %v357
    %v359 = vpop.f32.mrf.mxu0
    %v360 = vpop.f32.mrf.mxu0
    %v361 = vadd.f32 %v177, %v360
    %v362 = vpop.f32.mrf.mxu0
    %363 = vmatprep.mubr.bf16.mxu0 0
    %364 = vmatmul.mubr.bf16.gmra.mxu0 %v244
    %v365 = vpop.f32.mrf.mxu0
    %v366 = vadd.f32 %v177, %v365
    %v367 = vpop.f32.mrf.mxu0
    %v368 = vpop.f32.mrf.mxu0
    %v369 = vadd.f32 %v177, %v368
    %v370 = vpop.f32.mrf.mxu0
    %371 = vmatprep.mubr.bf16.mxu0 0
    %372 = vmatmul.mubr.bf16.gmra.mxu0 %v245
    %v373 = vpop.f32.mrf.mxu0
    %v374 = vadd.f32 %v177, %v373
    %v375 = vpop.f32.mrf.mxu0
    %v376 = vpop.f32.mrf.mxu0
    %v377 = vadd.f32 %v177, %v376
    %v378 = vpop.f32.mrf.mxu0
    %379 = vmatprep.mubr.bf16.mxu0 0
    %380 = vmatmul.mubr.bf16.gmra.mxu0 %v246
    %v381 = vpop.f32.mrf.mxu0
    %v382 = vadd.f32 %v177, %v381
    %v383 = vpop.f32.mrf.mxu0
    %v384 = vpop.f32.mrf.mxu0
    %v385 = vadd.f32 %v177, %v384
    %v386 = vpop.f32.mrf.mxu0
    %387 = vmatprep.mubr.bf16.mxu0 0
    %388 = vmatmul.mubr.bf16.gmra.mxu0 %v247
    %v389 = vpop.f32.mrf.mxu0
    %v390 = vadd.f32 %v177, %v389
    %v391 = vpop.f32.mrf.mxu0
    %v392 = vpop.f32.mrf.mxu0
    %v393 = vadd.f32 %v177, %v392
    %v394 = vpop.f32.mrf.mxu0
    %395 = vmatprep.mubr.bf16.mxu0 0
    %396 = vmatmul.mubr.bf16.gmra.mxu0 %v248
    %v397 = vpop.f32.mrf.mxu0
    %v398 = vadd.f32 %v177, %v397
    %v399 = vpop.f32.mrf.mxu0
    %v400 = vpop.f32.mrf.mxu0
    %v401 = vadd.f32 %v177, %v400
    %v402 = vpop.f32.mrf.mxu0
    %403 = vmatprep.mubr.bf16.mxu0 0
    %404 = vmatmul.mubr.bf16.gmra.mxu0 %v249
    %v405 = vpop.f32.mrf.mxu0
    %v406 = vadd.f32 %v177, %v405
    %v407 = vpop.f32.mrf.mxu0
    %v408 = vpop.f32.mrf.mxu0
    %v409 = vadd.f32 %v177, %v408
    %v410 = vpop.f32.mrf.mxu0
    %411 = vmatprep.mubr.bf16.mxu0 0
    %412 = vmatmul.mubr.bf16.gmra.mxu0 %v250
    %v413 = vpop.f32.mrf.mxu0
    %v414 = vadd.f32 %v177, %v413
    %v415 = vpop.f32.mrf.mxu0
    %v416 = vpop.f32.mrf.mxu0
    %v417 = vadd.f32 %v177, %v416
    %v418 = vpop.f32.mrf.mxu0
    %419 = vmatprep.mubr.bf16.mxu0 0
    %420 = vmatmul.mubr.bf16.gmra.mxu0 %v251
    %v421 = vpop.f32.mrf.mxu0
    %v422 = vadd.f32 %v177, %v421
    %v423 = vpop.f32.mrf.mxu0
    %v424 = vpop.f32.mrf.mxu0
    %v425 = vadd.f32 %v177, %v424
    %v426 = vpop.f32.mrf.mxu0
    %427 = vmatprep.mubr.bf16.mxu0 0
    %428 = vmatmul.mubr.bf16.gmra.mxu0 %v252
    %v429 = vpop.f32.mrf.mxu0
    %v430 = vadd.f32 %v177, %v429
    %v431 = vpop.f32.mrf.mxu0
    %v432 = vpop.f32.mrf.mxu0
    %v433 = vadd.f32 %v177, %v432
    %v434 = vpop.f32.mrf.mxu0
    %435 = vmatprep.mubr.bf16.mxu0 0
    %436 = vmatmul.mubr.bf16.gmra.mxu0 %v253
    %v437 = vpop.f32.mrf.mxu0
    %v438 = vadd.f32 %v177, %v437
    %v439 = vpop.f32.mrf.mxu0
    %v440 = vpop.f32.mrf.mxu0
    %v441 = vadd.f32 %v177, %v440
    %v442 = vpop.f32.mrf.mxu0
    %443 = vmatprep.mubr.bf16.mxu0 0
    %444 = vmatmul.mubr.bf16.gmra.mxu0 %v254
    %v445 = vpop.f32.mrf.mxu0
    %v446 = vadd.f32 %v177, %v445
    %v447 = vpop.f32.mrf.mxu0
    %v448 = vpop.f32.mrf.mxu0
    %v449 = vadd.f32 %v177, %v448
    %v450 = vpop.f32.mrf.mxu0
    %451 = vmatprep.mubr.bf16.mxu0 0
    %452 = vmatmul.mubr.bf16.gmra.mxu0 %v255
    %v453 = vpop.f32.mrf.mxu0
    %v454 = vadd.f32 %v177, %v453
    %v455 = vpop.f32.mrf.mxu0
    %v456 = vpop.f32.mrf.mxu0
    %v457 = vadd.f32 %v177, %v456
    %v458 = vpop.f32.mrf.mxu0
    %459 = vmatprep.mubr.bf16.mxu0 0
    %460 = vmatmul.mubr.bf16.gmra.mxu0 %v256
    %v461 = vpop.f32.mrf.mxu0
    %v462 = vadd.f32 %v177, %v461
    %v463 = vpop.f32.mrf.mxu0
    %v464 = vpop.f32.mrf.mxu0
    %v465 = vadd.f32 %v177, %v464
    %v466 = vpop.f32.mrf.mxu0
    %467 = vmatprep.mubr.bf16.mxu0 0
    %468 = vmatmul.mubr.bf16.gmra.mxu0 %v257
    %v469 = vpop.f32.mrf.mxu0
    %v470 = vadd.f32 %v177, %v469
    %v471 = vpop.f32.mrf.mxu0
    %v472 = vpop.f32.mrf.mxu0
    %v473 = vadd.f32 %v177, %v472
    %v474 = vpop.f32.mrf.mxu0
    %475 = vmatprep.mubr.bf16.mxu0 0
    %476 = vmatmul.mubr.bf16.gmra.mxu0 %v258
    %v477 = vpop.f32.mrf.mxu0
    %v478 = vadd.f32 %v177, %v477
    %v479 = vpop.f32.mrf.mxu0
    %v480 = vpop.f32.mrf.mxu0
    %v481 = vadd.f32 %v177, %v480
    %v482 = vpop.f32.mrf.mxu0
    %483 = vdwg.mxu0
    %v484 = vmax.f32 %v358, 0.0
    %v485 = vmax.f32 %v361, 0.0
    %v486 = vmax.f32 %v366, 0.0
    %v487 = vmax.f32 %v369, 0.0
    %v488 = vmax.f32 %v374, 0.0
    %v489 = vmax.f32 %v377, 0.0
    %v490 = vmax.f32 %v382, 0.0
    %v491 = vmax.f32 %v385, 0.0
    %v492 = vmax.f32 %v390, 0.0
    %v493 = vmax.f32 %v393, 0.0
    %v494 = vmax.f32 %v398, 0.0
    %v495 = vmax.f32 %v401, 0.0
    %v496 = vmax.f32 %v406, 0.0
    %v497 = vmax.f32 %v409, 0.0
    %v498 = vmax.f32 %v414, 0.0
    %v499 = vmax.f32 %v417, 0.0
    %v500 = vmax.f32 %v422, 0.0
    %v501 = vmax.f32 %v425, 0.0
    %v502 = vmax.f32 %v430, 0.0
    %v503 = vmax.f32 %v433, 0.0
    %v504 = vmax.f32 %v438, 0.0
    %v505 = vmax.f32 %v441, 0.0
    %v506 = vmax.f32 %v446, 0.0
    %v507 = vmax.f32 %v449, 0.0
    %v508 = vmax.f32 %v454, 0.0
    %v509 = vmax.f32 %v457, 0.0
    %v510 = vmax.f32 %v462, 0.0
    %v511 = vmax.f32 %v465, 0.0
    %v512 = vmax.f32 %v470, 0.0
    %v513 = vmax.f32 %v473, 0.0
    %v514 = vmax.f32 %v478, 0.0
    %v515 = vmax.f32 %v481, 0.0
    %516 = vst [vmem:[#allocation2] sm:$0xff] %v484
    %517 = vst [vmem:[#allocation2 + $0x8] sm:$0xff] %v485
    %518 = vst [vmem:[#allocation2 + $0x10] sm:$0xff] %v486
    %519 = vst [vmem:[#allocation2 + $0x18] sm:$0xff] %v487
    %520 = vst [vmem:[#allocation2 + $0x20] sm:$0xff] %v488
    %521 = vst [vmem:[#allocation2 + $0x28] sm:$0xff] %v489
    %522 = vst [vmem:[#allocation2 + $0x30] sm:$0xff] %v490
    %523 = vst [vmem:[#allocation2 + $0x38] sm:$0xff] %v491
    %524 = vst [vmem:[#allocation2 + $0x40] sm:$0xff] %v492
    %525 = vst [vmem:[#allocation2 + $0x48] sm:$0xff] %v493
    %526 = vst [vmem:[#allocation2 + $0x50] sm:$0xff] %v494
    %527 = vst [vmem:[#allocation2 + $0x58] sm:$0xff] %v495
    %528 = vst [vmem:[#allocation2 + $0x60] sm:$0xff] %v496
    %529 = vst [vmem:[#allocation2 + $0x68] sm:$0xff] %v497
    %530 = vst [vmem:[#allocation2 + $0x70] sm:$0xff] %v498
    %531 = vst [vmem:[#allocation2 + $0x78] sm:$0xff] %v499
    %532 = vst [vmem:[#allocation2 + $0x80] sm:$0xff] %v500
    %533 = vst [vmem:[#allocation2 + $0x88] sm:$0xff] %v501
    %534 = vst [vmem:[#allocation2 + $0x90] sm:$0xff] %v502
    %535 = vst [vmem:[#allocation2 + $0x98] sm:$0xff] %v503
    %536 = vst [vmem:[#allocation2 + $0xa0] sm:$0xff] %v504
    %537 = vst [vmem:[#allocation2 + $0xa8] sm:$0xff] %v505
    %538 = vst [vmem:[#allocation2 + $0xb0] sm:$0xff] %v506
    %539 = vst [vmem:[#allocation2 + $0xb8] sm:$0xff] %v507
    %540 = vst [vmem:[#allocation2 + $0xc0] sm:$0xff] %v508
    %541 = vst [vmem:[#allocation2 + $0xc8] sm:$0xff] %v509
    %542 = vst [vmem:[#allocation2 + $0xd0] sm:$0xff] %v510
    %543 = vst [vmem:[#allocation2 + $0xd8] sm:$0xff] %v511
    %544 = vst [vmem:[#allocation2 + $0xe0] sm:$0xff] %v512
    %545 = vst [vmem:[#allocation2 + $0xe8] sm:$0xff] %v513
    %546 = vst [vmem:[#allocation2 + $0xf0] sm:$0xff] %v514
    %547 = vst [vmem:[#allocation2 + $0xf8] sm:$0xff] %v515
    %548 = vst [vmem:[#allocation3] sm:$0xff] %v484
    %549 = vst [vmem:[#allocation3 + $0x8] sm:$0xff] %v485
    %550 = vst [vmem:[#allocation3 + $0x10] sm:$0xff] %v486
    %551 = vst [vmem:[#allocation3 + $0x18] sm:$0xff] %v487
    %552 = vst [vmem:[#allocation3 + $0x20] sm:$0xff] %v488
    %553 = vst [vmem:[#allocation3 + $0x28] sm:$0xff] %v489
    %554 = vst [vmem:[#allocation3 + $0x30] sm:$0xff] %v490
    %555 = vst [vmem:[#allocation3 + $0x38] sm:$0xff] %v491
    %556 = vst [vmem:[#allocation3 + $0x40] sm:$0xff] %v492
    %557 = vst [vmem:[#allocation3 + $0x48] sm:$0xff] %v493
    %558 = vst [vmem:[#allocation3 + $0x50] sm:$0xff] %v494
    %559 = vst [vmem:[#allocation3 + $0x58] sm:$0xff] %v495
    %560 = vst [vmem:[#allocation3 + $0x60] sm:$0xff] %v496
    %561 = vst [vmem:[#allocation3 + $0x68] sm:$0xff] %v497
    %562 = vst [vmem:[#allocation3 + $0x70] sm:$0xff] %v498
    %563 = vst [vmem:[#allocation3 + $0x78] sm:$0xff] %v499
    %564 = vst [vmem:[#allocation3 + $0x80] sm:$0xff] %v500
    %565 = vst [vmem:[#allocation3 + $0x88] sm:$0xff] %v501
    %566 = vst [vmem:[#allocation3 + $0x90] sm:$0xff] %v502
    %567 = vst [vmem:[#allocation3 + $0x98] sm:$0xff] %v503
    %568 = vst [vmem:[#allocation3 + $0xa0] sm:$0xff] %v504
    %569 = vst [vmem:[#allocation3 + $0xa8] sm:$0xff] %v505
    %570 = vst [vmem:[#allocation3 + $0xb0] sm:$0xff] %v506
    %571 = vst [vmem:[#allocation3 + $0xb8] sm:$0xff] %v507
    %572 = vst [vmem:[#allocation3 + $0xc0] sm:$0xff] %v508
    %573 = vst [vmem:[#allocation3 + $0xc8] sm:$0xff] %v509
    %574 = vst [vmem:[#allocation3 + $0xd0] sm:$0xff] %v510
    %575 = vst [vmem:[#allocation3 + $0xd8] sm:$0xff] %v511
    %576 = vst [vmem:[#allocation3 + $0xe0] sm:$0xff] %v512
    %577 = vst [vmem:[#allocation3 + $0xe8] sm:$0xff] %v513
    %578 = vst [vmem:[#allocation3 + $0xf0] sm:$0xff] %v514
    %579 = vst [vmem:[#allocation3 + $0xf8] sm:$0xff] %v515
    %s580 = sld [smem:[#allocation4]]
    %s581 = sld [smem:[#allocation4 + $0x1]]
    %v582 = vld [vmem:[#allocation2] sm:$0xff]
    %v583 = vld [vmem:[#allocation2 + $0x8] sm:$0xff]
    %v584 = vld [vmem:[#allocation2 + $0x10] sm:$0xff]
    %v585 = vld [vmem:[#allocation2 + $0x18] sm:$0xff]
    %v586 = vld [vmem:[#allocation2 + $0x20] sm:$0xff]
    %v587 = vld [vmem:[#allocation2 + $0x28] sm:$0xff]
    %v588 = vld [vmem:[#allocation2 + $0x30] sm:$0xff]
    %v589 = vld [vmem:[#allocation2 + $0x38] sm:$0xff]
    %v590 = vld [vmem:[#allocation2 + $0x40] sm:$0xff]
    %v591 = vld [vmem:[#allocation2 + $0x48] sm:$0xff]
    %v592 = vld [vmem:[#allocation2 + $0x50] sm:$0xff]
    %v593 = vld [vmem:[#allocation2 + $0x58] sm:$0xff]
    %v594 = vld [vmem:[#allocation2 + $0x60] sm:$0xff]
    %v595 = vld [vmem:[#allocation2 + $0x68] sm:$0xff]
    %v596 = vld [vmem:[#allocation2 + $0x70] sm:$0xff]
    %v597 = vld [vmem:[#allocation2 + $0x78] sm:$0xff]
    %v598 = vld [vmem:[#allocation2 + $0x80] sm:$0xff]
    %v599 = vld [vmem:[#allocation2 + $0x88] sm:$0xff]
    %v600 = vld [vmem:[#allocation2 + $0x90] sm:$0xff]
    %v601 = vld [vmem:[#allocation2 + $0x98] sm:$0xff]
    %v602 = vld [vmem:[#allocation2 + $0xa0] sm:$0xff]
    %v603 = vld [vmem:[#allocation2 + $0xa8] sm:$0xff]
    %v604 = vld [vmem:[#allocation2 + $0xb0] sm:$0xff]
    %v605 = vld [vmem:[#allocation2 + $0xb8] sm:$0xff]
    %v606 = vld [vmem:[#allocation2 + $0xc0] sm:$0xff]
    %v607 = vld [vmem:[#allocation2 + $0xc8] sm:$0xff]
    %v608 = vld [vmem:[#allocation2 + $0xd0] sm:$0xff]
    %v609 = vld [vmem:[#allocation2 + $0xd8] sm:$0xff]
    %v610 = vld [vmem:[#allocation2 + $0xe0] sm:$0xff]
    %v611 = vld [vmem:[#allocation2 + $0xe8] sm:$0xff]
    %v612 = vld [vmem:[#allocation2 + $0xf0] sm:$0xff]
    %v613 = vld [vmem:[#allocation2 + $0xf8] sm:$0xff]
    %v614 = vld [vmem:[#allocation9] sm:$0xff]
    %v615 = vld [vmem:[#allocation9 + $0x8] sm:$0xff]
    %v616 = vld [vmem:[#allocation9 + $0x10] sm:$0xff]
    %v617 = vld [vmem:[#allocation9 + $0x18] sm:$0xff]
    %v618 = vld [vmem:[#allocation9 + $0x20] sm:$0xff]
    %v619 = vld [vmem:[#allocation9 + $0x28] sm:$0xff]
    %v620 = vld [vmem:[#allocation9 + $0x30] sm:$0xff]
    %v621 = vld [vmem:[#allocation9 + $0x38] sm:$0xff]
    %v622 = vld [vmem:[#allocation9 + $0x40] sm:$0xff]
    %v623 = vld [vmem:[#allocation9 + $0x48] sm:$0xff]
    %v624 = vld [vmem:[#allocation9 + $0x50] sm:$0xff]
    %v625 = vld [vmem:[#allocation9 + $0x58] sm:$0xff]
    %v626 = vld [vmem:[#allocation9 + $0x60] sm:$0xff]
    %v627 = vld [vmem:[#allocation9 + $0x68] sm:$0xff]
    %v628 = vld [vmem:[#allocation9 + $0x70] sm:$0xff]
    %v629 = vld [vmem:[#allocation9 + $0x78] sm:$0xff]
    %v630 = vld [vmem:[#allocation9 + $0x80] sm:$0xff]
    %v631 = vld [vmem:[#allocation9 + $0x88] sm:$0xff]
    %v632 = vld [vmem:[#allocation9 + $0x90] sm:$0xff]
    %v633 = vld [vmem:[#allocation9 + $0x98] sm:$0xff]
    %v634 = vld [vmem:[#allocation9 + $0xa0] sm:$0xff]
    %v635 = vld [vmem:[#allocation9 + $0xa8] sm:$0xff]
    %v636 = vld [vmem:[#allocation9 + $0xb0] sm:$0xff]
    %v637 = vld [vmem:[#allocation9 + $0xb8] sm:$0xff]
    %v638 = vld [vmem:[#allocation9 + $0xc0] sm:$0xff]
    %v639 = vld [vmem:[#allocation9 + $0xc8] sm:$0xff]
    %v640 = vld [vmem:[#allocation9 + $0xd0] sm:$0xff]
    %v641 = vld [vmem:[#allocation9 + $0xd8] sm:$0xff]
    %v642 = vld [vmem:[#allocation9 + $0xe0] sm:$0xff]
    %v643 = vld [vmem:[#allocation9 + $0xe8] sm:$0xff]
    %v644 = vld [vmem:[#allocation9 + $0xf0] sm:$0xff]
    %v645 = vld [vmem:[#allocation9 + $0xf8] sm:$0xff]
    %v646 = vpack.c.bf16 %v583, %v582
    %v647 = vpack.c.bf16 %v585, %v584
    %v648 = vpack.c.bf16 %v587, %v586
    %v649 = vpack.c.bf16 %v589, %v588
    %v650 = vpack.c.bf16 %v591, %v590
    %v651 = vpack.c.bf16 %v593, %v592
    %v652 = vpack.c.bf16 %v595, %v594
    %v653 = vpack.c.bf16 %v597, %v596
    %v654 = vpack.c.bf16 %v599, %v598
    %v655 = vpack.c.bf16 %v601, %v600
    %v656 = vpack.c.bf16 %v603, %v602
    %v657 = vpack.c.bf16 %v605, %v604
    %v658 = vpack.c.bf16 %v607, %v606
    %v659 = vpack.c.bf16 %v609, %v608
    %v660 = vpack.c.bf16 %v611, %v610
    %v661 = vpack.c.bf16 %v613, %v612
    %v694 = vunpack.c.l.b16 %v614
    %v695 = vunpack.c.h.b16 %v614
    %v696 = vunpack.c.l.b16 %v615
    %v697 = vunpack.c.h.b16 %v615
    %v698 = vunpack.c.l.b16 %v616
    %v699 = vunpack.c.h.b16 %v616
    %v700 = vunpack.c.l.b16 %v617
    %v701 = vunpack.c.h.b16 %v617
    %v702 = vunpack.c.l.b16 %v618
    %v703 = vunpack.c.h.b16 %v618
    %v704 = vunpack.c.l.b16 %v619
    %v705 = vunpack.c.h.b16 %v619
    %v706 = vunpack.c.l.b16 %v620
    %v707 = vunpack.c.h.b16 %v620
    %v708 = vunpack.c.l.b16 %v621
    %v709 = vunpack.c.h.b16 %v621
    %v710 = vunpack.c.l.b16 %v622
    %v711 = vunpack.c.h.b16 %v622
    %v712 = vunpack.c.l.b16 %v623
    %v713 = vunpack.c.h.b16 %v623
    %v714 = vunpack.c.l.b16 %v624
    %v715 = vunpack.c.h.b16 %v624
    %v716 = vunpack.c.l.b16 %v625
    %v717 = vunpack.c.h.b16 %v625
    %v718 = vunpack.c.l.b16 %v626
    %v719 = vunpack.c.h.b16 %v626
    %v720 = vunpack.c.l.b16 %v627
    %v721 = vunpack.c.h.b16 %v627
    %v722 = vunpack.c.l.b16 %v628
    %v723 = vunpack.c.h.b16 %v628
    %v724 = vunpack.c.l.b16 %v629
    %v725 = vunpack.c.h.b16 %v629
    %v726 = vunpack.c.l.b16 %v630
    %v727 = vunpack.c.h.b16 %v630
    %v728 = vunpack.c.l.b16 %v631
    %v729 = vunpack.c.h.b16 %v631
    %v730 = vunpack.c.l.b16 %v632
    %v731 = vunpack.c.h.b16 %v632
    %v732 = vunpack.c.l.b16 %v633
    %v733 = vunpack.c.h.b16 %v633
    %v734 = vunpack.c.l.b16 %v634
    %v735 = vunpack.c.h.b16 %v634
    %v736 = vunpack.c.l.b16 %v635
    %v737 = vunpack.c.h.b16 %v635
    %v738 = vunpack.c.l.b16 %v636
    %v739 = vunpack.c.h.b16 %v636
    %v740 = vunpack.c.l.b16 %v637
    %v741 = vunpack.c.h.b16 %v637
    %v742 = vunpack.c.l.b16 %v638
    %v743 = vunpack.c.h.b16 %v638
    %v744 = vunpack.c.l.b16 %v639
    %v745 = vunpack.c.h.b16 %v639
    %v746 = vunpack.c.l.b16 %v640
    %v747 = vunpack.c.h.b16 %v640
    %v748 = vunpack.c.l.b16 %v641
    %v749 = vunpack.c.h.b16 %v641
    %v750 = vunpack.c.l.b16 %v642
    %v751 = vunpack.c.h.b16 %v642
    %v752 = vunpack.c.l.b16 %v643
    %v753 = vunpack.c.h.b16 %v643
    %v754 = vunpack.c.l.b16 %v644
    %v755 = vunpack.c.h.b16 %v644
    %v756 = vunpack.c.l.b16 %v645
    %v757 = vunpack.c.h.b16 %v645
    %v758 = vpack.c.b16 %v696, %v694
    %v759 = vpack.c.b16 %v697, %v695
    %v760 = vpack.c.b16 %v700, %v698
    %v761 = vpack.c.b16 %v701, %v699
    %v762 = vpack.c.b16 %v704, %v702
    %v763 = vpack.c.b16 %v705, %v703
    %v764 = vpack.c.b16 %v708, %v706
    %v765 = vpack.c.b16 %v709, %v707
    %v766 = vpack.c.b16 %v712, %v710
    %v767 = vpack.c.b16 %v713, %v711
    %v768 = vpack.c.b16 %v716, %v714
    %v769 = vpack.c.b16 %v717, %v715
    %v770 = vpack.c.b16 %v720, %v718
    %v771 = vpack.c.b16 %v721, %v719
    %v772 = vpack.c.b16 %v724, %v722
    %v773 = vpack.c.b16 %v725, %v723
    %v774 = vpack.c.b16 %v728, %v726
    %v775 = vpack.c.b16 %v729, %v727
    %v776 = vpack.c.b16 %v732, %v730
    %v777 = vpack.c.b16 %v733, %v731
    %v778 = vpack.c.b16 %v736, %v734
    %v779 = vpack.c.b16 %v737, %v735
    %v780 = vpack.c.b16 %v740, %v738
    %v781 = vpack.c.b16 %v741, %v739
    %v782 = vpack.c.b16 %v744, %v742
    %v783 = vpack.c.b16 %v745, %v743
    %v784 = vpack.c.b16 %v748, %v746
    %v785 = vpack.c.b16 %v749, %v747
    %v786 = vpack.c.b16 %v752, %v750
    %v787 = vpack.c.b16 %v753, %v751
    %v788 = vpack.c.b16 %v756, %v754
    %v789 = vpack.c.b16 %v757, %v755
    %822 = vmatprep.subr.bf16.mxu0 0
    %823 = vmatpush1.bf16.msra.mxu0 %v653
    %824 = vmatprep.subr.bf16.mxu0 0
    %825 = vmatpush1.bf16.msra.mxu0 %v652
    %826 = vmatprep.subr.bf16.mxu0 0
    %827 = vmatpush1.bf16.msra.mxu0 %v651
    %828 = vmatprep.subr.bf16.mxu0 0
    %829 = vmatpush1.bf16.msra.mxu0 %v650
    %830 = vmatprep.subr.bf16.mxu0 0
    %831 = vmatpush1.bf16.msra.mxu0 %v649
    %832 = vmatprep.subr.bf16.mxu0 0
    %833 = vmatpush1.bf16.msra.mxu0 %v648
    %834 = vmatprep.subr.bf16.mxu0 0
    %835 = vmatpush1.bf16.msra.mxu0 %v647
    %836 = vmatprep.subr.bf16.mxu0 0
    %837 = vmatpush1.bf16.msra.mxu0 %v646
    %838 = vmatprep.subr.bf16.mxu0 0
    %839 = vmatpush2.bf16.msra.mxu0 %v661
    %840 = vmatprep.subr.bf16.mxu0 0
    %841 = vmatpush2.bf16.msra.mxu0 %v660
    %842 = vmatprep.subr.bf16.mxu0 0
    %843 = vmatpush2.bf16.msra.mxu0 %v659
    %844 = vmatprep.subr.bf16.mxu0 0
    %845 = vmatpush2.bf16.msra.mxu0 %v658
    %846 = vmatprep.subr.bf16.mxu0 0
    %847 = vmatpush2.bf16.msra.mxu0 %v657
    %848 = vmatprep.subr.bf16.mxu0 0
    %849 = vmatpush2.bf16.msra.mxu0 %v656
    %850 = vmatprep.subr.bf16.mxu0 0
    %851 = vmatpush2.bf16.msra.mxu0 %v655
    %852 = vmatprep.subr.bf16.mxu0 0
    %853 = vmatpush2.bf16.msra.mxu0 %v654
    %854 = vmatprep.mubr.bf16.mxu0 %v759
    %855 = vmatmul.mubr.bf16.gmra.mxu0 %v758
    %v856 = vpop.f32.mrf.mxu0
    %v857 = vadd.f32 0.0, %v856
    %v858 = vpop.f32.mrf.mxu0
    %v859 = vpop.f32.mrf.mxu0
    %v860 = vadd.f32 0.0, %v859
    %v861 = vpop.f32.mrf.mxu0
    %862 = vmatprep.mubr.bf16.mxu0 %v761
    %863 = vmatmul.mubr.bf16.gmra.mxu0 %v760
    %v864 = vpop.f32.mrf.mxu0
    %v865 = vadd.f32 0.0, %v864
    %v866 = vpop.f32.mrf.mxu0
    %v867 = vpop.f32.mrf.mxu0
    %v868 = vadd.f32 0.0, %v867
    %v869 = vpop.f32.mrf.mxu0
    %870 = vmatprep.mubr.bf16.mxu0 %v763
    %871 = vmatmul.mubr.bf16.gmra.mxu0 %v762
    %v872 = vpop.f32.mrf.mxu0
    %v873 = vadd.f32 0.0, %v872
    %v874 = vpop.f32.mrf.mxu0
    %v875 = vpop.f32.mrf.mxu0
    %v876 = vadd.f32 0.0, %v875
    %v877 = vpop.f32.mrf.mxu0
    %878 = vmatprep.mubr.bf16.mxu0 %v765
    %879 = vmatmul.mubr.bf16.gmra.mxu0 %v764
    %v880 = vpop.f32.mrf.mxu0
    %v881 = vadd.f32 0.0, %v880
    %v882 = vpop.f32.mrf.mxu0
    %v883 = vpop.f32.mrf.mxu0
    %v884 = vadd.f32 0.0, %v883
    %v885 = vpop.f32.mrf.mxu0
    %886 = vmatprep.mubr.bf16.mxu0 %v767
    %887 = vmatmul.mubr.bf16.gmra.mxu0 %v766
    %v888 = vpop.f32.mrf.mxu0
    %v889 = vadd.f32 0.0, %v888
    %v890 = vpop.f32.mrf.mxu0
    %v891 = vpop.f32.mrf.mxu0
    %v892 = vadd.f32 0.0, %v891
    %v893 = vpop.f32.mrf.mxu0
    %894 = vmatprep.mubr.bf16.mxu0 %v769
    %895 = vmatmul.mubr.bf16.gmra.mxu0 %v768
    %v896 = vpop.f32.mrf.mxu0
    %v897 = vadd.f32 0.0, %v896
    %v898 = vpop.f32.mrf.mxu0
    %v899 = vpop.f32.mrf.mxu0
    %v900 = vadd.f32 0.0, %v899
    %v901 = vpop.f32.mrf.mxu0
    %902 = vmatprep.mubr.bf16.mxu0 %v771
    %903 = vmatmul.mubr.bf16.gmra.mxu0 %v770
    %v904 = vpop.f32.mrf.mxu0
    %v905 = vadd.f32 0.0, %v904
    %v906 = vpop.f32.mrf.mxu0
    %v907 = vpop.f32.mrf.mxu0
    %v908 = vadd.f32 0.0, %v907
    %v909 = vpop.f32.mrf.mxu0
    %910 = vmatprep.mubr.bf16.mxu0 %v773
    %911 = vmatmul.mubr.bf16.gmra.mxu0 %v772
    %v912 = vpop.f32.mrf.mxu0
    %v913 = vadd.f32 0.0, %v912
    %v914 = vpop.f32.mrf.mxu0
    %v915 = vpop.f32.mrf.mxu0
    %v916 = vadd.f32 0.0, %v915
    %v917 = vpop.f32.mrf.mxu0
    %918 = vmatprep.mubr.bf16.mxu0 %v775
    %919 = vmatmul.mubr.bf16.gmra.mxu0 %v774
    %v920 = vpop.f32.mrf.mxu0
    %v921 = vadd.f32 0.0, %v920
    %v922 = vpop.f32.mrf.mxu0
    %v923 = vpop.f32.mrf.mxu0
    %v924 = vadd.f32 0.0, %v923
    %v925 = vpop.f32.mrf.mxu0
    %926 = vmatprep.mubr.bf16.mxu0 %v777
    %927 = vmatmul.mubr.bf16.gmra.mxu0 %v776
    %v928 = vpop.f32.mrf.mxu0
    %v929 = vadd.f32 0.0, %v928
    %v930 = vpop.f32.mrf.mxu0
    %v931 = vpop.f32.mrf.mxu0
    %v932 = vadd.f32 0.0, %v931
    %v933 = vpop.f32.mrf.mxu0
    %934 = vmatprep.mubr.bf16.mxu0 %v779
    %935 = vmatmul.mubr.bf16.gmra.mxu0 %v778
    %v936 = vpop.f32.mrf.mxu0
    %v937 = vadd.f32 0.0, %v936
    %v938 = vpop.f32.mrf.mxu0
    %v939 = vpop.f32.mrf.mxu0
    %v940 = vadd.f32 0.0, %v939
    %v941 = vpop.f32.mrf.mxu0
    %942 = vmatprep.mubr.bf16.mxu0 %v781
    %943 = vmatmul.mubr.bf16.gmra.mxu0 %v780
    %v944 = vpop.f32.mrf.mxu0
    %v945 = vadd.f32 0.0, %v944
    %v946 = vpop.f32.mrf.mxu0
    %v947 = vpop.f32.mrf.mxu0
    %v948 = vadd.f32 0.0, %v947
    %v949 = vpop.f32.mrf.mxu0
    %950 = vmatprep.mubr.bf16.mxu0 %v783
    %951 = vmatmul.mubr.bf16.gmra.mxu0 %v782
    %v952 = vpop.f32.mrf.mxu0
    %v953 = vadd.f32 0.0, %v952
    %v954 = vpop.f32.mrf.mxu0
    %v955 = vpop.f32.mrf.mxu0
    %v956 = vadd.f32 0.0, %v955
    %v957 = vpop.f32.mrf.mxu0
    %958 = vmatprep.mubr.bf16.mxu0 %v785
    %959 = vmatmul.mubr.bf16.gmra.mxu0 %v784
    %v960 = vpop.f32.mrf.mxu0
    %v961 = vadd.f32 0.0, %v960
    %v962 = vpop.f32.mrf.mxu0
    %v963 = vpop.f32.mrf.mxu0
    %v964 = vadd.f32 0.0, %v963
    %v965 = vpop.f32.mrf.mxu0
    %966 = vmatprep.mubr.bf16.mxu0 %v787
    %967 = vmatmul.mubr.bf16.gmra.mxu0 %v786
    %v968 = vpop.f32.mrf.mxu0
    %v969 = vadd.f32 0.0, %v968
    %v970 = vpop.f32.mrf.mxu0
    %v971 = vpop.f32.mrf.mxu0
    %v972 = vadd.f32 0.0, %v971
    %v973 = vpop.f32.mrf.mxu0
    %974 = vmatprep.mubr.bf16.mxu0 %v789
    %975 = vmatmul.mubr.bf16.gmra.mxu0 %v788
    %v976 = vpop.f32.mrf.mxu0
    %v977 = vadd.f32 0.0, %v976
    %v978 = vpop.f32.mrf.mxu0
    %v979 = vpop.f32.mrf.mxu0
    %v980 = vadd.f32 0.0, %v979
    %v981 = vpop.f32.mrf.mxu0
    %982 = vdwg.mxu0
    %s983 = ssub.f32 1.0, %s581
    %v984 = vstv %s983
    %v985 = vmul.f32 %v984, %v857
    %v986 = vmul.f32 %v984, %v860
    %v987 = vmul.f32 %v984, %v865
    %v988 = vmul.f32 %v984, %v868
    %v989 = vmul.f32 %v984, %v873
    %v990 = vmul.f32 %v984, %v876
    %v991 = vmul.f32 %v984, %v881
    %v992 = vmul.f32 %v984, %v884
    %v993 = vmul.f32 %v984, %v889
    %v994 = vmul.f32 %v984, %v892
    %v995 = vmul.f32 %v984, %v897
    %v996 = vmul.f32 %v984, %v900
    %v997 = vmul.f32 %v984, %v905
    %v998 = vmul.f32 %v984, %v908
    %v999 = vmul.f32 %v984, %v913
    %v1000 = vmul.f32 %v984, %v916
    %v1001 = vmul.f32 %v984, %v921
    %v1002 = vmul.f32 %v984, %v924
    %v1003 = vmul.f32 %v984, %v929
    %v1004 = vmul.f32 %v984, %v932
    %v1005 = vmul.f32 %v984, %v937
    %v1006 = vmul.f32 %v984, %v940
    %v1007 = vmul.f32 %v984, %v945
    %v1008 = vmul.f32 %v984, %v948
    %v1009 = vmul.f32 %v984, %v953
    %v1010 = vmul.f32 %v984, %v956
    %v1011 = vmul.f32 %v984, %v961
    %v1012 = vmul.f32 %v984, %v964
    %v1013 = vmul.f32 %v984, %v969
    %v1014 = vmul.f32 %v984, %v972
    %v1015 = vmul.f32 %v984, %v977
    %v1016 = vmul.f32 %v984, %v980
    %v1017 = vld [vmem:[#allocation3] sm:$0xff]
    %v1018 = vld [vmem:[#allocation3 + $0x8] sm:$0xff]
    %v1019 = vld [vmem:[#allocation3 + $0x10] sm:$0xff]
    %v1020 = vld [vmem:[#allocation3 + $0x18] sm:$0xff]
    %v1021 = vld [vmem:[#allocation3 + $0x20] sm:$0xff]
    %v1022 = vld [vmem:[#allocation3 + $0x28] sm:$0xff]
    %v1023 = vld [vmem:[#allocation3 + $0x30] sm:$0xff]
    %v1024 = vld [vmem:[#allocation3 + $0x38] sm:$0xff]
    %v1025 = vld [vmem:[#allocation3 + $0x40] sm:$0xff]
    %v1026 = vld [vmem:[#allocation3 + $0x48] sm:$0xff]
    %v1027 = vld [vmem:[#allocation3 + $0x50] sm:$0xff]
    %v1028 = vld [vmem:[#allocation3 + $0x58] sm:$0xff]
    %v1029 = vld [vmem:[#allocation3 + $0x60] sm:$0xff]
    %v1030 = vld [vmem:[#allocation3 + $0x68] sm:$0xff]
    %v1031 = vld [vmem:[#allocation3 + $0x70] sm:$0xff]
    %v1032 = vld [vmem:[#allocation3 + $0x78] sm:$0xff]
    %v1033 = vld [vmem:[#allocation3 + $0x80] sm:$0xff]
    %v1034 = vld [vmem:[#allocation3 + $0x88] sm:$0xff]
    %v1035 = vld [vmem:[#allocation3 + $0x90] sm:$0xff]
    %v1036 = vld [vmem:[#allocation3 + $0x98] sm:$0xff]
    %v1037 = vld [vmem:[#allocation3 + $0xa0] sm:$0xff]
    %v1038 = vld [vmem:[#allocation3 + $0xa8] sm:$0xff]
    %v1039 = vld [vmem:[#allocation3 + $0xb0] sm:$0xff]
    %v1040 = vld [vmem:[#allocation3 + $0xb8] sm:$0xff]
    %v1041 = vld [vmem:[#allocation3 + $0xc0] sm:$0xff]
    %v1042 = vld [vmem:[#allocation3 + $0xc8] sm:$0xff]
    %v1043 = vld [vmem:[#allocation3 + $0xd0] sm:$0xff]
    %v1044 = vld [vmem:[#allocation3 + $0xd8] sm:$0xff]
    %v1045 = vld [vmem:[#allocation3 + $0xe0] sm:$0xff]
    %v1046 = vld [vmem:[#allocation3 + $0xe8] sm:$0xff]
    %v1047 = vld [vmem:[#allocation3 + $0xf0] sm:$0xff]
    %v1048 = vld [vmem:[#allocation3 + $0xf8] sm:$0xff]
    %v1049 = vstv %s581
    %v1050 = vmul.f32 %v1049, %v1017
    %v1051 = vmul.f32 %v1049, %v1018
    %v1052 = vmul.f32 %v1049, %v1019
    %v1053 = vmul.f32 %v1049, %v1020
    %v1054 = vmul.f32 %v1049, %v1021
    %v1055 = vmul.f32 %v1049, %v1022
    %v1056 = vmul.f32 %v1049, %v1023
    %v1057 = vmul.f32 %v1049, %v1024
    %v1058 = vmul.f32 %v1049, %v1025
    %v1059 = vmul.f32 %v1049, %v1026
    %v1060 = vmul.f32 %v1049, %v1027
    %v1061 = vmul.f32 %v1049, %v1028
    %v1062 = vmul.f32 %v1049, %v1029
    %v1063 = vmul.f32 %v1049, %v1030
    %v1064 = vmul.f32 %v1049, %v1031
    %v1065 = vmul.f32 %v1049, %v1032
    %v1066 = vmul.f32 %v1049, %v1033
    %v1067 = vmul.f32 %v1049, %v1034
    %v1068 = vmul.f32 %v1049, %v1035
    %v1069 = vmul.f32 %v1049, %v1036
    %v1070 = vmul.f32 %v1049, %v1037
    %v1071 = vmul.f32 %v1049, %v1038
    %v1072 = vmul.f32 %v1049, %v1039
    %v1073 = vmul.f32 %v1049, %v1040
    %v1074 = vmul.f32 %v1049, %v1041
    %v1075 = vmul.f32 %v1049, %v1042
    %v1076 = vmul.f32 %v1049, %v1043
    %v1077 = vmul.f32 %v1049, %v1044
    %v1078 = vmul.f32 %v1049, %v1045
    %v1079 = vmul.f32 %v1049, %v1046
    %v1080 = vmul.f32 %v1049, %v1047
    %v1081 = vmul.f32 %v1049, %v1048
    %v1082 = vadd.f32 %v985, %v1050
    %v1083 = vadd.f32 %v986, %v1051
    %v1084 = vadd.f32 %v987, %v1052
    %v1085 = vadd.f32 %v988, %v1053
    %v1086 = vadd.f32 %v989, %v1054
    %v1087 = vadd.f32 %v990, %v1055
    %v1088 = vadd.f32 %v991, %v1056
    %v1089 = vadd.f32 %v992, %v1057
    %v1090 = vadd.f32 %v993, %v1058
    %v1091 = vadd.f32 %v994, %v1059
    %v1092 = vadd.f32 %v995, %v1060
    %v1093 = vadd.f32 %v996, %v1061
    %v1094 = vadd.f32 %v997, %v1062
    %v1095 = vadd.f32 %v998, %v1063
    %v1096 = vadd.f32 %v999, %v1064
    %v1097 = vadd.f32 %v1000, %v1065
    %v1098 = vadd.f32 %v1001, %v1066
    %v1099 = vadd.f32 %v1002, %v1067
    %v1100 = vadd.f32 %v1003, %v1068
    %v1101 = vadd.f32 %v1004, %v1069
    %v1102 = vadd.f32 %v1005, %v1070
    %v1103 = vadd.f32 %v1006, %v1071
    %v1104 = vadd.f32 %v1007, %v1072
    %v1105 = vadd.f32 %v1008, %v1073
    %v1106 = vadd.f32 %v1009, %v1074
    %v1107 = vadd.f32 %v1010, %v1075
    %v1108 = vadd.f32 %v1011, %v1076
    %v1109 = vadd.f32 %v1012, %v1077
    %v1110 = vadd.f32 %v1013, %v1078
    %v1111 = vadd.f32 %v1014, %v1079
    %v1112 = vadd.f32 %v1015, %v1080
    %v1113 = vadd.f32 %v1016, %v1081
    %v1114 = vpack.c.bf16 %v1083, %v1082
    %v1115 = vpack.c.bf16 %v1085, %v1084
    %v1116 = vpack.c.bf16 %v1087, %v1086
    %v1117 = vpack.c.bf16 %v1089, %v1088
    %v1118 = vpack.c.bf16 %v1091, %v1090
    %v1119 = vpack.c.bf16 %v1093, %v1092
    %v1120 = vpack.c.bf16 %v1095, %v1094
    %v1121 = vpack.c.bf16 %v1097, %v1096
    %v1122 = vpack.c.bf16 %v1099, %v1098
    %v1123 = vpack.c.bf16 %v1101, %v1100
    %v1124 = vpack.c.bf16 %v1103, %v1102
    %v1125 = vpack.c.bf16 %v1105, %v1104
    %v1126 = vpack.c.bf16 %v1107, %v1106
    %v1127 = vpack.c.bf16 %v1109, %v1108
    %v1128 = vpack.c.bf16 %v1111, %v1110
    %v1129 = vpack.c.bf16 %v1113, %v1112
    %v1130 = vld [vmem:[#allocation14] sm:$0xf]
    %v1131 = vld [vmem:[#allocation14 + $0x4] sm:$0xf]
    %v1132 = vld [vmem:[#allocation14 + $0x8] sm:$0xf]
    %v1133 = vld [vmem:[#allocation14 + $0xc] sm:$0xf]
    %v1134 = vld [vmem:[#allocation14 + $0x10] sm:$0xf]
    %v1135 = vld [vmem:[#allocation14 + $0x14] sm:$0xf]
    %v1136 = vld [vmem:[#allocation14 + $0x18] sm:$0xf]
    %v1137 = vld [vmem:[#allocation14 + $0x1c] sm:$0xf]
    %v1138 = vld [vmem:[#allocation14 + $0x20] sm:$0xf]
    %v1139 = vld [vmem:[#allocation14 + $0x24] sm:$0xf]
    %v1140 = vld [vmem:[#allocation14 + $0x28] sm:$0xf]
    %v1141 = vld [vmem:[#allocation14 + $0x2c] sm:$0xf]
    %v1142 = vld [vmem:[#allocation14 + $0x30] sm:$0xf]
    %v1143 = vld [vmem:[#allocation14 + $0x34] sm:$0xf]
    %v1144 = vld [vmem:[#allocation14 + $0x38] sm:$0xf]
    %v1145 = vld [vmem:[#allocation14 + $0x3c] sm:$0xf]
    %v1162 = vunpack.c.l.b16 %v1130
    %v1163 = vunpack.c.l.b16 %v1131
    %v1164 = vunpack.c.l.b16 %v1132
    %v1165 = vunpack.c.l.b16 %v1133
    %v1166 = vunpack.c.l.b16 %v1134
    %v1167 = vunpack.c.l.b16 %v1135
    %v1168 = vunpack.c.l.b16 %v1136
    %v1169 = vunpack.c.l.b16 %v1137
    %v1170 = vunpack.c.l.b16 %v1138
    %v1171 = vunpack.c.l.b16 %v1139
    %v1172 = vunpack.c.l.b16 %v1140
    %v1173 = vunpack.c.l.b16 %v1141
    %v1174 = vunpack.c.l.b16 %v1142
    %v1175 = vunpack.c.l.b16 %v1143
    %v1176 = vunpack.c.l.b16 %v1144
    %v1177 = vunpack.c.l.b16 %v1145
    %v1178 = vpack.c.b16 %v1163, %v1162
    %v1179 = vpack.c.b16 %v1165, %v1164
    %v1180 = vpack.c.b16 %v1167, %v1166
    %v1181 = vpack.c.b16 %v1169, %v1168
    %v1182 = vpack.c.b16 %v1171, %v1170
    %v1183 = vpack.c.b16 %v1173, %v1172
    %v1184 = vpack.c.b16 %v1175, %v1174
    %v1185 = vpack.c.b16 %v1177, %v1176
    %1194 = vmatprep.subr.bf16.mxu0 0
    %1195 = vmatpush1.bf16.msra.mxu0 %v1185
    %1196 = vmatprep.subr.bf16.mxu0 0
    %1197 = vmatpush1.bf16.msra.mxu0 %v1184
    %1198 = vmatprep.subr.bf16.mxu0 0
    %1199 = vmatpush1.bf16.msra.mxu0 %v1183
    %1200 = vmatprep.subr.bf16.mxu0 0
    %1201 = vmatpush1.bf16.msra.mxu0 %v1182
    %1202 = vmatprep.subr.bf16.mxu0 0
    %1203 = vmatpush1.bf16.msra.mxu0 %v1181
    %1204 = vmatprep.subr.bf16.mxu0 0
    %1205 = vmatpush1.bf16.msra.mxu0 %v1180
    %1206 = vmatprep.subr.bf16.mxu0 0
    %1207 = vmatpush1.bf16.msra.mxu0 %v1179
    %1208 = vmatprep.subr.bf16.mxu0 0
    %1209 = vmatpush1.bf16.msra.mxu0 %v1178
    %1210 = vmatprep.subr.bf16.mxu0 0
    %1211 = vmatpush2.bf16.msra.mxu0 0
    %1212 = vmatprep.subr.bf16.mxu0 0
    %1213 = vmatpush2.bf16.msra.mxu0 0
    %1214 = vmatprep.subr.bf16.mxu0 0
    %1215 = vmatpush2.bf16.msra.mxu0 0
    %1216 = vmatprep.subr.bf16.mxu0 0
    %1217 = vmatpush2.bf16.msra.mxu0 0
    %1218 = vmatprep.subr.bf16.mxu0 0
    %1219 = vmatpush2.bf16.msra.mxu0 0
    %1220 = vmatprep.subr.bf16.mxu0 0
    %1221 = vmatpush2.bf16.msra.mxu0 0
    %1222 = vmatprep.subr.bf16.mxu0 0
    %1223 = vmatpush2.bf16.msra.mxu0 0
    %1224 = vmatprep.subr.bf16.mxu0 0
    %1225 = vmatpush2.bf16.msra.mxu0 0
    %1226 = vmatprep.mubr.bf16.mxu0 0
    %1227 = vmatmul.mubr.bf16.gmra.mxu0 %v1114
    %v1228 = vpop.f32.mrf.mxu0
    %v1229 = vadd.f32 0.0, %v1228
    %v1230 = vpop.f32.mrf.mxu0
    %v1231 = vpop.f32.mrf.mxu0
    %v1232 = vadd.f32 0.0, %v1231
    %v1233 = vpop.f32.mrf.mxu0
    %1234 = vmatprep.mubr.bf16.mxu0 0
    %1235 = vmatmul.mubr.bf16.gmra.mxu0 %v1115
    %v1236 = vpop.f32.mrf.mxu0
    %v1237 = vadd.f32 0.0, %v1236
    %v1238 = vpop.f32.mrf.mxu0
    %v1239 = vpop.f32.mrf.mxu0
    %v1240 = vadd.f32 0.0, %v1239
    %v1241 = vpop.f32.mrf.mxu0
    %1242 = vmatprep.mubr.bf16.mxu0 0
    %1243 = vmatmul.mubr.bf16.gmra.mxu0 %v1116
    %v1244 = vpop.f32.mrf.mxu0
    %v1245 = vadd.f32 0.0, %v1244
    %v1246 = vpop.f32.mrf.mxu0
    %v1247 = vpop.f32.mrf.mxu0
    %v1248 = vadd.f32 0.0, %v1247
    %v1249 = vpop.f32.mrf.mxu0
    %1250 = vmatprep.mubr.bf16.mxu0 0
    %1251 = vmatmul.mubr.bf16.gmra.mxu0 %v1117
    %v1252 = vpop.f32.mrf.mxu0
    %v1253 = vadd.f32 0.0, %v1252
    %v1254 = vpop.f32.mrf.mxu0
    %v1255 = vpop.f32.mrf.mxu0
    %v1256 = vadd.f32 0.0, %v1255
    %v1257 = vpop.f32.mrf.mxu0
    %1258 = vmatprep.mubr.bf16.mxu0 0
    %1259 = vmatmul.mubr.bf16.gmra.mxu0 %v1118
    %v1260 = vpop.f32.mrf.mxu0
    %v1261 = vadd.f32 0.0, %v1260
    %v1262 = vpop.f32.mrf.mxu0
    %v1263 = vpop.f32.mrf.mxu0
    %v1264 = vadd.f32 0.0, %v1263
    %v1265 = vpop.f32.mrf.mxu0
    %1266 = vmatprep.mubr.bf16.mxu0 0
    %1267 = vmatmul.mubr.bf16.gmra.mxu0 %v1119
    %v1268 = vpop.f32.mrf.mxu0
    %v1269 = vadd.f32 0.0, %v1268
    %v1270 = vpop.f32.mrf.mxu0
    %v1271 = vpop.f32.mrf.mxu0
    %v1272 = vadd.f32 0.0, %v1271
    %v1273 = vpop.f32.mrf.mxu0
    %1274 = vmatprep.mubr.bf16.mxu0 0
    %1275 = vmatmul.mubr.bf16.gmra.mxu0 %v1120
    %v1276 = vpop.f32.mrf.mxu0
    %v1277 = vadd.f32 0.0, %v1276
    %v1278 = vpop.f32.mrf.mxu0
    %v1279 = vpop.f32.mrf.mxu0
    %v1280 = vadd.f32 0.0, %v1279
    %v1281 = vpop.f32.mrf.mxu0
    %1282 = vmatprep.mubr.bf16.mxu0 0
    %1283 = vmatmul.mubr.bf16.gmra.mxu0 %v1121
    %v1284 = vpop.f32.mrf.mxu0
    %v1285 = vadd.f32 0.0, %v1284
    %v1286 = vpop.f32.mrf.mxu0
    %v1287 = vpop.f32.mrf.mxu0
    %v1288 = vadd.f32 0.0, %v1287
    %v1289 = vpop.f32.mrf.mxu0
    %1290 = vmatprep.mubr.bf16.mxu0 0
    %1291 = vmatmul.mubr.bf16.gmra.mxu0 %v1122
    %v1292 = vpop.f32.mrf.mxu0
    %v1293 = vadd.f32 0.0, %v1292
    %v1294 = vpop.f32.mrf.mxu0
    %v1295 = vpop.f32.mrf.mxu0
    %v1296 = vadd.f32 0.0, %v1295
    %v1297 = vpop.f32.mrf.mxu0
    %1298 = vmatprep.mubr.bf16.mxu0 0
    %1299 = vmatmul.mubr.bf16.gmra.mxu0 %v1123
    %v1300 = vpop.f32.mrf.mxu0
    %v1301 = vadd.f32 0.0, %v1300
    %v1302 = vpop.f32.mrf.mxu0
    %v1303 = vpop.f32.mrf.mxu0
    %v1304 = vadd.f32 0.0, %v1303
    %v1305 = vpop.f32.mrf.mxu0
    %1306 = vmatprep.mubr.bf16.mxu0 0
    %1307 = vmatmul.mubr.bf16.gmra.mxu0 %v1124
    %v1308 = vpop.f32.mrf.mxu0
    %v1309 = vadd.f32 0.0, %v1308
    %v1310 = vpop.f32.mrf.mxu0
    %v1311 = vpop.f32.mrf.mxu0
    %v1312 = vadd.f32 0.0, %v1311
    %v1313 = vpop.f32.mrf.mxu0
    %1314 = vmatprep.mubr.bf16.mxu0 0
    %1315 = vmatmul.mubr.bf16.gmra.mxu0 %v1125
    %v1316 = vpop.f32.mrf.mxu0
    %v1317 = vadd.f32 0.0, %v1316
    %v1318 = vpop.f32.mrf.mxu0
    %v1319 = vpop.f32.mrf.mxu0
    %v1320 = vadd.f32 0.0, %v1319
    %v1321 = vpop.f32.mrf.mxu0
    %1322 = vmatprep.mubr.bf16.mxu0 0
    %1323 = vmatmul.mubr.bf16.gmra.mxu0 %v1126
    %v1324 = vpop.f32.mrf.mxu0
    %v1325 = vadd.f32 0.0, %v1324
    %v1326 = vpop.f32.mrf.mxu0
    %v1327 = vpop.f32.mrf.mxu0
    %v1328 = vadd.f32 0.0, %v1327
    %v1329 = vpop.f32.mrf.mxu0
    %1330 = vmatprep.mubr.bf16.mxu0 0
    %1331 = vmatmul.mubr.bf16.gmra.mxu0 %v1127
    %v1332 = vpop.f32.mrf.mxu0
    %v1333 = vadd.f32 0.0, %v1332
    %v1334 = vpop.f32.mrf.mxu0
    %v1335 = vpop.f32.mrf.mxu0
    %v1336 = vadd.f32 0.0, %v1335
    %v1337 = vpop.f32.mrf.mxu0
    %1338 = vmatprep.mubr.bf16.mxu0 0
    %1339 = vmatmul.mubr.bf16.gmra.mxu0 %v1128
    %v1340 = vpop.f32.mrf.mxu0
    %v1341 = vadd.f32 0.0, %v1340
    %v1342 = vpop.f32.mrf.mxu0
    %v1343 = vpop.f32.mrf.mxu0
    %v1344 = vadd.f32 0.0, %v1343
    %v1345 = vpop.f32.mrf.mxu0
    %1346 = vmatprep.mubr.bf16.mxu0 0
    %1347 = vmatmul.mubr.bf16.gmra.mxu0 %v1129
    %v1348 = vpop.f32.mrf.mxu0
    %v1349 = vadd.f32 0.0, %v1348
    %v1350 = vpop.f32.mrf.mxu0
    %v1351 = vpop.f32.mrf.mxu0
    %v1352 = vadd.f32 0.0, %v1351
    %v1353 = vpop.f32.mrf.mxu0
    %1354 = vdwg.mxu0
    %v1355 = vstv %s580
    %v1356 = vmul.f32 %v1355, %v1229
    %v1357 = vmul.f32 %v1355, %v1232
    %v1358 = vmul.f32 %v1355, %v1237
    %v1359 = vmul.f32 %v1355, %v1240
    %v1360 = vmul.f32 %v1355, %v1245
    %v1361 = vmul.f32 %v1355, %v1248
    %v1362 = vmul.f32 %v1355, %v1253
    %v1363 = vmul.f32 %v1355, %v1256
    %v1364 = vmul.f32 %v1355, %v1261
    %v1365 = vmul.f32 %v1355, %v1264
    %v1366 = vmul.f32 %v1355, %v1269
    %v1367 = vmul.f32 %v1355, %v1272
    %v1368 = vmul.f32 %v1355, %v1277
    %v1369 = vmul.f32 %v1355, %v1280
    %v1370 = vmul.f32 %v1355, %v1285
    %v1371 = vmul.f32 %v1355, %v1288
    %v1372 = vmul.f32 %v1355, %v1293
    %v1373 = vmul.f32 %v1355, %v1296
    %v1374 = vmul.f32 %v1355, %v1301
    %v1375 = vmul.f32 %v1355, %v1304
    %v1376 = vmul.f32 %v1355, %v1309
    %v1377 = vmul.f32 %v1355, %v1312
    %v1378 = vmul.f32 %v1355, %v1317
    %v1379 = vmul.f32 %v1355, %v1320
    %v1380 = vmul.f32 %v1355, %v1325
    %v1381 = vmul.f32 %v1355, %v1328
    %v1382 = vmul.f32 %v1355, %v1333
    %v1383 = vmul.f32 %v1355, %v1336
    %v1384 = vmul.f32 %v1355, %v1341
    %v1385 = vmul.f32 %v1355, %v1344
    %v1386 = vmul.f32 %v1355, %v1349
    %v1387 = vmul.f32 %v1355, %v1352
    %s1388 = ssub.f32 1.0, %s580
    %v1389 = vstv %s1388
    %v1390 = vmul.f32 %v1389, %v1082
    %v1391 = vmul.f32 %v1389, %v1083
    %v1392 = vmul.f32 %v1389, %v1084
    %v1393 = vmul.f32 %v1389, %v1085
    %v1394 = vmul.f32 %v1389, %v1086
    %v1395 = vmul.f32 %v1389, %v1087
    %v1396 = vmul.f32 %v1389, %v1088
    %v1397 = vmul.f32 %v1389, %v1089
    %v1398 = vmul.f32 %v1389, %v1090
    %v1399 = vmul.f32 %v1389, %v1091
    %v1400 = vmul.f32 %v1389, %v1092
    %v1401 = vmul.f32 %v1389, %v1093
    %v1402 = vmul.f32 %v1389, %v1094
    %v1403 = vmul.f32 %v1389, %v1095
    %v1404 = vmul.f32 %v1389, %v1096
    %v1405 = vmul.f32 %v1389, %v1097
    %v1406 = vmul.f32 %v1389, %v1098
    %v1407 = vmul.f32 %v1389, %v1099
    %v1408 = vmul.f32 %v1389, %v1100
    %v1409 = vmul.f32 %v1389, %v1101
    %v1410 = vmul.f32 %v1389, %v1102
    %v1411 = vmul.f32 %v1389, %v1103
    %v1412 = vmul.f32 %v1389, %v1104
    %v1413 = vmul.f32 %v1389, %v1105
    %v1414 = vmul.f32 %v1389, %v1106
    %v1415 = vmul.f32 %v1389, %v1107
    %v1416 = vmul.f32 %v1389, %v1108
    %v1417 = vmul.f32 %v1389, %v1109
    %v1418 = vmul.f32 %v1389, %v1110
    %v1419 = vmul.f32 %v1389, %v1111
    %v1420 = vmul.f32 %v1389, %v1112
    %v1421 = vmul.f32 %v1389, %v1113
    %v1422 = vadd.f32 %v1356, %v1390
    %v1423 = vadd.f32 %v1357, %v1391
    %v1424 = vadd.f32 %v1358, %v1392
    %v1425 = vadd.f32 %v1359, %v1393
    %v1426 = vadd.f32 %v1360, %v1394
    %v1427 = vadd.f32 %v1361, %v1395
    %v1428 = vadd.f32 %v1362, %v1396
    %v1429 = vadd.f32 %v1363, %v1397
    %v1430 = vadd.f32 %v1364, %v1398
    %v1431 = vadd.f32 %v1365, %v1399
    %v1432 = vadd.f32 %v1366, %v1400
    %v1433 = vadd.f32 %v1367, %v1401
    %v1434 = vadd.f32 %v1368, %v1402
    %v1435 = vadd.f32 %v1369, %v1403
    %v1436 = vadd.f32 %v1370, %v1404
    %v1437 = vadd.f32 %v1371, %v1405
    %v1438 = vadd.f32 %v1372, %v1406
    %v1439 = vadd.f32 %v1373, %v1407
    %v1440 = vadd.f32 %v1374, %v1408
    %v1441 = vadd.f32 %v1375, %v1409
    %v1442 = vadd.f32 %v1376, %v1410
    %v1443 = vadd.f32 %v1377, %v1411
    %v1444 = vadd.f32 %v1378, %v1412
    %v1445 = vadd.f32 %v1379, %v1413
    %v1446 = vadd.f32 %v1380, %v1414
    %v1447 = vadd.f32 %v1381, %v1415
    %v1448 = vadd.f32 %v1382, %v1416
    %v1449 = vadd.f32 %v1383, %v1417
    %v1450 = vadd.f32 %v1384, %v1418
    %v1451 = vadd.f32 %v1385, %v1419
    %v1452 = vadd.f32 %v1386, %v1420
    %v1453 = vadd.f32 %v1387, %v1421
    %v1454 = vadd.f32 %v1422, %v582
    %v1455 = vadd.f32 %v1423, %v583
    %v1456 = vadd.f32 %v1424, %v584
    %v1457 = vadd.f32 %v1425, %v585
    %v1458 = vadd.f32 %v1426, %v586
    %v1459 = vadd.f32 %v1427, %v587
    %v1460 = vadd.f32 %v1428, %v588
    %v1461 = vadd.f32 %v1429, %v589
    %v1462 = vadd.f32 %v1430, %v590
    %v1463 = vadd.f32 %v1431, %v591
    %v1464 = vadd.f32 %v1432, %v592
    %v1465 = vadd.f32 %v1433, %v593
    %v1466 = vadd.f32 %v1434, %v594
    %v1467 = vadd.f32 %v1435, %v595
    %v1468 = vadd.f32 %v1436, %v596
    %v1469 = vadd.f32 %v1437, %v597
    %v1470 = vadd.f32 %v1438, %v598
    %v1471 = vadd.f32 %v1439, %v599
    %v1472 = vadd.f32 %v1440, %v600
    %v1473 = vadd.f32 %v1441, %v601
    %v1474 = vadd.f32 %v1442, %v602
    %v1475 = vadd.f32 %v1443, %v603
    %v1476 = vadd.f32 %v1444, %v604
    %v1477 = vadd.f32 %v1445, %v605
    %v1478 = vadd.f32 %v1446, %v606
    %v1479 = vadd.f32 %v1447, %v607
    %v1480 = vadd.f32 %v1448, %v608
    %v1481 = vadd.f32 %v1449, %v609
    %v1482 = vadd.f32 %v1450, %v610
    %v1483 = vadd.f32 %v1451, %v611
    %v1484 = vadd.f32 %v1452, %v612
    %v1485 = vadd.f32 %v1453, %v613
    %v1486 = vmax.f32 %v1454, 0.0
    %v1487 = vmax.f32 %v1455, 0.0
    %v1488 = vmax.f32 %v1456, 0.0
    %v1489 = vmax.f32 %v1457, 0.0
    %v1490 = vmax.f32 %v1458, 0.0
    %v1491 = vmax.f32 %v1459, 0.0
    %v1492 = vmax.f32 %v1460, 0.0
    %v1493 = vmax.f32 %v1461, 0.0
    %v1494 = vmax.f32 %v1462, 0.0
    %v1495 = vmax.f32 %v1463, 0.0
    %v1496 = vmax.f32 %v1464, 0.0
    %v1497 = vmax.f32 %v1465, 0.0
    %v1498 = vmax.f32 %v1466, 0.0
    %v1499 = vmax.f32 %v1467, 0.0
    %v1500 = vmax.f32 %v1468, 0.0
    %v1501 = vmax.f32 %v1469, 0.0
    %v1502 = vmax.f32 %v1470, 0.0
    %v1503 = vmax.f32 %v1471, 0.0
    %v1504 = vmax.f32 %v1472, 0.0
    %v1505 = vmax.f32 %v1473, 0.0
    %v1506 = vmax.f32 %v1474, 0.0
    %v1507 = vmax.f32 %v1475, 0.0
    %v1508 = vmax.f32 %v1476, 0.0
    %v1509 = vmax.f32 %v1477, 0.0
    %v1510 = vmax.f32 %v1478, 0.0
    %v1511 = vmax.f32 %v1479, 0.0
    %v1512 = vmax.f32 %v1480, 0.0
    %v1513 = vmax.f32 %v1481, 0.0
    %v1514 = vmax.f32 %v1482, 0.0
    %v1515 = vmax.f32 %v1483, 0.0
    %v1516 = vmax.f32 %v1484, 0.0
    %v1517 = vmax.f32 %v1485, 0.0
    %1518 = vst [vmem:[#allocation2] sm:$0xff] %v1486
    %1519 = vst [vmem:[#allocation2 + $0x8] sm:$0xff] %v1487
    %1520 = vst [vmem:[#allocation2 + $0x10] sm:$0xff] %v1488
    %1521 = vst [vmem:[#allocation2 + $0x18] sm:$0xff] %v1489
    %1522 = vst [vmem:[#allocation2 + $0x20] sm:$0xff] %v1490
    %1523 = vst [vmem:[#allocation2 + $0x28] sm:$0xff] %v1491
    %1524 = vst [vmem:[#allocation2 + $0x30] sm:$0xff] %v1492
    %1525 = vst [vmem:[#allocation2 + $0x38] sm:$0xff] %v1493
    %1526 = vst [vmem:[#allocation2 + $0x40] sm:$0xff] %v1494
    %1527 = vst [vmem:[#allocation2 + $0x48] sm:$0xff] %v1495
    %1528 = vst [vmem:[#allocation2 + $0x50] sm:$0xff] %v1496
    %1529 = vst [vmem:[#allocation2 + $0x58] sm:$0xff] %v1497
    %1530 = vst [vmem:[#allocation2 + $0x60] sm:$0xff] %v1498
    %1531 = vst [vmem:[#allocation2 + $0x68] sm:$0xff] %v1499
    %1532 = vst [vmem:[#allocation2 + $0x70] sm:$0xff] %v1500
    %1533 = vst [vmem:[#allocation2 + $0x78] sm:$0xff] %v1501
    %1534 = vst [vmem:[#allocation2 + $0x80] sm:$0xff] %v1502
    %1535 = vst [vmem:[#allocation2 + $0x88] sm:$0xff] %v1503
    %1536 = vst [vmem:[#allocation2 + $0x90] sm:$0xff] %v1504
    %1537 = vst [vmem:[#allocation2 + $0x98] sm:$0xff] %v1505
    %1538 = vst [vmem:[#allocation2 + $0xa0] sm:$0xff] %v1506
    %1539 = vst [vmem:[#allocation2 + $0xa8] sm:$0xff] %v1507
    %1540 = vst [vmem:[#allocation2 + $0xb0] sm:$0xff] %v1508
    %1541 = vst [vmem:[#allocation2 + $0xb8] sm:$0xff] %v1509
    %1542 = vst [vmem:[#allocation2 + $0xc0] sm:$0xff] %v1510
    %1543 = vst [vmem:[#allocation2 + $0xc8] sm:$0xff] %v1511
    %1544 = vst [vmem:[#allocation2 + $0xd0] sm:$0xff] %v1512
    %1545 = vst [vmem:[#allocation2 + $0xd8] sm:$0xff] %v1513
    %1546 = vst [vmem:[#allocation2 + $0xe0] sm:$0xff] %v1514
    %1547 = vst [vmem:[#allocation2 + $0xe8] sm:$0xff] %v1515
    %1548 = vst [vmem:[#allocation2 + $0xf0] sm:$0xff] %v1516
    %1549 = vst [vmem:[#allocation2 + $0xf8] sm:$0xff] %v1517
    %s1550 = sld [smem:[#allocation4 + $0x2]]
    %s1551 = sld [smem:[#allocation4 + $0x3]]
    %v1552 = vld [vmem:[#allocation2] sm:$0xff]
    %v1553 = vld [vmem:[#allocation2 + $0x8] sm:$0xff]
    %v1554 = vld [vmem:[#allocation2 + $0x10] sm:$0xff]
    %v1555 = vld [vmem:[#allocation2 + $0x18] sm:$0xff]
    %v1556 = vld [vmem:[#allocation2 + $0x20] sm:$0xff]
    %v1557 = vld [vmem:[#allocation2 + $0x28] sm:$0xff]
    %v1558 = vld [vmem:[#allocation2 + $0x30] sm:$0xff]
    %v1559 = vld [vmem:[#allocation2 + $0x38] sm:$0xff]
    %v1560 = vld [vmem:[#allocation2 + $0x40] sm:$0xff]
    %v1561 = vld [vmem:[#allocation2 + $0x48] sm:$0xff]
    %v1562 = vld [vmem:[#allocation2 + $0x50] sm:$0xff]
    %v1563 = vld [vmem:[#allocation2 + $0x58] sm:$0xff]
    %v1564 = vld [vmem:[#allocation2 + $0x60] sm:$0xff]
    %v1565 = vld [vmem:[#allocation2 + $0x68] sm:$0xff]
    %v1566 = vld [vmem:[#allocation2 + $0x70] sm:$0xff]
    %v1567 = vld [vmem:[#allocation2 + $0x78] sm:$0xff]
    %v1568 = vld [vmem:[#allocation2 + $0x80] sm:$0xff]
    %v1569 = vld [vmem:[#allocation2 + $0x88] sm:$0xff]
    %v1570 = vld [vmem:[#allocation2 + $0x90] sm:$0xff]
    %v1571 = vld [vmem:[#allocation2 + $0x98] sm:$0xff]
    %v1572 = vld [vmem:[#allocation2 + $0xa0] sm:$0xff]
    %v1573 = vld [vmem:[#allocation2 + $0xa8] sm:$0xff]
    %v1574 = vld [vmem:[#allocation2 + $0xb0] sm:$0xff]
    %v1575 = vld [vmem:[#allocation2 + $0xb8] sm:$0xff]
    %v1576 = vld [vmem:[#allocation2 + $0xc0] sm:$0xff]
    %v1577 = vld [vmem:[#allocation2 + $0xc8] sm:$0xff]
    %v1578 = vld [vmem:[#allocation2 + $0xd0] sm:$0xff]
    %v1579 = vld [vmem:[#allocation2 + $0xd8] sm:$0xff]
    %v1580 = vld [vmem:[#allocation2 + $0xe0] sm:$0xff]
    %v1581 = vld [vmem:[#allocation2 + $0xe8] sm:$0xff]
    %v1582 = vld [vmem:[#allocation2 + $0xf0] sm:$0xff]
    %v1583 = vld [vmem:[#allocation2 + $0xf8] sm:$0xff]
    %v1584 = vld [vmem:[#allocation9] sm:$0xff]
    %v1585 = vld [vmem:[#allocation9 + $0x8] sm:$0xff]
    %v1586 = vld [vmem:[#allocation9 + $0x10] sm:$0xff]
    %v1587 = vld [vmem:[#allocation9 + $0x18] sm:$0xff]
    %v1588 = vld [vmem:[#allocation9 + $0x20] sm:$0xff]
    %v1589 = vld [vmem:[#allocation9 + $0x28] sm:$0xff]
    %v1590 = vld [vmem:[#allocation9 + $0x30] sm:$0xff]
    %v1591 = vld [vmem:[#allocation9 + $0x38] sm:$0xff]
    %v1592 = vld [vmem:[#allocation9 + $0x40] sm:$0xff]
    %v1593 = vld [vmem:[#allocation9 + $0x48] sm:$0xff]
    %v1594 = vld [vmem:[#allocation9 + $0x50] sm:$0xff]
    %v1595 = vld [vmem:[#allocation9 + $0x58] sm:$0xff]
    %v1596 = vld [vmem:[#allocation9 + $0x60] sm:$0xff]
    %v1597 = vld [vmem:[#allocation9 + $0x68] sm:$0xff]
    %v1598 = vld [vmem:[#allocation9 + $0x70] sm:$0xff]
    %v1599 = vld [vmem:[#allocation9 + $0x78] sm:$0xff]
    %v1600 = vld [vmem:[#allocation9 + $0x80] sm:$0xff]
    %v1601 = vld [vmem:[#allocation9 + $0x88] sm:$0xff]
    %v1602 = vld [vmem:[#allocation9 + $0x90] sm:$0xff]
    %v1603 = vld [vmem:[#allocation9 + $0x98] sm:$0xff]
    %v1604 = vld [vmem:[#allocation9 + $0xa0] sm:$0xff]
    %v1605 = vld [vmem:[#allocation9 + $0xa8] sm:$0xff]
    %v1606 = vld [vmem:[#allocation9 + $0xb0] sm:$0xff]
    %v1607 = vld [vmem:[#allocation9 + $0xb8] sm:$0xff]
    %v1608 = vld [vmem:[#allocation9 + $0xc0] sm:$0xff]
    %v1609 = vld [vmem:[#allocation9 + $0xc8] sm:$0xff]
    %v1610 = vld [vmem:[#allocation9 + $0xd0] sm:$0xff]
    %v1611 = vld [vmem:[#allocation9 + $0xd8] sm:$0xff]
    %v1612 = vld [vmem:[#allocation9 + $0xe0] sm:$0xff]
    %v1613 = vld [vmem:[#allocation9 + $0xe8] sm:$0xff]
    %v1614 = vld [vmem:[#allocation9 + $0xf0] sm:$0xff]
    %v1615 = vld [vmem:[#allocation9 + $0xf8] sm:$0xff]
    %v1616 = vpack.c.bf16 %v1553, %v1552
    %v1617 = vpack.c.bf16 %v1555, %v1554
    %v1618 = vpack.c.bf16 %v1557, %v1556
    %v1619 = vpack.c.bf16 %v1559, %v1558
    %v1620 = vpack.c.bf16 %v1561, %v1560
    %v1621 = vpack.c.bf16 %v1563, %v1562
    %v1622 = vpack.c.bf16 %v1565, %v1564
    %v1623 = vpack.c.bf16 %v1567, %v1566
    %v1624 = vpack.c.bf16 %v1569, %v1568
    %v1625 = vpack.c.bf16 %v1571, %v1570
    %v1626 = vpack.c.bf16 %v1573, %v1572
    %v1627 = vpack.c.bf16 %v1575, %v1574
    %v1628 = vpack.c.bf16 %v1577, %v1576
    %v1629 = vpack.c.bf16 %v1579, %v1578
    %v1630 = vpack.c.bf16 %v1581, %v1580
    %v1631 = vpack.c.bf16 %v1583, %v1582
    %v1664 = vunpack.c.l.b16 %v1584
    %v1665 = vunpack.c.h.b16 %v1584
    %v1666 = vunpack.c.l.b16 %v1585
    %v1667 = vunpack.c.h.b16 %v1585
    %v1668 = vunpack.c.l.b16 %v1586
    %v1669 = vunpack.c.h.b16 %v1586
    %v1670 = vunpack.c.l.b16 %v1587
    %v1671 = vunpack.c.h.b16 %v1587
    %v1672 = vunpack.c.l.b16 %v1588
    %v1673 = vunpack.c.h.b16 %v1588
    %v1674 = vunpack.c.l.b16 %v1589
    %v1675 = vunpack.c.h.b16 %v1589
    %v1676 = vunpack.c.l.b16 %v1590
    %v1677 = vunpack.c.h.b16 %v1590
    %v1678 = vunpack.c.l.b16 %v1591
    %v1679 = vunpack.c.h.b16 %v1591
    %v1680 = vunpack.c.l.b16 %v1592
    %v1681 = vunpack.c.h.b16 %v1592
    %v1682 = vunpack.c.l.b16 %v1593
    %v1683 = vunpack.c.h.b16 %v1593
    %v1684 = vunpack.c.l.b16 %v1594
    %v1685 = vunpack.c.h.b16 %v1594
    %v1686 = vunpack.c.l.b16 %v1595
    %v1687 = vunpack.c.h.b16 %v1595
    %v1688 = vunpack.c.l.b16 %v1596
    %v1689 = vunpack.c.h.b16 %v1596
    %v1690 = vunpack.c.l.b16 %v1597
    %v1691 = vunpack.c.h.b16 %v1597
    %v1692 = vunpack.c.l.b16 %v1598
    %v1693 = vunpack.c.h.b16 %v1598
    %v1694 = vunpack.c.l.b16 %v1599
    %v1695 = vunpack.c.h.b16 %v1599
    %v1696 = vunpack.c.l.b16 %v1600
    %v1697 = vunpack.c.h.b16 %v1600
    %v1698 = vunpack.c.l.b16 %v1601
    %v1699 = vunpack.c.h.b16 %v1601
    %v1700 = vunpack.c.l.b16 %v1602
    %v1701 = vunpack.c.h.b16 %v1602
    %v1702 = vunpack.c.l.b16 %v1603
    %v1703 = vunpack.c.h.b16 %v1603
    %v1704 = vunpack.c.l.b16 %v1604
    %v1705 = vunpack.c.h.b16 %v1604
    %v1706 = vunpack.c.l.b16 %v1605
    %v1707 = vunpack.c.h.b16 %v1605
    %v1708 = vunpack.c.l.b16 %v1606
    %v1709 = vunpack.c.h.b16 %v1606
    %v1710 = vunpack.c.l.b16 %v1607
    %v1711 = vunpack.c.h.b16 %v1607
    %v1712 = vunpack.c.l.b16 %v1608
    %v1713 = vunpack.c.h.b16 %v1608
    %v1714 = vunpack.c.l.b16 %v1609
    %v1715 = vunpack.c.h.b16 %v1609
    %v1716 = vunpack.c.l.b16 %v1610
    %v1717 = vunpack.c.h.b16 %v1610
    %v1718 = vunpack.c.l.b16 %v1611
    %v1719 = vunpack.c.h.b16 %v1611
    %v1720 = vunpack.c.l.b16 %v1612
    %v1721 = vunpack.c.h.b16 %v1612
    %v1722 = vunpack.c.l.b16 %v1613
    %v1723 = vunpack.c.h.b16 %v1613
    %v1724 = vunpack.c.l.b16 %v1614
    %v1725 = vunpack.c.h.b16 %v1614
    %v1726 = vunpack.c.l.b16 %v1615
    %v1727 = vunpack.c.h.b16 %v1615
    %v1728 = vpack.c.b16 %v1666, %v1664
    %v1729 = vpack.c.b16 %v1667, %v1665
    %v1730 = vpack.c.b16 %v1670, %v1668
    %v1731 = vpack.c.b16 %v1671, %v1669
    %v1732 = vpack.c.b16 %v1674, %v1672
    %v1733 = vpack.c.b16 %v1675, %v1673
    %v1734 = vpack.c.b16 %v1678, %v1676
    %v1735 = vpack.c.b16 %v1679, %v1677
    %v1736 = vpack.c.b16 %v1682, %v1680
    %v1737 = vpack.c.b16 %v1683, %v1681
    %v1738 = vpack.c.b16 %v1686, %v1684
    %v1739 = vpack.c.b16 %v1687, %v1685
    %v1740 = vpack.c.b16 %v1690, %v1688
    %v1741 = vpack.c.b16 %v1691, %v1689
    %v1742 = vpack.c.b16 %v1694, %v1692
    %v1743 = vpack.c.b16 %v1695, %v1693
    %v1744 = vpack.c.b16 %v1698, %v1696
    %v1745 = vpack.c.b16 %v1699, %v1697
    %v1746 = vpack.c.b16 %v1702, %v1700
    %v1747 = vpack.c.b16 %v1703, %v1701
    %v1748 = vpack.c.b16 %v1706, %v1704
    %v1749 = vpack.c.b16 %v1707, %v1705
    %v1750 = vpack.c.b16 %v1710, %v1708
    %v1751 = vpack.c.b16 %v1711, %v1709
    %v1752 = vpack.c.b16 %v1714, %v1712
    %v1753 = vpack.c.b16 %v1715, %v1713
    %v1754 = vpack.c.b16 %v1718, %v1716
    %v1755 = vpack.c.b16 %v1719, %v1717
    %v1756 = vpack.c.b16 %v1722, %v1720
    %v1757 = vpack.c.b16 %v1723, %v1721
    %v1758 = vpack.c.b16 %v1726, %v1724
    %v1759 = vpack.c.b16 %v1727, %v1725
    %1792 = vmatprep.subr.bf16.mxu0 0
    %1793 = vmatpush1.bf16.msra.mxu0 %v1623
    %1794 = vmatprep.subr.bf16.mxu0 0
    %1795 = vmatpush1.bf16.msra.mxu0 %v1622
    %1796 = vmatprep.subr.bf16.mxu0 0
    %1797 = vmatpush1.bf16.msra.mxu0 %v1621
    %1798 = vmatprep.subr.bf16.mxu0 0
    %1799 = vmatpush1.bf16.msra.mxu0 %v1620
    %1800 = vmatprep.subr.bf16.mxu0 0
    %1801 = vmatpush1.bf16.msra.mxu0 %v1619
    %1802 = vmatprep.subr.bf16.mxu0 0
    %1803 = vmatpush1.bf16.msra.mxu0 %v1618
    %1804 = vmatprep.subr.bf16.mxu0 0
    %1805 = vmatpush1.bf16.msra.mxu0 %v1617
    %1806 = vmatprep.subr.bf16.mxu0 0
    %1807 = vmatpush1.bf16.msra.mxu0 %v1616
    %1808 = vmatprep.subr.bf16.mxu0 0
    %1809 = vmatpush2.bf16.msra.mxu0 %v1631
    %1810 = vmatprep.subr.bf16.mxu0 0
    %1811 = vmatpush2.bf16.msra.mxu0 %v1630
    %1812 = vmatprep.subr.bf16.mxu0 0
    %1813 = vmatpush2.bf16.msra.mxu0 %v1629
    %1814 = vmatprep.subr.bf16.mxu0 0
    %1815 = vmatpush2.bf16.msra.mxu0 %v1628
    %1816 = vmatprep.subr.bf16.mxu0 0
    %1817 = vmatpush2.bf16.msra.mxu0 %v1627
    %1818 = vmatprep.subr.bf16.mxu0 0
    %1819 = vmatpush2.bf16.msra.mxu0 %v1626
    %1820 = vmatprep.subr.bf16.mxu0 0
    %1821 = vmatpush2.bf16.msra.mxu0 %v1625
    %1822 = vmatprep.subr.bf16.mxu0 0
    %1823 = vmatpush2.bf16.msra.mxu0 %v1624
    %1824 = vmatprep.mubr.bf16.mxu0 %v1729
    %1825 = vmatmul.mubr.bf16.gmra.mxu0 %v1728
    %v1826 = vpop.f32.mrf.mxu0
    %v1827 = vadd.f32 0.0, %v1826
    %v1828 = vpop.f32.mrf.mxu0
    %v1829 = vpop.f32.mrf.mxu0
    %v1830 = vadd.f32 0.0, %v1829
    %v1831 = vpop.f32.mrf.mxu0
    %1832 = vmatprep.mubr.bf16.mxu0 %v1731
    %1833 = vmatmul.mubr.bf16.gmra.mxu0 %v1730
    %v1834 = vpop.f32.mrf.mxu0
    %v1835 = vadd.f32 0.0, %v1834
    %v1836 = vpop.f32.mrf.mxu0
    %v1837 = vpop.f32.mrf.mxu0
    %v1838 = vadd.f32 0.0, %v1837
    %v1839 = vpop.f32.mrf.mxu0
    %1840 = vmatprep.mubr.bf16.mxu0 %v1733
    %1841 = vmatmul.mubr.bf16.gmra.mxu0 %v1732
    %v1842 = vpop.f32.mrf.mxu0
    %v1843 = vadd.f32 0.0, %v1842
    %v1844 = vpop.f32.mrf.mxu0
    %v1845 = vpop.f32.mrf.mxu0
    %v1846 = vadd.f32 0.0, %v1845
    %v1847 = vpop.f32.mrf.mxu0
    %1848 = vmatprep.mubr.bf16.mxu0 %v1735
    %1849 = vmatmul.mubr.bf16.gmra.mxu0 %v1734
    %v1850 = vpop.f32.mrf.mxu0
    %v1851 = vadd.f32 0.0, %v1850
    %v1852 = vpop.f32.mrf.mxu0
    %v1853 = vpop.f32.mrf.mxu0
    %v1854 = vadd.f32 0.0, %v1853
    %v1855 = vpop.f32.mrf.mxu0
    %1856 = vmatprep.mubr.bf16.mxu0 %v1737
    %1857 = vmatmul.mubr.bf16.gmra.mxu0 %v1736
    %v1858 = vpop.f32.mrf.mxu0
    %v1859 = vadd.f32 0.0, %v1858
    %v1860 = vpop.f32.mrf.mxu0
    %v1861 = vpop.f32.mrf.mxu0
    %v1862 = vadd.f32 0.0, %v1861
    %v1863 = vpop.f32.mrf.mxu0
    %1864 = vmatprep.mubr.bf16.mxu0 %v1739
    %1865 = vmatmul.mubr.bf16.gmra.mxu0 %v1738
    %v1866 = vpop.f32.mrf.mxu0
    %v1867 = vadd.f32 0.0, %v1866
    %v1868 = vpop.f32.mrf.mxu0
    %v1869 = vpop.f32.mrf.mxu0
    %v1870 = vadd.f32 0.0, %v1869
    %v1871 = vpop.f32.mrf.mxu0
    %1872 = vmatprep.mubr.bf16.mxu0 %v1741
    %1873 = vmatmul.mubr.bf16.gmra.mxu0 %v1740
    %v1874 = vpop.f32.mrf.mxu0
    %v1875 = vadd.f32 0.0, %v1874
    %v1876 = vpop.f32.mrf.mxu0
    %v1877 = vpop.f32.mrf.mxu0
    %v1878 = vadd.f32 0.0, %v1877
    %v1879 = vpop.f32.mrf.mxu0
    %1880 = vmatprep.mubr.bf16.mxu0 %v1743
    %1881 = vmatmul.mubr.bf16.gmra.mxu0 %v1742
    %v1882 = vpop.f32.mrf.mxu0
    %v1883 = vadd.f32 0.0, %v1882
    %v1884 = vpop.f32.mrf.mxu0
    %v1885 = vpop.f32.mrf.mxu0
    %v1886 = vadd.f32 0.0, %v1885
    %v1887 = vpop.f32.mrf.mxu0
    %1888 = vmatprep.mubr.bf16.mxu0 %v1745
    %1889 = vmatmul.mubr.bf16.gmra.mxu0 %v1744
    %v1890 = vpop.f32.mrf.mxu0
    %v1891 = vadd.f32 0.0, %v1890
    %v1892 = vpop.f32.mrf.mxu0
    %v1893 = vpop.f32.mrf.mxu0
    %v1894 = vadd.f32 0.0, %v1893
    %v1895 = vpop.f32.mrf.mxu0
    %1896 = vmatprep.mubr.bf16.mxu0 %v1747
    %1897 = vmatmul.mubr.bf16.gmra.mxu0 %v1746
    %v1898 = vpop.f32.mrf.mxu0
    %v1899 = vadd.f32 0.0, %v1898
    %v1900 = vpop.f32.mrf.mxu0
    %v1901 = vpop.f32.mrf.mxu0
    %v1902 = vadd.f32 0.0, %v1901
    %v1903 = vpop.f32.mrf.mxu0
    %1904 = vmatprep.mubr.bf16.mxu0 %v1749
    %1905 = vmatmul.mubr.bf16.gmra.mxu0 %v1748
    %v1906 = vpop.f32.mrf.mxu0
    %v1907 = vadd.f32 0.0, %v1906
    %v1908 = vpop.f32.mrf.mxu0
    %v1909 = vpop.f32.mrf.mxu0
    %v1910 = vadd.f32 0.0, %v1909
    %v1911 = vpop.f32.mrf.mxu0
    %1912 = vmatprep.mubr.bf16.mxu0 %v1751
    %1913 = vmatmul.mubr.bf16.gmra.mxu0 %v1750
    %v1914 = vpop.f32.mrf.mxu0
    %v1915 = vadd.f32 0.0, %v1914
    %v1916 = vpop.f32.mrf.mxu0
    %v1917 = vpop.f32.mrf.mxu0
    %v1918 = vadd.f32 0.0, %v1917
    %v1919 = vpop.f32.mrf.mxu0
    %1920 = vmatprep.mubr.bf16.mxu0 %v1753
    %1921 = vmatmul.mubr.bf16.gmra.mxu0 %v1752
    %v1922 = vpop.f32.mrf.mxu0
    %v1923 = vadd.f32 0.0, %v1922
    %v1924 = vpop.f32.mrf.mxu0
    %v1925 = vpop.f32.mrf.mxu0
    %v1926 = vadd.f32 0.0, %v1925
    %v1927 = vpop.f32.mrf.mxu0
    %1928 = vmatprep.mubr.bf16.mxu0 %v1755
    %1929 = vmatmul.mubr.bf16.gmra.mxu0 %v1754
    %v1930 = vpop.f32.mrf.mxu0
    %v1931 = vadd.f32 0.0, %v1930
    %v1932 = vpop.f32.mrf.mxu0
    %v1933 = vpop.f32.mrf.mxu0
    %v1934 = vadd.f32 0.0, %v1933
    %v1935 = vpop.f32.mrf.mxu0
    %1936 = vmatprep.mubr.bf16.mxu0 %v1757
    %1937 = vmatmul.mubr.bf16.gmra.mxu0 %v1756
    %v1938 = vpop.f32.mrf.mxu0
    %v1939 = vadd.f32 0.0, %v1938
    %v1940 = vpop.f32.mrf.mxu0
    %v1941 = vpop.f32.mrf.mxu0
    %v1942 = vadd.f32 0.0, %v1941
    %v1943 = vpop.f32.mrf.mxu0
    %1944 = vmatprep.mubr.bf16.mxu0 %v1759
    %1945 = vmatmul.mubr.bf16.gmra.mxu0 %v1758
    %v1946 = vpop.f32.mrf.mxu0
    %v1947 = vadd.f32 0.0, %v1946
    %v1948 = vpop.f32.mrf.mxu0
    %v1949 = vpop.f32.mrf.mxu0
    %v1950 = vadd.f32 0.0, %v1949
    %v1951 = vpop.f32.mrf.mxu0
    %1952 = vdwg.mxu0
    %s1953 = ssub.f32 1.0, %s1551
    %v1954 = vstv %s1953
    %v1955 = vmul.f32 %v1954, %v1827
    %v1956 = vmul.f32 %v1954, %v1830
    %v1957 = vmul.f32 %v1954, %v1835
    %v1958 = vmul.f32 %v1954, %v1838
    %v1959 = vmul.f32 %v1954, %v1843
    %v1960 = vmul.f32 %v1954, %v1846
    %v1961 = vmul.f32 %v1954, %v1851
    %v1962 = vmul.f32 %v1954, %v1854
    %v1963 = vmul.f32 %v1954, %v1859
    %v1964 = vmul.f32 %v1954, %v1862
    %v1965 = vmul.f32 %v1954, %v1867
    %v1966 = vmul.f32 %v1954, %v1870
    %v1967 = vmul.f32 %v1954, %v1875
    %v1968 = vmul.f32 %v1954, %v1878
    %v1969 = vmul.f32 %v1954, %v1883
    %v1970 = vmul.f32 %v1954, %v1886
    %v1971 = vmul.f32 %v1954, %v1891
    %v1972 = vmul.f32 %v1954, %v1894
    %v1973 = vmul.f32 %v1954, %v1899
    %v1974 = vmul.f32 %v1954, %v1902
    %v1975 = vmul.f32 %v1954, %v1907
    %v1976 = vmul.f32 %v1954, %v1910
    %v1977 = vmul.f32 %v1954, %v1915
    %v1978 = vmul.f32 %v1954, %v1918
    %v1979 = vmul.f32 %v1954, %v1923
    %v1980 = vmul.f32 %v1954, %v1926
    %v1981 = vmul.f32 %v1954, %v1931
    %v1982 = vmul.f32 %v1954, %v1934
    %v1983 = vmul.f32 %v1954, %v1939
    %v1984 = vmul.f32 %v1954, %v1942
    %v1985 = vmul.f32 %v1954, %v1947
    %v1986 = vmul.f32 %v1954, %v1950
    %v1987 = vld [vmem:[#allocation3] sm:$0xff]
    %v1988 = vld [vmem:[#allocation3 + $0x8] sm:$0xff]
    %v1989 = vld [vmem:[#allocation3 + $0x10] sm:$0xff]
    %v1990 = vld [vmem:[#allocation3 + $0x18] sm:$0xff]
    %v1991 = vld [vmem:[#allocation3 + $0x20] sm:$0xff]
    %v1992 = vld [vmem:[#allocation3 + $0x28] sm:$0xff]
    %v1993 = vld [vmem:[#allocation3 + $0x30] sm:$0xff]
    %v1994 = vld [vmem:[#allocation3 + $0x38] sm:$0xff]
    %v1995 = vld [vmem:[#allocation3 + $0x40] sm:$0xff]
    %v1996 = vld [vmem:[#allocation3 + $0x48] sm:$0xff]
    %v1997 = vld [vmem:[#allocation3 + $0x50] sm:$0xff]
    %v1998 = vld [vmem:[#allocation3 + $0x58] sm:$0xff]
    %v1999 = vld [vmem:[#allocation3 + $0x60] sm:$0xff]
    %v2000 = vld [vmem:[#allocation3 + $0x68] sm:$0xff]
    %v2001 = vld [vmem:[#allocation3 + $0x70] sm:$0xff]
    %v2002 = vld [vmem:[#allocation3 + $0x78] sm:$0xff]
    %v2003 = vld [vmem:[#allocation3 + $0x80] sm:$0xff]
    %v2004 = vld [vmem:[#allocation3 + $0x88] sm:$0xff]
    %v2005 = vld [vmem:[#allocation3 + $0x90] sm:$0xff]
    %v2006 = vld [vmem:[#allocation3 + $0x98] sm:$0xff]
    %v2007 = vld [vmem:[#allocation3 + $0xa0] sm:$0xff]
    %v2008 = vld [vmem:[#allocation3 + $0xa8] sm:$0xff]
    %v2009 = vld [vmem:[#allocation3 + $0xb0] sm:$0xff]
    %v2010 = vld [vmem:[#allocation3 + $0xb8] sm:$0xff]
    %v2011 = vld [vmem:[#allocation3 + $0xc0] sm:$0xff]
    %v2012 = vld [vmem:[#allocation3 + $0xc8] sm:$0xff]
    %v2013 = vld [vmem:[#allocation3 + $0xd0] sm:$0xff]
    %v2014 = vld [vmem:[#allocation3 + $0xd8] sm:$0xff]
    %v2015 = vld [vmem:[#allocation3 + $0xe0] sm:$0xff]
    %v2016 = vld [vmem:[#allocation3 + $0xe8] sm:$0xff]
    %v2017 = vld [vmem:[#allocation3 + $0xf0] sm:$0xff]
    %v2018 = vld [vmem:[#allocation3 + $0xf8] sm:$0xff]
    %v2019 = vstv %s1551
    %v2020 = vmul.f32 %v2019, %v1987
    %v2021 = vmul.f32 %v2019, %v1988
    %v2022 = vmul.f32 %v2019, %v1989
    %v2023 = vmul.f32 %v2019, %v1990
    %v2024 = vmul.f32 %v2019, %v1991
    %v2025 = vmul.f32 %v2019, %v1992
    %v2026 = vmul.f32 %v2019, %v1993
    %v2027 = vmul.f32 %v2019, %v1994
    %v2028 = vmul.f32 %v2019, %v1995
    %v2029 = vmul.f32 %v2019, %v1996
    %v2030 = vmul.f32 %v2019, %v1997
    %v2031 = vmul.f32 %v2019, %v1998
    %v2032 = vmul.f32 %v2019, %v1999
    %v2033 = vmul.f32 %v2019, %v2000
    %v2034 = vmul.f32 %v2019, %v2001
    %v2035 = vmul.f32 %v2019, %v2002
    %v2036 = vmul.f32 %v2019, %v2003
    %v2037 = vmul.f32 %v2019, %v2004
    %v2038 = vmul.f32 %v2019, %v2005
    %v2039 = vmul.f32 %v2019, %v2006
    %v2040 = vmul.f32 %v2019, %v2007
    %v2041 = vmul.f32 %v2019, %v2008
    %v2042 = vmul.f32 %v2019, %v2009
    %v2043 = vmul.f32 %v2019, %v2010
    %v2044 = vmul.f32 %v2019, %v2011
    %v2045 = vmul.f32 %v2019, %v2012
    %v2046 = vmul.f32 %v2019, %v2013
    %v2047 = vmul.f32 %v2019, %v2014
    %v2048 = vmul.f32 %v2019, %v2015
    %v2049 = vmul.f32 %v2019, %v2016
    %v2050 = vmul.f32 %v2019, %v2017
    %v2051 = vmul.f32 %v2019, %v2018
    %v2052 = vadd.f32 %v1955, %v2020
    %v2053 = vadd.f32 %v1956, %v2021
    %v2054 = vadd.f32 %v1957, %v2022
    %v2055 = vadd.f32 %v1958, %v2023
    %v2056 = vadd.f32 %v1959, %v2024
    %v2057 = vadd.f32 %v1960, %v2025
    %v2058 = vadd.f32 %v1961, %v2026
    %v2059 = vadd.f32 %v1962, %v2027
    %v2060 = vadd.f32 %v1963, %v2028
    %v2061 = vadd.f32 %v1964, %v2029
    %v2062 = vadd.f32 %v1965, %v2030
    %v2063 = vadd.f32 %v1966, %v2031
    %v2064 = vadd.f32 %v1967, %v2032
    %v2065 = vadd.f32 %v1968, %v2033
    %v2066 = vadd.f32 %v1969, %v2034
    %v2067 = vadd.f32 %v1970, %v2035
    %v2068 = vadd.f32 %v1971, %v2036
    %v2069 = vadd.f32 %v1972, %v2037
    %v2070 = vadd.f32 %v1973, %v2038
    %v2071 = vadd.f32 %v1974, %v2039
    %v2072 = vadd.f32 %v1975, %v2040
    %v2073 = vadd.f32 %v1976, %v2041
    %v2074 = vadd.f32 %v1977, %v2042
    %v2075 = vadd.f32 %v1978, %v2043
    %v2076 = vadd.f32 %v1979, %v2044
    %v2077 = vadd.f32 %v1980, %v2045
    %v2078 = vadd.f32 %v1981, %v2046
    %v2079 = vadd.f32 %v1982, %v2047
    %v2080 = vadd.f32 %v1983, %v2048
    %v2081 = vadd.f32 %v1984, %v2049
    %v2082 = vadd.f32 %v1985, %v2050
    %v2083 = vadd.f32 %v1986, %v2051
    %v2084 = vpack.c.bf16 %v2053, %v2052
    %v2085 = vpack.c.bf16 %v2055, %v2054
    %v2086 = vpack.c.bf16 %v2057, %v2056
    %v2087 = vpack.c.bf16 %v2059, %v2058
    %v2088 = vpack.c.bf16 %v2061, %v2060
    %v2089 = vpack.c.bf16 %v2063, %v2062
    %v2090 = vpack.c.bf16 %v2065, %v2064
    %v2091 = vpack.c.bf16 %v2067, %v2066
    %v2092 = vpack.c.bf16 %v2069, %v2068
    %v2093 = vpack.c.bf16 %v2071, %v2070
    %v2094 = vpack.c.bf16 %v2073, %v2072
    %v2095 = vpack.c.bf16 %v2075, %v2074
    %v2096 = vpack.c.bf16 %v2077, %v2076
    %v2097 = vpack.c.bf16 %v2079, %v2078
    %v2098 = vpack.c.bf16 %v2081, %v2080
    %v2099 = vpack.c.bf16 %v2083, %v2082
    %s2100 = scalar_lea.vmem [#allocation14], 64
    %v2101 = vld [vmem:[%s2100] sm:$0xf]
    %v2102 = vld [vmem:[%s2100 + $0x4] sm:$0xf]
    %v2103 = vld [vmem:[%s2100 + $0x8] sm:$0xf]
    %v2104 = vld [vmem:[%s2100 + $0xc] sm:$0xf]
    %v2105 = vld [vmem:[%s2100 + $0x10] sm:$0xf]
    %v2106 = vld [vmem:[%s2100 + $0x14] sm:$0xf]
    %v2107 = vld [vmem:[%s2100 + $0x18] sm:$0xf]
    %v2108 = vld [vmem:[%s2100 + $0x1c] sm:$0xf]
    %v2109 = vld [vmem:[%s2100 + $0x20] sm:$0xf]
    %v2110 = vld [vmem:[%s2100 + $0x24] sm:$0xf]
    %v2111 = vld [vmem:[%s2100 + $0x28] sm:$0xf]
    %v2112 = vld [vmem:[%s2100 + $0x2c] sm:$0xf]
    %v2113 = vld [vmem:[%s2100 + $0x30] sm:$0xf]
    %v2114 = vld [vmem:[%s2100 + $0x34] sm:$0xf]
    %v2115 = vld [vmem:[%s2100 + $0x38] sm:$0xf]
    %v2116 = vld [vmem:[%s2100 + $0x3c] sm:$0xf]
    %v2133 = vunpack.c.l.b16 %v2101
    %v2134 = vunpack.c.l.b16 %v2102
    %v2135 = vunpack.c.l.b16 %v2103
    %v2136 = vunpack.c.l.b16 %v2104
    %v2137 = vunpack.c.l.b16 %v2105
    %v2138 = vunpack.c.l.b16 %v2106
    %v2139 = vunpack.c.l.b16 %v2107
    %v2140 = vunpack.c.l.b16 %v2108
    %v2141 = vunpack.c.l.b16 %v2109
    %v2142 = vunpack.c.l.b16 %v2110
    %v2143 = vunpack.c.l.b16 %v2111
    %v2144 = vunpack.c.l.b16 %v2112
    %v2145 = vunpack.c.l.b16 %v2113
    %v2146 = vunpack.c.l.b16 %v2114
    %v2147 = vunpack.c.l.b16 %v2115
    %v2148 = vunpack.c.l.b16 %v2116
    %v2149 = vpack.c.b16 %v2134, %v2133
    %v2150 = vpack.c.b16 %v2136, %v2135
    %v2151 = vpack.c.b16 %v2138, %v2137
    %v2152 = vpack.c.b16 %v2140, %v2139
    %v2153 = vpack.c.b16 %v2142, %v2141
    %v2154 = vpack.c.b16 %v2144, %v2143
    %v2155 = vpack.c.b16 %v2146, %v2145
    %v2156 = vpack.c.b16 %v2148, %v2147
    %2165 = vmatprep.subr.bf16.mxu0 0
    %2166 = vmatpush1.bf16.msra.mxu0 %v2156
    %2167 = vmatprep.subr.bf16.mxu0 0
    %2168 = vmatpush1.bf16.msra.mxu0 %v2155
    %2169 = vmatprep.subr.bf16.mxu0 0
    %2170 = vmatpush1.bf16.msra.mxu0 %v2154
    %2171 = vmatprep.subr.bf16.mxu0 0
    %2172 = vmatpush1.bf16.msra.mxu0 %v2153
    %2173 = vmatprep.subr.bf16.mxu0 0
    %2174 = vmatpush1.bf16.msra.mxu0 %v2152
    %2175 = vmatprep.subr.bf16.mxu0 0
    %2176 = vmatpush1.bf16.msra.mxu0 %v2151
    %2177 = vmatprep.subr.bf16.mxu0 0
    %2178 = vmatpush1.bf16.msra.mxu0 %v2150
    %2179 = vmatprep.subr.bf16.mxu0 0
    %2180 = vmatpush1.bf16.msra.mxu0 %v2149
    %2181 = vmatprep.subr.bf16.mxu0 0
    %2182 = vmatpush2.bf16.msra.mxu0 0
    %2183 = vmatprep.subr.bf16.mxu0 0
    %2184 = vmatpush2.bf16.msra.mxu0 0
    %2185 = vmatprep.subr.bf16.mxu0 0
    %2186 = vmatpush2.bf16.msra.mxu0 0
    %2187 = vmatprep.subr.bf16.mxu0 0
    %2188 = vmatpush2.bf16.msra.mxu0 0
    %2189 = vmatprep.subr.bf16.mxu0 0
    %2190 = vmatpush2.bf16.msra.mxu0 0
    %2191 = vmatprep.subr.bf16.mxu0 0
    %2192 = vmatpush2.bf16.msra.mxu0 0
    %2193 = vmatprep.subr.bf16.mxu0 0
    %2194 = vmatpush2.bf16.msra.mxu0 0
    %2195 = vmatprep.subr.bf16.mxu0 0
    %2196 = vmatpush2.bf16.msra.mxu0 0
    %2197 = vmatprep.mubr.bf16.mxu0 0
    %2198 = vmatmul.mubr.bf16.gmra.mxu0 %v2084
    %v2199 = vpop.f32.mrf.mxu0
    %v2200 = vadd.f32 0.0, %v2199
    %v2201 = vpop.f32.mrf.mxu0
    %v2202 = vpop.f32.mrf.mxu0
    %v2203 = vadd.f32 0.0, %v2202
    %v2204 = vpop.f32.mrf.mxu0
    %2205 = vmatprep.mubr.bf16.mxu0 0
    %2206 = vmatmul.mubr.bf16.gmra.mxu0 %v2085
    %v2207 = vpop.f32.mrf.mxu0
    %v2208 = vadd.f32 0.0, %v2207
    %v2209 = vpop.f32.mrf.mxu0
    %v2210 = vpop.f32.mrf.mxu0
    %v2211 = vadd.f32 0.0, %v2210
    %v2212 = vpop.f32.mrf.mxu0
    %2213 = vmatprep.mubr.bf16.mxu0 0
    %2214 = vmatmul.mubr.bf16.gmra.mxu0 %v2086
    %v2215 = vpop.f32.mrf.mxu0
    %v2216 = vadd.f32 0.0, %v2215
    %v2217 = vpop.f32.mrf.mxu0
    %v2218 = vpop.f32.mrf.mxu0
    %v2219 = vadd.f32 0.0, %v2218
    %v2220 = vpop.f32.mrf.mxu0
    %2221 = vmatprep.mubr.bf16.mxu0 0
    %2222 = vmatmul.mubr.bf16.gmra.mxu0 %v2087
    %v2223 = vpop.f32.mrf.mxu0
    %v2224 = vadd.f32 0.0, %v2223
    %v2225 = vpop.f32.mrf.mxu0
    %v2226 = vpop.f32.mrf.mxu0
    %v2227 = vadd.f32 0.0, %v2226
    %v2228 = vpop.f32.mrf.mxu0
    %2229 = vmatprep.mubr.bf16.mxu0 0
    %2230 = vmatmul.mubr.bf16.gmra.mxu0 %v2088
    %v2231 = vpop.f32.mrf.mxu0
    %v2232 = vadd.f32 0.0, %v2231
    %v2233 = vpop.f32.mrf.mxu0
    %v2234 = vpop.f32.mrf.mxu0
    %v2235 = vadd.f32 0.0, %v2234
    %v2236 = vpop.f32.mrf.mxu0
    %2237 = vmatprep.mubr.bf16.mxu0 0
    %2238 = vmatmul.mubr.bf16.gmra.mxu0 %v2089
    %v2239 = vpop.f32.mrf.mxu0
    %v2240 = vadd.f32 0.0, %v2239
    %v2241 = vpop.f32.mrf.mxu0
    %v2242 = vpop.f32.mrf.mxu0
    %v2243 = vadd.f32 0.0, %v2242
    %v2244 = vpop.f32.mrf.mxu0
    %2245 = vmatprep.mubr.bf16.mxu0 0
    %2246 = vmatmul.mubr.bf16.gmra.mxu0 %v2090
    %v2247 = vpop.f32.mrf.mxu0
    %v2248 = vadd.f32 0.0, %v2247
    %v2249 = vpop.f32.mrf.mxu0
    %v2250 = vpop.f32.mrf.mxu0
    %v2251 = vadd.f32 0.0, %v2250
    %v2252 = vpop.f32.mrf.mxu0
    %2253 = vmatprep.mubr.bf16.mxu0 0
    %2254 = vmatmul.mubr.bf16.gmra.mxu0 %v2091
    %v2255 = vpop.f32.mrf.mxu0
    %v2256 = vadd.f32 0.0, %v2255
    %v2257 = vpop.f32.mrf.mxu0
    %v2258 = vpop.f32.mrf.mxu0
    %v2259 = vadd.f32 0.0, %v2258
    %v2260 = vpop.f32.mrf.mxu0
    %2261 = vmatprep.mubr.bf16.mxu0 0
    %2262 = vmatmul.mubr.bf16.gmra.mxu0 %v2092
    %v2263 = vpop.f32.mrf.mxu0
    %v2264 = vadd.f32 0.0, %v2263
    %v2265 = vpop.f32.mrf.mxu0
    %v2266 = vpop.f32.mrf.mxu0
    %v2267 = vadd.f32 0.0, %v2266
    %v2268 = vpop.f32.mrf.mxu0
    %2269 = vmatprep.mubr.bf16.mxu0 0
    %2270 = vmatmul.mubr.bf16.gmra.mxu0 %v2093
    %v2271 = vpop.f32.mrf.mxu0
    %v2272 = vadd.f32 0.0, %v2271
    %v2273 = vpop.f32.mrf.mxu0
    %v2274 = vpop.f32.mrf.mxu0
    %v2275 = vadd.f32 0.0, %v2274
    %v2276 = vpop.f32.mrf.mxu0
    %2277 = vmatprep.mubr.bf16.mxu0 0
    %2278 = vmatmul.mubr.bf16.gmra.mxu0 %v2094
    %v2279 = vpop.f32.mrf.mxu0
    %v2280 = vadd.f32 0.0, %v2279
    %v2281 = vpop.f32.mrf.mxu0
    %v2282 = vpop.f32.mrf.mxu0
    %v2283 = vadd.f32 0.0, %v2282
    %v2284 = vpop.f32.mrf.mxu0
    %2285 = vmatprep.mubr.bf16.mxu0 0
    %2286 = vmatmul.mubr.bf16.gmra.mxu0 %v2095
    %v2287 = vpop.f32.mrf.mxu0
    %v2288 = vadd.f32 0.0, %v2287
    %v2289 = vpop.f32.mrf.mxu0
    %v2290 = vpop.f32.mrf.mxu0
    %v2291 = vadd.f32 0.0, %v2290
    %v2292 = vpop.f32.mrf.mxu0
    %2293 = vmatprep.mubr.bf16.mxu0 0
    %2294 = vmatmul.mubr.bf16.gmra.mxu0 %v2096
    %v2295 = vpop.f32.mrf.mxu0
    %v2296 = vadd.f32 0.0, %v2295
    %v2297 = vpop.f32.mrf.mxu0
    %v2298 = vpop.f32.mrf.mxu0
    %v2299 = vadd.f32 0.0, %v2298
    %v2300 = vpop.f32.mrf.mxu0
    %2301 = vmatprep.mubr.bf16.mxu0 0
    %2302 = vmatmul.mubr.bf16.gmra.mxu0 %v2097
    %v2303 = vpop.f32.mrf.mxu0
    %v2304 = vadd.f32 0.0, %v2303
    %v2305 = vpop.f32.mrf.mxu0
    %v2306 = vpop.f32.mrf.mxu0
    %v2307 = vadd.f32 0.0, %v2306
    %v2308 = vpop.f32.mrf.mxu0
    %2309 = vmatprep.mubr.bf16.mxu0 0
    %2310 = vmatmul.mubr.bf16.gmra.mxu0 %v2098
    %v2311 = vpop.f32.mrf.mxu0
    %v2312 = vadd.f32 0.0, %v2311
    %v2313 = vpop.f32.mrf.mxu0
    %v2314 = vpop.f32.mrf.mxu0
    %v2315 = vadd.f32 0.0, %v2314
    %v2316 = vpop.f32.mrf.mxu0
    %2317 = vmatprep.mubr.bf16.mxu0 0
    %2318 = vmatmul.mubr.bf16.gmra.mxu0 %v2099
    %v2319 = vpop.f32.mrf.mxu0
    %v2320 = vadd.f32 0.0, %v2319
    %v2321 = vpop.f32.mrf.mxu0
    %v2322 = vpop.f32.mrf.mxu0
    %v2323 = vadd.f32 0.0, %v2322
    %v2324 = vpop.f32.mrf.mxu0
    %2325 = vdwg.mxu0
    %v2326 = vstv %s1550
    %v2327 = vmul.f32 %v2326, %v2200
    %v2328 = vmul.f32 %v2326, %v2203
    %v2329 = vmul.f32 %v2326, %v2208
    %v2330 = vmul.f32 %v2326, %v2211
    %v2331 = vmul.f32 %v2326, %v2216
    %v2332 = vmul.f32 %v2326, %v2219
    %v2333 = vmul.f32 %v2326, %v2224
    %v2334 = vmul.f32 %v2326, %v2227
    %v2335 = vmul.f32 %v2326, %v2232
    %v2336 = vmul.f32 %v2326, %v2235
    %v2337 = vmul.f32 %v2326, %v2240
    %v2338 = vmul.f32 %v2326, %v2243
    %v2339 = vmul.f32 %v2326, %v2248
    %v2340 = vmul.f32 %v2326, %v2251
    %v2341 = vmul.f32 %v2326, %v2256
    %v2342 = vmul.f32 %v2326, %v2259
    %v2343 = vmul.f32 %v2326, %v2264
    %v2344 = vmul.f32 %v2326, %v2267
    %v2345 = vmul.f32 %v2326, %v2272
    %v2346 = vmul.f32 %v2326, %v2275
    %v2347 = vmul.f32 %v2326, %v2280
    %v2348 = vmul.f32 %v2326, %v2283
    %v2349 = vmul.f32 %v2326, %v2288
    %v2350 = vmul.f32 %v2326, %v2291
    %v2351 = vmul.f32 %v2326, %v2296
    %v2352 = vmul.f32 %v2326, %v2299
    %v2353 = vmul.f32 %v2326, %v2304
    %v2354 = vmul.f32 %v2326, %v2307
    %v2355 = vmul.f32 %v2326, %v2312
    %v2356 = vmul.f32 %v2326, %v2315
    %v2357 = vmul.f32 %v2326, %v2320
    %v2358 = vmul.f32 %v2326, %v2323
    %s2359 = ssub.f32 1.0, %s1550
    %v2360 = vstv %s2359
    %v2361 = vmul.f32 %v2360, %v2052
    %v2362 = vmul.f32 %v2360, %v2053
    %v2363 = vmul.f32 %v2360, %v2054
    %v2364 = vmul.f32 %v2360, %v2055
    %v2365 = vmul.f32 %v2360, %v2056
    %v2366 = vmul.f32 %v2360, %v2057
    %v2367 = vmul.f32 %v2360, %v2058
    %v2368 = vmul.f32 %v2360, %v2059
    %v2369 = vmul.f32 %v2360, %v2060
    %v2370 = vmul.f32 %v2360, %v2061
    %v2371 = vmul.f32 %v2360, %v2062
    %v2372 = vmul.f32 %v2360, %v2063
    %v2373 = vmul.f32 %v2360, %v2064
    %v2374 = vmul.f32 %v2360, %v2065
    %v2375 = vmul.f32 %v2360, %v2066
    %v2376 = vmul.f32 %v2360, %v2067
    %v2377 = vmul.f32 %v2360, %v2068
    %v2378 = vmul.f32 %v2360, %v2069
    %v2379 = vmul.f32 %v2360, %v2070
    %v2380 = vmul.f32 %v2360, %v2071
    %v2381 = vmul.f32 %v2360, %v2072
    %v2382 = vmul.f32 %v2360, %v2073
    %v2383 = vmul.f32 %v2360, %v2074
    %v2384 = vmul.f32 %v2360, %v2075
    %v2385 = vmul.f32 %v2360, %v2076
    %v2386 = vmul.f32 %v2360, %v2077
    %v2387 = vmul.f32 %v2360, %v2078
    %v2388 = vmul.f32 %v2360, %v2079
    %v2389 = vmul.f32 %v2360, %v2080
    %v2390 = vmul.f32 %v2360, %v2081
    %v2391 = vmul.f32 %v2360, %v2082
    %v2392 = vmul.f32 %v2360, %v2083
    %v2393 = vadd.f32 %v2327, %v2361
    %v2394 = vadd.f32 %v2328, %v2362
    %v2395 = vadd.f32 %v2329, %v2363
    %v2396 = vadd.f32 %v2330, %v2364
    %v2397 = vadd.f32 %v2331, %v2365
    %v2398 = vadd.f32 %v2332, %v2366
    %v2399 = vadd.f32 %v2333, %v2367
    %v2400 = vadd.f32 %v2334, %v2368
    %v2401 = vadd.f32 %v2335, %v2369
    %v2402 = vadd.f32 %v2336, %v2370
    %v2403 = vadd.f32 %v2337, %v2371
    %v2404 = vadd.f32 %v2338, %v2372
    %v2405 = vadd.f32 %v2339, %v2373
    %v2406 = vadd.f32 %v2340, %v2374
    %v2407 = vadd.f32 %v2341, %v2375
    %v2408 = vadd.f32 %v2342, %v2376
    %v2409 = vadd.f32 %v2343, %v2377
    %v2410 = vadd.f32 %v2344, %v2378
    %v2411 = vadd.f32 %v2345, %v2379
    %v2412 = vadd.f32 %v2346, %v2380
    %v2413 = vadd.f32 %v2347, %v2381
    %v2414 = vadd.f32 %v2348, %v2382
    %v2415 = vadd.f32 %v2349, %v2383
    %v2416 = vadd.f32 %v2350, %v2384
    %v2417 = vadd.f32 %v2351, %v2385
    %v2418 = vadd.f32 %v2352, %v2386
    %v2419 = vadd.f32 %v2353, %v2387
    %v2420 = vadd.f32 %v2354, %v2388
    %v2421 = vadd.f32 %v2355, %v2389
    %v2422 = vadd.f32 %v2356, %v2390
    %v2423 = vadd.f32 %v2357, %v2391
    %v2424 = vadd.f32 %v2358, %v2392
    %v2425 = vadd.f32 %v2393, %v1552
    %v2426 = vadd.f32 %v2394, %v1553
    %v2427 = vadd.f32 %v2395, %v1554
    %v2428 = vadd.f32 %v2396, %v1555
    %v2429 = vadd.f32 %v2397, %v1556
    %v2430 = vadd.f32 %v2398, %v1557
    %v2431 = vadd.f32 %v2399, %v1558
    %v2432 = vadd.f32 %v2400, %v1559
    %v2433 = vadd.f32 %v2401, %v1560
    %v2434 = vadd.f32 %v2402, %v1561
    %v2435 = vadd.f32 %v2403, %v1562
    %v2436 = vadd.f32 %v2404, %v1563
    %v2437 = vadd.f32 %v2405, %v1564
    %v2438 = vadd.f32 %v2406, %v1565
    %v2439 = vadd.f32 %v2407, %v1566
    %v2440 = vadd.f32 %v2408, %v1567
    %v2441 = vadd.f32 %v2409, %v1568
    %v2442 = vadd.f32 %v2410, %v1569
    %v2443 = vadd.f32 %v2411, %v1570
    %v2444 = vadd.f32 %v2412, %v1571
    %v2445 = vadd.f32 %v2413, %v1572
    %v2446 = vadd.f32 %v2414, %v1573
    %v2447 = vadd.f32 %v2415, %v1574
    %v2448 = vadd.f32 %v2416, %v1575
    %v2449 = vadd.f32 %v2417, %v1576
    %v2450 = vadd.f32 %v2418, %v1577
    %v2451 = vadd.f32 %v2419, %v1578
    %v2452 = vadd.f32 %v2420, %v1579
    %v2453 = vadd.f32 %v2421, %v1580
    %v2454 = vadd.f32 %v2422, %v1581
    %v2455 = vadd.f32 %v2423, %v1582
    %v2456 = vadd.f32 %v2424, %v1583
    %v2457 = vmax.f32 %v2425, 0.0
    %v2458 = vmax.f32 %v2426, 0.0
    %v2459 = vmax.f32 %v2427, 0.0
    %v2460 = vmax.f32 %v2428, 0.0
    %v2461 = vmax.f32 %v2429, 0.0
    %v2462 = vmax.f32 %v2430, 0.0
    %v2463 = vmax.f32 %v2431, 0.0
    %v2464 = vmax.f32 %v2432, 0.0
    %v2465 = vmax.f32 %v2433, 0.0
    %v2466 = vmax.f32 %v2434, 0.0
    %v2467 = vmax.f32 %v2435, 0.0
    %v2468 = vmax.f32 %v2436, 0.0
    %v2469 = vmax.f32 %v2437, 0.0
    %v2470 = vmax.f32 %v2438, 0.0
    %v2471 = vmax.f32 %v2439, 0.0
    %v2472 = vmax.f32 %v2440, 0.0
    %v2473 = vmax.f32 %v2441, 0.0
    %v2474 = vmax.f32 %v2442, 0.0
    %v2475 = vmax.f32 %v2443, 0.0
    %v2476 = vmax.f32 %v2444, 0.0
    %v2477 = vmax.f32 %v2445, 0.0
    %v2478 = vmax.f32 %v2446, 0.0
    %v2479 = vmax.f32 %v2447, 0.0
    %v2480 = vmax.f32 %v2448, 0.0
    %v2481 = vmax.f32 %v2449, 0.0
    %v2482 = vmax.f32 %v2450, 0.0
    %v2483 = vmax.f32 %v2451, 0.0
    %v2484 = vmax.f32 %v2452, 0.0
    %v2485 = vmax.f32 %v2453, 0.0
    %v2486 = vmax.f32 %v2454, 0.0
    %v2487 = vmax.f32 %v2455, 0.0
    %v2488 = vmax.f32 %v2456, 0.0
    %2489 = vst [vmem:[#allocation2] sm:$0xff] %v2457
    %2490 = vst [vmem:[#allocation2 + $0x8] sm:$0xff] %v2458
    %2491 = vst [vmem:[#allocation2 + $0x10] sm:$0xff] %v2459
    %2492 = vst [vmem:[#allocation2 + $0x18] sm:$0xff] %v2460
    %2493 = vst [vmem:[#allocation2 + $0x20] sm:$0xff] %v2461
    %2494 = vst [vmem:[#allocation2 + $0x28] sm:$0xff] %v2462
    %2495 = vst [vmem:[#allocation2 + $0x30] sm:$0xff] %v2463
    %2496 = vst [vmem:[#allocation2 + $0x38] sm:$0xff] %v2464
    %2497 = vst [vmem:[#allocation2 + $0x40] sm:$0xff] %v2465
    %2498 = vst [vmem:[#allocation2 + $0x48] sm:$0xff] %v2466
    %2499 = vst [vmem:[#allocation2 + $0x50] sm:$0xff] %v2467
    %2500 = vst [vmem:[#allocation2 + $0x58] sm:$0xff] %v2468
    %2501 = vst [vmem:[#allocation2 + $0x60] sm:$0xff] %v2469
    %2502 = vst [vmem:[#allocation2 + $0x68] sm:$0xff] %v2470
    %2503 = vst [vmem:[#allocation2 + $0x70] sm:$0xff] %v2471
    %2504 = vst [vmem:[#allocation2 + $0x78] sm:$0xff] %v2472
    %2505 = vst [vmem:[#allocation2 + $0x80] sm:$0xff] %v2473
    %2506 = vst [vmem:[#allocation2 + $0x88] sm:$0xff] %v2474
    %2507 = vst [vmem:[#allocation2 + $0x90] sm:$0xff] %v2475
    %2508 = vst [vmem:[#allocation2 + $0x98] sm:$0xff] %v2476
    %2509 = vst [vmem:[#allocation2 + $0xa0] sm:$0xff] %v2477
    %2510 = vst [vmem:[#allocation2 + $0xa8] sm:$0xff] %v2478
    %2511 = vst [vmem:[#allocation2 + $0xb0] sm:$0xff] %v2479
    %2512 = vst [vmem:[#allocation2 + $0xb8] sm:$0xff] %v2480
    %2513 = vst [vmem:[#allocation2 + $0xc0] sm:$0xff] %v2481
    %2514 = vst [vmem:[#allocation2 + $0xc8] sm:$0xff] %v2482
    %2515 = vst [vmem:[#allocation2 + $0xd0] sm:$0xff] %v2483
    %2516 = vst [vmem:[#allocation2 + $0xd8] sm:$0xff] %v2484
    %2517 = vst [vmem:[#allocation2 + $0xe0] sm:$0xff] %v2485
    %2518 = vst [vmem:[#allocation2 + $0xe8] sm:$0xff] %v2486
    %2519 = vst [vmem:[#allocation2 + $0xf0] sm:$0xff] %v2487
    %2520 = vst [vmem:[#allocation2 + $0xf8] sm:$0xff] %v2488
    %s2521 = sld [smem:[#allocation4 + $0x4]]
    %s2522 = sld [smem:[#allocation4 + $0x5]]
    %v2523 = vld [vmem:[#allocation2] sm:$0xff]
    %v2524 = vld [vmem:[#allocation2 + $0x8] sm:$0xff]
    %v2525 = vld [vmem:[#allocation2 + $0x10] sm:$0xff]
    %v2526 = vld [vmem:[#allocation2 + $0x18] sm:$0xff]
    %v2527 = vld [vmem:[#allocation2 + $0x20] sm:$0xff]
    %v2528 = vld [vmem:[#allocation2 + $0x28] sm:$0xff]
    %v2529 = vld [vmem:[#allocation2 + $0x30] sm:$0xff]
    %v2530 = vld [vmem:[#allocation2 + $0x38] sm:$0xff]
    %v2531 = vld [vmem:[#allocation2 + $0x40] sm:$0xff]
    %v2532 = vld [vmem:[#allocation2 + $0x48] sm:$0xff]
    %v2533 = vld [vmem:[#allocation2 + $0x50] sm:$0xff]
    %v2534 = vld [vmem:[#allocation2 + $0x58] sm:$0xff]
    %v2535 = vld [vmem:[#allocation2 + $0x60] sm:$0xff]
    %v2536 = vld [vmem:[#allocation2 + $0x68] sm:$0xff]
    %v2537 = vld [vmem:[#allocation2 + $0x70] sm:$0xff]
    %v2538 = vld [vmem:[#allocation2 + $0x78] sm:$0xff]
    %v2539 = vld [vmem:[#allocation2 + $0x80] sm:$0xff]
    %v2540 = vld [vmem:[#allocation2 + $0x88] sm:$0xff]
    %v2541 = vld [vmem:[#allocation2 + $0x90] sm:$0xff]
    %v2542 = vld [vmem:[#allocation2 + $0x98] sm:$0xff]
    %v2543 = vld [vmem:[#allocation2 + $0xa0] sm:$0xff]
    %v2544 = vld [vmem:[#allocation2 + $0xa8] sm:$0xff]
    %v2545 = vld [vmem:[#allocation2 + $0xb0] sm:$0xff]
    %v2546 = vld [vmem:[#allocation2 + $0xb8] sm:$0xff]
    %v2547 = vld [vmem:[#allocation2 + $0xc0] sm:$0xff]
    %v2548 = vld [vmem:[#allocation2 + $0xc8] sm:$0xff]
    %v2549 = vld [vmem:[#allocation2 + $0xd0] sm:$0xff]
    %v2550 = vld [vmem:[#allocation2 + $0xd8] sm:$0xff]
    %v2551 = vld [vmem:[#allocation2 + $0xe0] sm:$0xff]
    %v2552 = vld [vmem:[#allocation2 + $0xe8] sm:$0xff]
    %v2553 = vld [vmem:[#allocation2 + $0xf0] sm:$0xff]
    %v2554 = vld [vmem:[#allocation2 + $0xf8] sm:$0xff]
    %v2555 = vld [vmem:[#allocation9] sm:$0xff]
    %v2556 = vld [vmem:[#allocation9 + $0x8] sm:$0xff]
    %v2557 = vld [vmem:[#allocation9 + $0x10] sm:$0xff]
    %v2558 = vld [vmem:[#allocation9 + $0x18] sm:$0xff]
    %v2559 = vld [vmem:[#allocation9 + $0x20] sm:$0xff]
    %v2560 = vld [vmem:[#allocation9 + $0x28] sm:$0xff]
    %v2561 = vld [vmem:[#allocation9 + $0x30] sm:$0xff]
    %v2562 = vld [vmem:[#allocation9 + $0x38] sm:$0xff]
    %v2563 = vld [vmem:[#allocation9 + $0x40] sm:$0xff]
    %v2564 = vld [vmem:[#allocation9 + $0x48] sm:$0xff]
    %v2565 = vld [vmem:[#allocation9 + $0x50] sm:$0xff]
    %v2566 = vld [vmem:[#allocation9 + $0x58] sm:$0xff]
    %v2567 = vld [vmem:[#allocation9 + $0x60] sm:$0xff]
    %v2568 = vld [vmem:[#allocation9 + $0x68] sm:$0xff]
    %v2569 = vld [vmem:[#allocation9 + $0x70] sm:$0xff]
    %v2570 = vld [vmem:[#allocation9 + $0x78] sm:$0xff]
    %v2571 = vld [vmem:[#allocation9 + $0x80] sm:$0xff]
    %v2572 = vld [vmem:[#allocation9 + $0x88] sm:$0xff]
    %v2573 = vld [vmem:[#allocation9 + $0x90] sm:$0xff]
    %v2574 = vld [vmem:[#allocation9 + $0x98] sm:$0xff]
    %v2575 = vld [vmem:[#allocation9 + $0xa0] sm:$0xff]
    %v2576 = vld [vmem:[#allocation9 + $0xa8] sm:$0xff]
    %v2577 = vld [vmem:[#allocation9 + $0xb0] sm:$0xff]
    %v2578 = vld [vmem:[#allocation9 + $0xb8] sm:$0xff]
    %v2579 = vld [vmem:[#allocation9 + $0xc0] sm:$0xff]
    %v2580 = vld [vmem:[#allocation9 + $0xc8] sm:$0xff]
    %v2581 = vld [vmem:[#allocation9 + $0xd0] sm:$0xff]
    %v2582 = vld [vmem:[#allocation9 + $0xd8] sm:$0xff]
    %v2583 = vld [vmem:[#allocation9 + $0xe0] sm:$0xff]
    %v2584 = vld [vmem:[#allocation9 + $0xe8] sm:$0xff]
    %v2585 = vld [vmem:[#allocation9 + $0xf0] sm:$0xff]
    %v2586 = vld [vmem:[#allocation9 + $0xf8] sm:$0xff]
    %v2587 = vpack.c.bf16 %v2524, %v2523
    %v2588 = vpack.c.bf16 %v2526, %v2525
    %v2589 = vpack.c.bf16 %v2528, %v2527
    %v2590 = vpack.c.bf16 %v2530, %v2529
    %v2591 = vpack.c.bf16 %v2532, %v2531
    %v2592 = vpack.c.bf16 %v2534, %v2533
    %v2593 = vpack.c.bf16 %v2536, %v2535
    %v2594 = vpack.c.bf16 %v2538, %v2537
    %v2595 = vpack.c.bf16 %v2540, %v2539
    %v2596 = vpack.c.bf16 %v2542, %v2541
    %v2597 = vpack.c.bf16 %v2544, %v2543
    %v2598 = vpack.c.bf16 %v2546, %v2545
    %v2599 = vpack.c.bf16 %v2548, %v2547
    %v2600 = vpack.c.bf16 %v2550, %v2549
    %v2601 = vpack.c.bf16 %v2552, %v2551
    %v2602 = vpack.c.bf16 %v2554, %v2553
    %v2635 = vunpack.c.l.b16 %v2555
    %v2636 = vunpack.c.h.b16 %v2555
    %v2637 = vunpack.c.l.b16 %v2556
    %v2638 = vunpack.c.h.b16 %v2556
    %v2639 = vunpack.c.l.b16 %v2557
    %v2640 = vunpack.c.h.b16 %v2557
    %v2641 = vunpack.c.l.b16 %v2558
    %v2642 = vunpack.c.h.b16 %v2558
    %v2643 = vunpack.c.l.b16 %v2559
    %v2644 = vunpack.c.h.b16 %v2559
    %v2645 = vunpack.c.l.b16 %v2560
    %v2646 = vunpack.c.h.b16 %v2560
    %v2647 = vunpack.c.l.b16 %v2561
    %v2648 = vunpack.c.h.b16 %v2561
    %v2649 = vunpack.c.l.b16 %v2562
    %v2650 = vunpack.c.h.b16 %v2562
    %v2651 = vunpack.c.l.b16 %v2563
    %v2652 = vunpack.c.h.b16 %v2563
    %v2653 = vunpack.c.l.b16 %v2564
    %v2654 = vunpack.c.h.b16 %v2564
    %v2655 = vunpack.c.l.b16 %v2565
    %v2656 = vunpack.c.h.b16 %v2565
    %v2657 = vunpack.c.l.b16 %v2566
    %v2658 = vunpack.c.h.b16 %v2566
    %v2659 = vunpack.c.l.b16 %v2567
    %v2660 = vunpack.c.h.b16 %v2567
    %v2661 = vunpack.c.l.b16 %v2568
    %v2662 = vunpack.c.h.b16 %v2568
    %v2663 = vunpack.c.l.b16 %v2569
    %v2664 = vunpack.c.h.b16 %v2569
    %v2665 = vunpack.c.l.b16 %v2570
    %v2666 = vunpack.c.h.b16 %v2570
    %v2667 = vunpack.c.l.b16 %v2571
    %v2668 = vunpack.c.h.b16 %v2571
    %v2669 = vunpack.c.l.b16 %v2572
    %v2670 = vunpack.c.h.b16 %v2572
    %v2671 = vunpack.c.l.b16 %v2573
    %v2672 = vunpack.c.h.b16 %v2573
    %v2673 = vunpack.c.l.b16 %v2574
    %v2674 = vunpack.c.h.b16 %v2574
    %v2675 = vunpack.c.l.b16 %v2575
    %v2676 = vunpack.c.h.b16 %v2575
    %v2677 = vunpack.c.l.b16 %v2576
    %v2678 = vunpack.c.h.b16 %v2576
    %v2679 = vunpack.c.l.b16 %v2577
    %v2680 = vunpack.c.h.b16 %v2577
    %v2681 = vunpack.c.l.b16 %v2578
    %v2682 = vunpack.c.h.b16 %v2578
    %v2683 = vunpack.c.l.b16 %v2579
    %v2684 = vunpack.c.h.b16 %v2579
    %v2685 = vunpack.c.l.b16 %v2580
    %v2686 = vunpack.c.h.b16 %v2580
    %v2687 = vunpack.c.l.b16 %v2581
    %v2688 = vunpack.c.h.b16 %v2581
    %v2689 = vunpack.c.l.b16 %v2582
    %v2690 = vunpack.c.h.b16 %v2582
    %v2691 = vunpack.c.l.b16 %v2583
    %v2692 = vunpack.c.h.b16 %v2583
    %v2693 = vunpack.c.l.b16 %v2584
    %v2694 = vunpack.c.h.b16 %v2584
    %v2695 = vunpack.c.l.b16 %v2585
    %v2696 = vunpack.c.h.b16 %v2585
    %v2697 = vunpack.c.l.b16 %v2586
    %v2698 = vunpack.c.h.b16 %v2586
    %v2699 = vpack.c.b16 %v2637, %v2635
    %v2700 = vpack.c.b16 %v2638, %v2636
    %v2701 = vpack.c.b16 %v2641, %v2639
    %v2702 = vpack.c.b16 %v2642, %v2640
    %v2703 = vpack.c.b16 %v2645, %v2643
    %v2704 = vpack.c.b16 %v2646, %v2644
    %v2705 = vpack.c.b16 %v2649, %v2647
    %v2706 = vpack.c.b16 %v2650, %v2648
    %v2707 = vpack.c.b16 %v2653, %v2651
    %v2708 = vpack.c.b16 %v2654, %v2652
    %v2709 = vpack.c.b16 %v2657, %v2655
    %v2710 = vpack.c.b16 %v2658, %v2656
    %v2711 = vpack.c.b16 %v2661, %v2659
    %v2712 = vpack.c.b16 %v2662, %v2660
    %v2713 = vpack.c.b16 %v2665, %v2663
    %v2714 = vpack.c.b16 %v2666, %v2664
    %v2715 = vpack.c.b16 %v2669, %v2667
    %v2716 = vpack.c.b16 %v2670, %v2668
    %v2717 = vpack.c.b16 %v2673, %v2671
    %v2718 = vpack.c.b16 %v2674, %v2672
    %v2719 = vpack.c.b16 %v2677, %v2675
    %v2720 = vpack.c.b16 %v2678, %v2676
    %v2721 = vpack.c.b16 %v2681, %v2679
    %v2722 = vpack.c.b16 %v2682, %v2680
    %v2723 = vpack.c.b16 %v2685, %v2683
    %v2724 = vpack.c.b16 %v2686, %v2684
    %v2725 = vpack.c.b16 %v2689, %v2687
    %v2726 = vpack.c.b16 %v2690, %v2688
    %v2727 = vpack.c.b16 %v2693, %v2691
    %v2728 = vpack.c.b16 %v2694, %v2692
    %v2729 = vpack.c.b16 %v2697, %v2695
    %v2730 = vpack.c.b16 %v2698, %v2696
    %2763 = vmatprep.subr.bf16.mxu0 0
    %2764 = vmatpush1.bf16.msra.mxu0 %v2594
    %2765 = vmatprep.subr.bf16.mxu0 0
    %2766 = vmatpush1.bf16.msra.mxu0 %v2593
    %2767 = vmatprep.subr.bf16.mxu0 0
    %2768 = vmatpush1.bf16.msra.mxu0 %v2592
    %2769 = vmatprep.subr.bf16.mxu0 0
    %2770 = vmatpush1.bf16.msra.mxu0 %v2591
    %2771 = vmatprep.subr.bf16.mxu0 0
    %2772 = vmatpush1.bf16.msra.mxu0 %v2590
    %2773 = vmatprep.subr.bf16.mxu0 0
    %2774 = vmatpush1.bf16.msra.mxu0 %v2589
    %2775 = vmatprep.subr.bf16.mxu0 0
    %2776 = vmatpush1.bf16.msra.mxu0 %v2588
    %2777 = vmatprep.subr.bf16.mxu0 0
    %2778 = vmatpush1.bf16.msra.mxu0 %v2587
    %2779 = vmatprep.subr.bf16.mxu0 0
    %2780 = vmatpush2.bf16.msra.mxu0 %v2602
    %2781 = vmatprep.subr.bf16.mxu0 0
    %2782 = vmatpush2.bf16.msra.mxu0 %v2601
    %2783 = vmatprep.subr.bf16.mxu0 0
    %2784 = vmatpush2.bf16.msra.mxu0 %v2600
    %2785 = vmatprep.subr.bf16.mxu0 0
    %2786 = vmatpush2.bf16.msra.mxu0 %v2599
    %2787 = vmatprep.subr.bf16.mxu0 0
    %2788 = vmatpush2.bf16.msra.mxu0 %v2598
    %2789 = vmatprep.subr.bf16.mxu0 0
    %2790 = vmatpush2.bf16.msra.mxu0 %v2597
    %2791 = vmatprep.subr.bf16.mxu0 0
    %2792 = vmatpush2.bf16.msra.mxu0 %v2596
    %2793 = vmatprep.subr.bf16.mxu0 0
    %2794 = vmatpush2.bf16.msra.mxu0 %v2595
    %2795 = vmatprep.mubr.bf16.mxu0 %v2700
    %2796 = vmatmul.mubr.bf16.gmra.mxu0 %v2699
    %v2797 = vpop.f32.mrf.mxu0
    %v2798 = vadd.f32 0.0, %v2797
    %v2799 = vpop.f32.mrf.mxu0
    %v2800 = vpop.f32.mrf.mxu0
    %v2801 = vadd.f32 0.0, %v2800
    %v2802 = vpop.f32.mrf.mxu0
    %2803 = vmatprep.mubr.bf16.mxu0 %v2702
    %2804 = vmatmul.mubr.bf16.gmra.mxu0 %v2701
    %v2805 = vpop.f32.mrf.mxu0
    %v2806 = vadd.f32 0.0, %v2805
    %v2807 = vpop.f32.mrf.mxu0
    %v2808 = vpop.f32.mrf.mxu0
    %v2809 = vadd.f32 0.0, %v2808
    %v2810 = vpop.f32.mrf.mxu0
    %2811 = vmatprep.mubr.bf16.mxu0 %v2704
    %2812 = vmatmul.mubr.bf16.gmra.mxu0 %v2703
    %v2813 = vpop.f32.mrf.mxu0
    %v2814 = vadd.f32 0.0, %v2813
    %v2815 = vpop.f32.mrf.mxu0
    %v2816 = vpop.f32.mrf.mxu0
    %v2817 = vadd.f32 0.0, %v2816
    %v2818 = vpop.f32.mrf.mxu0
    %2819 = vmatprep.mubr.bf16.mxu0 %v2706
    %2820 = vmatmul.mubr.bf16.gmra.mxu0 %v2705
    %v2821 = vpop.f32.mrf.mxu0
    %v2822 = vadd.f32 0.0, %v2821
    %v2823 = vpop.f32.mrf.mxu0
    %v2824 = vpop.f32.mrf.mxu0
    %v2825 = vadd.f32 0.0, %v2824
    %v2826 = vpop.f32.mrf.mxu0
    %2827 = vmatprep.mubr.bf16.mxu0 %v2708
    %2828 = vmatmul.mubr.bf16.gmra.mxu0 %v2707
    %v2829 = vpop.f32.mrf.mxu0
    %v2830 = vadd.f32 0.0, %v2829
    %v2831 = vpop.f32.mrf.mxu0
    %v2832 = vpop.f32.mrf.mxu0
    %v2833 = vadd.f32 0.0, %v2832
    %v2834 = vpop.f32.mrf.mxu0
    %2835 = vmatprep.mubr.bf16.mxu0 %v2710
    %2836 = vmatmul.mubr.bf16.gmra.mxu0 %v2709
    %v2837 = vpop.f32.mrf.mxu0
    %v2838 = vadd.f32 0.0, %v2837
    %v2839 = vpop.f32.mrf.mxu0
    %v2840 = vpop.f32.mrf.mxu0
    %v2841 = vadd.f32 0.0, %v2840
    %v2842 = vpop.f32.mrf.mxu0
    %2843 = vmatprep.mubr.bf16.mxu0 %v2712
    %2844 = vmatmul.mubr.bf16.gmra.mxu0 %v2711
    %v2845 = vpop.f32.mrf.mxu0
    %v2846 = vadd.f32 0.0, %v2845
    %v2847 = vpop.f32.mrf.mxu0
    %v2848 = vpop.f32.mrf.mxu0
    %v2849 = vadd.f32 0.0, %v2848
    %v2850 = vpop.f32.mrf.mxu0
    %2851 = vmatprep.mubr.bf16.mxu0 %v2714
    %2852 = vmatmul.mubr.bf16.gmra.mxu0 %v2713
    %v2853 = vpop.f32.mrf.mxu0
    %v2854 = vadd.f32 0.0, %v2853
    %v2855 = vpop.f32.mrf.mxu0
    %v2856 = vpop.f32.mrf.mxu0
    %v2857 = vadd.f32 0.0, %v2856
    %v2858 = vpop.f32.mrf.mxu0
    %2859 = vmatprep.mubr.bf16.mxu0 %v2716
    %2860 = vmatmul.mubr.bf16.gmra.mxu0 %v2715
    %v2861 = vpop.f32.mrf.mxu0
    %v2862 = vadd.f32 0.0, %v2861
    %v2863 = vpop.f32.mrf.mxu0
    %v2864 = vpop.f32.mrf.mxu0
    %v2865 = vadd.f32 0.0, %v2864
    %v2866 = vpop.f32.mrf.mxu0
    %2867 = vmatprep.mubr.bf16.mxu0 %v2718
    %2868 = vmatmul.mubr.bf16.gmra.mxu0 %v2717
    %v2869 = vpop.f32.mrf.mxu0
    %v2870 = vadd.f32 0.0, %v2869
    %v2871 = vpop.f32.mrf.mxu0
    %v2872 = vpop.f32.mrf.mxu0
    %v2873 = vadd.f32 0.0, %v2872
    %v2874 = vpop.f32.mrf.mxu0
    %2875 = vmatprep.mubr.bf16.mxu0 %v2720
    %2876 = vmatmul.mubr.bf16.gmra.mxu0 %v2719
    %v2877 = vpop.f32.mrf.mxu0
    %v2878 = vadd.f32 0.0, %v2877
    %v2879 = vpop.f32.mrf.mxu0
    %v2880 = vpop.f32.mrf.mxu0
    %v2881 = vadd.f32 0.0, %v2880
    %v2882 = vpop.f32.mrf.mxu0
    %2883 = vmatprep.mubr.bf16.mxu0 %v2722
    %2884 = vmatmul.mubr.bf16.gmra.mxu0 %v2721
    %v2885 = vpop.f32.mrf.mxu0
    %v2886 = vadd.f32 0.0, %v2885
    %v2887 = vpop.f32.mrf.mxu0
    %v2888 = vpop.f32.mrf.mxu0
    %v2889 = vadd.f32 0.0, %v2888
    %v2890 = vpop.f32.mrf.mxu0
    %2891 = vmatprep.mubr.bf16.mxu0 %v2724
    %2892 = vmatmul.mubr.bf16.gmra.mxu0 %v2723
    %v2893 = vpop.f32.mrf.mxu0
    %v2894 = vadd.f32 0.0, %v2893
    %v2895 = vpop.f32.mrf.mxu0
    %v2896 = vpop.f32.mrf.mxu0
    %v2897 = vadd.f32 0.0, %v2896
    %v2898 = vpop.f32.mrf.mxu0
    %2899 = vmatprep.mubr.bf16.mxu0 %v2726
    %2900 = vmatmul.mubr.bf16.gmra.mxu0 %v2725
    %v2901 = vpop.f32.mrf.mxu0
    %v2902 = vadd.f32 0.0, %v2901
    %v2903 = vpop.f32.mrf.mxu0
    %v2904 = vpop.f32.mrf.mxu0
    %v2905 = vadd.f32 0.0, %v2904
    %v2906 = vpop.f32.mrf.mxu0
    %2907 = vmatprep.mubr.bf16.mxu0 %v2728
    %2908 = vmatmul.mubr.bf16.gmra.mxu0 %v2727
    %v2909 = vpop.f32.mrf.mxu0
    %v2910 = vadd.f32 0.0, %v2909
    %v2911 = vpop.f32.mrf.mxu0
    %v2912 = vpop.f32.mrf.mxu0
    %v2913 = vadd.f32 0.0, %v2912
    %v2914 = vpop.f32.mrf.mxu0
    %2915 = vmatprep.mubr.bf16.mxu0 %v2730
    %2916 = vmatmul.mubr.bf16.gmra.mxu0 %v2729
    %v2917 = vpop.f32.mrf.mxu0
    %v2918 = vadd.f32 0.0, %v2917
    %v2919 = vpop.f32.mrf.mxu0
    %v2920 = vpop.f32.mrf.mxu0
    %v2921 = vadd.f32 0.0, %v2920
    %v2922 = vpop.f32.mrf.mxu0
    %2923 = vdwg.mxu0
    %s2924 = ssub.f32 1.0, %s2522
    %v2925 = vstv %s2924
    %v2926 = vmul.f32 %v2925, %v2798
    %v2927 = vmul.f32 %v2925, %v2801
    %v2928 = vmul.f32 %v2925, %v2806
    %v2929 = vmul.f32 %v2925, %v2809
    %v2930 = vmul.f32 %v2925, %v2814
    %v2931 = vmul.f32 %v2925, %v2817
    %v2932 = vmul.f32 %v2925, %v2822
    %v2933 = vmul.f32 %v2925, %v2825
    %v2934 = vmul.f32 %v2925, %v2830
    %v2935 = vmul.f32 %v2925, %v2833
    %v2936 = vmul.f32 %v2925, %v2838
    %v2937 = vmul.f32 %v2925, %v2841
    %v2938 = vmul.f32 %v2925, %v2846
    %v2939 = vmul.f32 %v2925, %v2849
    %v2940 = vmul.f32 %v2925, %v2854
    %v2941 = vmul.f32 %v2925, %v2857
    %v2942 = vmul.f32 %v2925, %v2862
    %v2943 = vmul.f32 %v2925, %v2865
    %v2944 = vmul.f32 %v2925, %v2870
    %v2945 = vmul.f32 %v2925, %v2873
    %v2946 = vmul.f32 %v2925, %v2878
    %v2947 = vmul.f32 %v2925, %v2881
    %v2948 = vmul.f32 %v2925, %v2886
    %v2949 = vmul.f32 %v2925, %v2889
    %v2950 = vmul.f32 %v2925, %v2894
    %v2951 = vmul.f32 %v2925, %v2897
    %v2952 = vmul.f32 %v2925, %v2902
    %v2953 = vmul.f32 %v2925, %v2905
    %v2954 = vmul.f32 %v2925, %v2910
    %v2955 = vmul.f32 %v2925, %v2913
    %v2956 = vmul.f32 %v2925, %v2918
    %v2957 = vmul.f32 %v2925, %v2921
    %v2958 = vld [vmem:[#allocation3] sm:$0xff]
    %v2959 = vld [vmem:[#allocation3 + $0x8] sm:$0xff]
    %v2960 = vld [vmem:[#allocation3 + $0x10] sm:$0xff]
    %v2961 = vld [vmem:[#allocation3 + $0x18] sm:$0xff]
    %v2962 = vld [vmem:[#allocation3 + $0x20] sm:$0xff]
    %v2963 = vld [vmem:[#allocation3 + $0x28] sm:$0xff]
    %v2964 = vld [vmem:[#allocation3 + $0x30] sm:$0xff]
    %v2965 = vld [vmem:[#allocation3 + $0x38] sm:$0xff]
    %v2966 = vld [vmem:[#allocation3 + $0x40] sm:$0xff]
    %v2967 = vld [vmem:[#allocation3 + $0x48] sm:$0xff]
    %v2968 = vld [vmem:[#allocation3 + $0x50] sm:$0xff]
    %v2969 = vld [vmem:[#allocation3 + $0x58] sm:$0xff]
    %v2970 = vld [vmem:[#allocation3 + $0x60] sm:$0xff]
    %v2971 = vld [vmem:[#allocation3 + $0x68] sm:$0xff]
    %v2972 = vld [vmem:[#allocation3 + $0x70] sm:$0xff]
    %v2973 = vld [vmem:[#allocation3 + $0x78] sm:$0xff]
    %v2974 = vld [vmem:[#allocation3 + $0x80] sm:$0xff]
    %v2975 = vld [vmem:[#allocation3 + $0x88] sm:$0xff]
    %v2976 = vld [vmem:[#allocation3 + $0x90] sm:$0xff]
    %v2977 = vld [vmem:[#allocation3 + $0x98] sm:$0xff]
    %v2978 = vld [vmem:[#allocation3 + $0xa0] sm:$0xff]
    %v2979 = vld [vmem:[#allocation3 + $0xa8] sm:$0xff]
    %v2980 = vld [vmem:[#allocation3 + $0xb0] sm:$0xff]
    %v2981 = vld [vmem:[#allocation3 + $0xb8] sm:$0xff]
    %v2982 = vld [vmem:[#allocation3 + $0xc0] sm:$0xff]
    %v2983 = vld [vmem:[#allocation3 + $0xc8] sm:$0xff]
    %v2984 = vld [vmem:[#allocation3 + $0xd0] sm:$0xff]
    %v2985 = vld [vmem:[#allocation3 + $0xd8] sm:$0xff]
    %v2986 = vld [vmem:[#allocation3 + $0xe0] sm:$0xff]
    %v2987 = vld [vmem:[#allocation3 + $0xe8] sm:$0xff]
    %v2988 = vld [vmem:[#allocation3 + $0xf0] sm:$0xff]
    %v2989 = vld [vmem:[#allocation3 + $0xf8] sm:$0xff]
    %v2990 = vstv %s2522
    %v2991 = vmul.f32 %v2990, %v2958
    %v2992 = vmul.f32 %v2990, %v2959
    %v2993 = vmul.f32 %v2990, %v2960
    %v2994 = vmul.f32 %v2990, %v2961
    %v2995 = vmul.f32 %v2990, %v2962
    %v2996 = vmul.f32 %v2990, %v2963
    %v2997 = vmul.f32 %v2990, %v2964
    %v2998 = vmul.f32 %v2990, %v2965
    %v2999 = vmul.f32 %v2990, %v2966
    %v3000 = vmul.f32 %v2990, %v2967
    %v3001 = vmul.f32 %v2990, %v2968
    %v3002 = vmul.f32 %v2990, %v2969
    %v3003 = vmul.f32 %v2990, %v2970
    %v3004 = vmul.f32 %v2990, %v2971
    %v3005 = vmul.f32 %v2990, %v2972
    %v3006 = vmul.f32 %v2990, %v2973
    %v3007 = vmul.f32 %v2990, %v2974
    %v3008 = vmul.f32 %v2990, %v2975
    %v3009 = vmul.f32 %v2990, %v2976
    %v3010 = vmul.f32 %v2990, %v2977
    %v3011 = vmul.f32 %v2990, %v2978
    %v3012 = vmul.f32 %v2990, %v2979
    %v3013 = vmul.f32 %v2990, %v2980
    %v3014 = vmul.f32 %v2990, %v2981
    %v3015 = vmul.f32 %v2990, %v2982
    %v3016 = vmul.f32 %v2990, %v2983
    %v3017 = vmul.f32 %v2990, %v2984
    %v3018 = vmul.f32 %v2990, %v2985
    %v3019 = vmul.f32 %v2990, %v2986
    %v3020 = vmul.f32 %v2990, %v2987
    %v3021 = vmul.f32 %v2990, %v2988
    %v3022 = vmul.f32 %v2990, %v2989
    %v3023 = vadd.f32 %v2926, %v2991
    %v3024 = vadd.f32 %v2927, %v2992
    %v3025 = vadd.f32 %v2928, %v2993
    %v3026 = vadd.f32 %v2929, %v2994
    %v3027 = vadd.f32 %v2930, %v2995
    %v3028 = vadd.f32 %v2931, %v2996
    %v3029 = vadd.f32 %v2932, %v2997
    %v3030 = vadd.f32 %v2933, %v2998
    %v3031 = vadd.f32 %v2934, %v2999
    %v3032 = vadd.f32 %v2935, %v3000
    %v3033 = vadd.f32 %v2936, %v3001
    %v3034 = vadd.f32 %v2937, %v3002
    %v3035 = vadd.f32 %v2938, %v3003
    %v3036 = vadd.f32 %v2939, %v3004
    %v3037 = vadd.f32 %v2940, %v3005
    %v3038 = vadd.f32 %v2941, %v3006
    %v3039 = vadd.f32 %v2942, %v3007
    %v3040 = vadd.f32 %v2943, %v3008
    %v3041 = vadd.f32 %v2944, %v3009
    %v3042 = vadd.f32 %v2945, %v3010
    %v3043 = vadd.f32 %v2946, %v3011
    %v3044 = vadd.f32 %v2947, %v3012
    %v3045 = vadd.f32 %v2948, %v3013
    %v3046 = vadd.f32 %v2949, %v3014
    %v3047 = vadd.f32 %v2950, %v3015
    %v3048 = vadd.f32 %v2951, %v3016
    %v3049 = vadd.f32 %v2952, %v3017
    %v3050 = vadd.f32 %v2953, %v3018
    %v3051 = vadd.f32 %v2954, %v3019
    %v3052 = vadd.f32 %v2955, %v3020
    %v3053 = vadd.f32 %v2956, %v3021
    %v3054 = vadd.f32 %v2957, %v3022
    %v3055 = vpack.c.bf16 %v3024, %v3023
    %v3056 = vpack.c.bf16 %v3026, %v3025
    %v3057 = vpack.c.bf16 %v3028, %v3027
    %v3058 = vpack.c.bf16 %v3030, %v3029
    %v3059 = vpack.c.bf16 %v3032, %v3031
    %v3060 = vpack.c.bf16 %v3034, %v3033
    %v3061 = vpack.c.bf16 %v3036, %v3035
    %v3062 = vpack.c.bf16 %v3038, %v3037
    %v3063 = vpack.c.bf16 %v3040, %v3039
    %v3064 = vpack.c.bf16 %v3042, %v3041
    %v3065 = vpack.c.bf16 %v3044, %v3043
    %v3066 = vpack.c.bf16 %v3046, %v3045
    %v3067 = vpack.c.bf16 %v3048, %v3047
    %v3068 = vpack.c.bf16 %v3050, %v3049
    %v3069 = vpack.c.bf16 %v3052, %v3051
    %v3070 = vpack.c.bf16 %v3054, %v3053
    %s3071 = scalar_lea.vmem [#allocation14], 128
    %v3072 = vld [vmem:[%s3071] sm:$0xf]
    %v3073 = vld [vmem:[%s3071 + $0x4] sm:$0xf]
    %v3074 = vld [vmem:[%s3071 + $0x8] sm:$0xf]
    %v3075 = vld [vmem:[%s3071 + $0xc] sm:$0xf]
    %v3076 = vld [vmem:[%s3071 + $0x10] sm:$0xf]
    %v3077 = vld [vmem:[%s3071 + $0x14] sm:$0xf]
    %v3078 = vld [vmem:[%s3071 + $0x18] sm:$0xf]
    %v3079 = vld [vmem:[%s3071 + $0x1c] sm:$0xf]
    %v3080 = vld [vmem:[%s3071 + $0x20] sm:$0xf]
    %v3081 = vld [vmem:[%s3071 + $0x24] sm:$0xf]
    %v3082 = vld [vmem:[%s3071 + $0x28] sm:$0xf]
    %v3083 = vld [vmem:[%s3071 + $0x2c] sm:$0xf]
    %v3084 = vld [vmem:[%s3071 + $0x30] sm:$0xf]
    %v3085 = vld [vmem:[%s3071 + $0x34] sm:$0xf]
    %v3086 = vld [vmem:[%s3071 + $0x38] sm:$0xf]
    %v3087 = vld [vmem:[%s3071 + $0x3c] sm:$0xf]
    %v3104 = vunpack.c.l.b16 %v3072
    %v3105 = vunpack.c.l.b16 %v3073
    %v3106 = vunpack.c.l.b16 %v3074
    %v3107 = vunpack.c.l.b16 %v3075
    %v3108 = vunpack.c.l.b16 %v3076
    %v3109 = vunpack.c.l.b16 %v3077
    %v3110 = vunpack.c.l.b16 %v3078
    %v3111 = vunpack.c.l.b16 %v3079
    %v3112 = vunpack.c.l.b16 %v3080
    %v3113 = vunpack.c.l.b16 %v3081
    %v3114 = vunpack.c.l.b16 %v3082
    %v3115 = vunpack.c.l.b16 %v3083
    %v3116 = vunpack.c.l.b16 %v3084
    %v3117 = vunpack.c.l.b16 %v3085
    %v3118 = vunpack.c.l.b16 %v3086
    %v3119 = vunpack.c.l.b16 %v3087
    %v3120 = vpack.c.b16 %v3105, %v3104
    %v3121 = vpack.c.b16 %v3107, %v3106
    %v3122 = vpack.c.b16 %v3109, %v3108
    %v3123 = vpack.c.b16 %v3111, %v3110
    %v3124 = vpack.c.b16 %v3113, %v3112
    %v3125 = vpack.c.b16 %v3115, %v3114
    %v3126 = vpack.c.b16 %v3117, %v3116
    %v3127 = vpack.c.b16 %v3119, %v3118
    %3136 = vmatprep.subr.bf16.mxu0 0
    %3137 = vmatpush1.bf16.msra.mxu0 %v3127
    %3138 = vmatprep.subr.bf16.mxu0 0
    %3139 = vmatpush1.bf16.msra.mxu0 %v3126
    %3140 = vmatprep.subr.bf16.mxu0 0
    %3141 = vmatpush1.bf16.msra.mxu0 %v3125
    %3142 = vmatprep.subr.bf16.mxu0 0
    %3143 = vmatpush1.bf16.msra.mxu0 %v3124
    %3144 = vmatprep.subr.bf16.mxu0 0
    %3145 = vmatpush1.bf16.msra.mxu0 %v3123
    %3146 = vmatprep.subr.bf16.mxu0 0
    %3147 = vmatpush1.bf16.msra.mxu0 %v3122
    %3148 = vmatprep.subr.bf16.mxu0 0
    %3149 = vmatpush1.bf16.msra.mxu0 %v3121
    %3150 = vmatprep.subr.bf16.mxu0 0
    %3151 = vmatpush1.bf16.msra.mxu0 %v3120
    %3152 = vmatprep.subr.bf16.mxu0 0
    %3153 = vmatpush2.bf16.msra.mxu0 0
    %3154 = vmatprep.subr.bf16.mxu0 0
    %3155 = vmatpush2.bf16.msra.mxu0 0
    %3156 = vmatprep.subr.bf16.mxu0 0
    %3157 = vmatpush2.bf16.msra.mxu0 0
    %3158 = vmatprep.subr.bf16.mxu0 0
    %3159 = vmatpush2.bf16.msra.mxu0 0
    %3160 = vmatprep.subr.bf16.mxu0 0
    %3161 = vmatpush2.bf16.msra.mxu0 0
    %3162 = vmatprep.subr.bf16.mxu0 0
    %3163 = vmatpush2.bf16.msra.mxu0 0
    %3164 = vmatprep.subr.bf16.mxu0 0
    %3165 = vmatpush2.bf16.msra.mxu0 0
    %3166 = vmatprep.subr.bf16.mxu0 0
    %3167 = vmatpush2.bf16.msra.mxu0 0
    %3168 = vmatprep.mubr.bf16.mxu0 0
    %3169 = vmatmul.mubr.bf16.gmra.mxu0 %v3055
    %v3170 = vpop.f32.mrf.mxu0
    %v3171 = vadd.f32 0.0, %v3170
    %v3172 = vpop.f32.mrf.mxu0
    %v3173 = vpop.f32.mrf.mxu0
    %v3174 = vadd.f32 0.0, %v3173
    %v3175 = vpop.f32.mrf.mxu0
    %3176 = vmatprep.mubr.bf16.mxu0 0
    %3177 = vmatmul.mubr.bf16.gmra.mxu0 %v3056
    %v3178 = vpop.f32.mrf.mxu0
    %v3179 = vadd.f32 0.0, %v3178
    %v3180 = vpop.f32.mrf.mxu0
    %v3181 = vpop.f32.mrf.mxu0
    %v3182 = vadd.f32 0.0, %v3181
    %v3183 = vpop.f32.mrf.mxu0
    %3184 = vmatprep.mubr.bf16.mxu0 0
    %3185 = vmatmul.mubr.bf16.gmra.mxu0 %v3057
    %v3186 = vpop.f32.mrf.mxu0
    %v3187 = vadd.f32 0.0, %v3186
    %v3188 = vpop.f32.mrf.mxu0
    %v3189 = vpop.f32.mrf.mxu0
    %v3190 = vadd.f32 0.0, %v3189
    %v3191 = vpop.f32.mrf.mxu0
    %3192 = vmatprep.mubr.bf16.mxu0 0
    %3193 = vmatmul.mubr.bf16.gmra.mxu0 %v3058
    %v3194 = vpop.f32.mrf.mxu0
    %v3195 = vadd.f32 0.0, %v3194
    %v3196 = vpop.f32.mrf.mxu0
    %v3197 = vpop.f32.mrf.mxu0
    %v3198 = vadd.f32 0.0, %v3197
    %v3199 = vpop.f32.mrf.mxu0
    %3200 = vmatprep.mubr.bf16.mxu0 0
    %3201 = vmatmul.mubr.bf16.gmra.mxu0 %v3059
    %v3202 = vpop.f32.mrf.mxu0
    %v3203 = vadd.f32 0.0, %v3202
    %v3204 = vpop.f32.mrf.mxu0
    %v3205 = vpop.f32.mrf.mxu0
    %v3206 = vadd.f32 0.0, %v3205
    %v3207 = vpop.f32.mrf.mxu0
    %3208 = vmatprep.mubr.bf16.mxu0 0
    %3209 = vmatmul.mubr.bf16.gmra.mxu0 %v3060
    %v3210 = vpop.f32.mrf.mxu0
    %v3211 = vadd.f32 0.0, %v3210
    %v3212 = vpop.f32.mrf.mxu0
    %v3213 = vpop.f32.mrf.mxu0
    %v3214 = vadd.f32 0.0, %v3213
    %v3215 = vpop.f32.mrf.mxu0
    %3216 = vmatprep.mubr.bf16.mxu0 0
    %3217 = vmatmul.mubr.bf16.gmra.mxu0 %v3061
    %v3218 = vpop.f32.mrf.mxu0
    %v3219 = vadd.f32 0.0, %v3218
    %v3220 = vpop.f32.mrf.mxu0
    %v3221 = vpop.f32.mrf.mxu0
    %v3222 = vadd.f32 0.0, %v3221
    %v3223 = vpop.f32.mrf.mxu0
    %3224 = vmatprep.mubr.bf16.mxu0 0
    %3225 = vmatmul.mubr.bf16.gmra.mxu0 %v3062
    %v3226 = vpop.f32.mrf.mxu0
    %v3227 = vadd.f32 0.0, %v3226
    %v3228 = vpop.f32.mrf.mxu0
    %v3229 = vpop.f32.mrf.mxu0
    %v3230 = vadd.f32 0.0, %v3229
    %v3231 = vpop.f32.mrf.mxu0
    %3232 = vmatprep.mubr.bf16.mxu0 0
    %3233 = vmatmul.mubr.bf16.gmra.mxu0 %v3063
    %v3234 = vpop.f32.mrf.mxu0
    %v3235 = vadd.f32 0.0, %v3234
    %v3236 = vpop.f32.mrf.mxu0
    %v3237 = vpop.f32.mrf.mxu0
    %v3238 = vadd.f32 0.0, %v3237
    %v3239 = vpop.f32.mrf.mxu0
    %3240 = vmatprep.mubr.bf16.mxu0 0
    %3241 = vmatmul.mubr.bf16.gmra.mxu0 %v3064
    %v3242 = vpop.f32.mrf.mxu0
    %v3243 = vadd.f32 0.0, %v3242
    %v3244 = vpop.f32.mrf.mxu0
    %v3245 = vpop.f32.mrf.mxu0
    %v3246 = vadd.f32 0.0, %v3245
    %v3247 = vpop.f32.mrf.mxu0
    %3248 = vmatprep.mubr.bf16.mxu0 0
    %3249 = vmatmul.mubr.bf16.gmra.mxu0 %v3065
    %v3250 = vpop.f32.mrf.mxu0
    %v3251 = vadd.f32 0.0, %v3250
    %v3252 = vpop.f32.mrf.mxu0
    %v3253 = vpop.f32.mrf.mxu0
    %v3254 = vadd.f32 0.0, %v3253
    %v3255 = vpop.f32.mrf.mxu0
    %3256 = vmatprep.mubr.bf16.mxu0 0
    %3257 = vmatmul.mubr.bf16.gmra.mxu0 %v3066
    %v3258 = vpop.f32.mrf.mxu0
    %v3259 = vadd.f32 0.0, %v3258
    %v3260 = vpop.f32.mrf.mxu0
    %v3261 = vpop.f32.mrf.mxu0
    %v3262 = vadd.f32 0.0, %v3261
    %v3263 = vpop.f32.mrf.mxu0
    %3264 = vmatprep.mubr.bf16.mxu0 0
    %3265 = vmatmul.mubr.bf16.gmra.mxu0 %v3067
    %v3266 = vpop.f32.mrf.mxu0
    %v3267 = vadd.f32 0.0, %v3266
    %v3268 = vpop.f32.mrf.mxu0
    %v3269 = vpop.f32.mrf.mxu0
    %v3270 = vadd.f32 0.0, %v3269
    %v3271 = vpop.f32.mrf.mxu0
    %3272 = vmatprep.mubr.bf16.mxu0 0
    %3273 = vmatmul.mubr.bf16.gmra.mxu0 %v3068
    %v3274 = vpop.f32.mrf.mxu0
    %v3275 = vadd.f32 0.0, %v3274
    %v3276 = vpop.f32.mrf.mxu0
    %v3277 = vpop.f32.mrf.mxu0
    %v3278 = vadd.f32 0.0, %v3277
    %v3279 = vpop.f32.mrf.mxu0
    %3280 = vmatprep.mubr.bf16.mxu0 0
    %3281 = vmatmul.mubr.bf16.gmra.mxu0 %v3069
    %v3282 = vpop.f32.mrf.mxu0
    %v3283 = vadd.f32 0.0, %v3282
    %v3284 = vpop.f32.mrf.mxu0
    %v3285 = vpop.f32.mrf.mxu0
    %v3286 = vadd.f32 0.0, %v3285
    %v3287 = vpop.f32.mrf.mxu0
    %3288 = vmatprep.mubr.bf16.mxu0 0
    %3289 = vmatmul.mubr.bf16.gmra.mxu0 %v3070
    %v3290 = vpop.f32.mrf.mxu0
    %v3291 = vadd.f32 0.0, %v3290
    %v3292 = vpop.f32.mrf.mxu0
    %v3293 = vpop.f32.mrf.mxu0
    %v3294 = vadd.f32 0.0, %v3293
    %v3295 = vpop.f32.mrf.mxu0
    %3296 = vdwg.mxu0
    %v3297 = vstv %s2521
    %v3298 = vmul.f32 %v3297, %v3171
    %v3299 = vmul.f32 %v3297, %v3174
    %v3300 = vmul.f32 %v3297, %v3179
    %v3301 = vmul.f32 %v3297, %v3182
    %v3302 = vmul.f32 %v3297, %v3187
    %v3303 = vmul.f32 %v3297, %v3190
    %v3304 = vmul.f32 %v3297, %v3195
    %v3305 = vmul.f32 %v3297, %v3198
    %v3306 = vmul.f32 %v3297, %v3203
    %v3307 = vmul.f32 %v3297, %v3206
    %v3308 = vmul.f32 %v3297, %v3211
    %v3309 = vmul.f32 %v3297, %v3214
    %v3310 = vmul.f32 %v3297, %v3219
    %v3311 = vmul.f32 %v3297, %v3222
    %v3312 = vmul.f32 %v3297, %v3227
    %v3313 = vmul.f32 %v3297, %v3230
    %v3314 = vmul.f32 %v3297, %v3235
    %v3315 = vmul.f32 %v3297, %v3238
    %v3316 = vmul.f32 %v3297, %v3243
    %v3317 = vmul.f32 %v3297, %v3246
    %v3318 = vmul.f32 %v3297, %v3251
    %v3319 = vmul.f32 %v3297, %v3254
    %v3320 = vmul.f32 %v3297, %v3259
    %v3321 = vmul.f32 %v3297, %v3262
    %v3322 = vmul.f32 %v3297, %v3267
    %v3323 = vmul.f32 %v3297, %v3270
    %v3324 = vmul.f32 %v3297, %v3275
    %v3325 = vmul.f32 %v3297, %v3278
    %v3326 = vmul.f32 %v3297, %v3283
    %v3327 = vmul.f32 %v3297, %v3286
    %v3328 = vmul.f32 %v3297, %v3291
    %v3329 = vmul.f32 %v3297, %v3294
    %s3330 = ssub.f32 1.0, %s2521
    %v3331 = vstv %s3330
    %v3332 = vmul.f32 %v3331, %v3023
    %v3333 = vmul.f32 %v3331, %v3024
    %v3334 = vmul.f32 %v3331, %v3025
    %v3335 = vmul.f32 %v3331, %v3026
    %v3336 = vmul.f32 %v3331, %v3027
    %v3337 = vmul.f32 %v3331, %v3028
    %v3338 = vmul.f32 %v3331, %v3029
    %v3339 = vmul.f32 %v3331, %v3030
    %v3340 = vmul.f32 %v3331, %v3031
    %v3341 = vmul.f32 %v3331, %v3032
    %v3342 = vmul.f32 %v3331, %v3033
    %v3343 = vmul.f32 %v3331, %v3034
    %v3344 = vmul.f32 %v3331, %v3035
    %v3345 = vmul.f32 %v3331, %v3036
    %v3346 = vmul.f32 %v3331, %v3037
    %v3347 = vmul.f32 %v3331, %v3038
    %v3348 = vmul.f32 %v3331, %v3039
    %v3349 = vmul.f32 %v3331, %v3040
    %v3350 = vmul.f32 %v3331, %v3041
    %v3351 = vmul.f32 %v3331, %v3042
    %v3352 = vmul.f32 %v3331, %v3043
    %v3353 = vmul.f32 %v3331, %v3044
    %v3354 = vmul.f32 %v3331, %v3045
    %v3355 = vmul.f32 %v3331, %v3046
    %v3356 = vmul.f32 %v3331, %v3047
    %v3357 = vmul.f32 %v3331, %v3048
    %v3358 = vmul.f32 %v3331, %v3049
    %v3359 = vmul.f32 %v3331, %v3050
    %v3360 = vmul.f32 %v3331, %v3051
    %v3361 = vmul.f32 %v3331, %v3052
    %v3362 = vmul.f32 %v3331, %v3053
    %v3363 = vmul.f32 %v3331, %v3054
    %v3364 = vadd.f32 %v3298, %v3332
    %v3365 = vadd.f32 %v3299, %v3333
    %v3366 = vadd.f32 %v3300, %v3334
    %v3367 = vadd.f32 %v3301, %v3335
    %v3368 = vadd.f32 %v3302, %v3336
    %v3369 = vadd.f32 %v3303, %v3337
    %v3370 = vadd.f32 %v3304, %v3338
    %v3371 = vadd.f32 %v3305, %v3339
    %v3372 = vadd.f32 %v3306, %v3340
    %v3373 = vadd.f32 %v3307, %v3341
    %v3374 = vadd.f32 %v3308, %v3342
    %v3375 = vadd.f32 %v3309, %v3343
    %v3376 = vadd.f32 %v3310, %v3344
    %v3377 = vadd.f32 %v3311, %v3345
    %v3378 = vadd.f32 %v3312, %v3346
    %v3379 = vadd.f32 %v3313, %v3347
    %v3380 = vadd.f32 %v3314, %v3348
    %v3381 = vadd.f32 %v3315, %v3349
    %v3382 = vadd.f32 %v3316, %v3350
    %v3383 = vadd.f32 %v3317, %v3351
    %v3384 = vadd.f32 %v3318, %v3352
    %v3385 = vadd.f32 %v3319, %v3353
    %v3386 = vadd.f32 %v3320, %v3354
    %v3387 = vadd.f32 %v3321, %v3355
    %v3388 = vadd.f32 %v3322, %v3356
    %v3389 = vadd.f32 %v3323, %v3357
    %v3390 = vadd.f32 %v3324, %v3358
    %v3391 = vadd.f32 %v3325, %v3359
    %v3392 = vadd.f32 %v3326, %v3360
    %v3393 = vadd.f32 %v3327, %v3361
    %v3394 = vadd.f32 %v3328, %v3362
    %v3395 = vadd.f32 %v3329, %v3363
    %v3396 = vadd.f32 %v3364, %v2523
    %v3397 = vadd.f32 %v3365, %v2524
    %v3398 = vadd.f32 %v3366, %v2525
    %v3399 = vadd.f32 %v3367, %v2526
    %v3400 = vadd.f32 %v3368, %v2527
    %v3401 = vadd.f32 %v3369, %v2528
    %v3402 = vadd.f32 %v3370, %v2529
    %v3403 = vadd.f32 %v3371, %v2530
    %v3404 = vadd.f32 %v3372, %v2531
    %v3405 = vadd.f32 %v3373, %v2532
    %v3406 = vadd.f32 %v3374, %v2533
    %v3407 = vadd.f32 %v3375, %v2534
    %v3408 = vadd.f32 %v3376, %v2535
    %v3409 = vadd.f32 %v3377, %v2536
    %v3410 = vadd.f32 %v3378, %v2537
    %v3411 = vadd.f32 %v3379, %v2538
    %v3412 = vadd.f32 %v3380, %v2539
    %v3413 = vadd.f32 %v3381, %v2540
    %v3414 = vadd.f32 %v3382, %v2541
    %v3415 = vadd.f32 %v3383, %v2542
    %v3416 = vadd.f32 %v3384, %v2543
    %v3417 = vadd.f32 %v3385, %v2544
    %v3418 = vadd.f32 %v3386, %v2545
    %v3419 = vadd.f32 %v3387, %v2546
    %v3420 = vadd.f32 %v3388, %v2547
    %v3421 = vadd.f32 %v3389, %v2548
    %v3422 = vadd.f32 %v3390, %v2549
    %v3423 = vadd.f32 %v3391, %v2550
    %v3424 = vadd.f32 %v3392, %v2551
    %v3425 = vadd.f32 %v3393, %v2552
    %v3426 = vadd.f32 %v3394, %v2553
    %v3427 = vadd.f32 %v3395, %v2554
    %v3428 = vmax.f32 %v3396, 0.0
    %v3429 = vmax.f32 %v3397, 0.0
    %v3430 = vmax.f32 %v3398, 0.0
    %v3431 = vmax.f32 %v3399, 0.0
    %v3432 = vmax.f32 %v3400, 0.0
    %v3433 = vmax.f32 %v3401, 0.0
    %v3434 = vmax.f32 %v3402, 0.0
    %v3435 = vmax.f32 %v3403, 0.0
    %v3436 = vmax.f32 %v3404, 0.0
    %v3437 = vmax.f32 %v3405, 0.0
    %v3438 = vmax.f32 %v3406, 0.0
    %v3439 = vmax.f32 %v3407, 0.0
    %v3440 = vmax.f32 %v3408, 0.0
    %v3441 = vmax.f32 %v3409, 0.0
    %v3442 = vmax.f32 %v3410, 0.0
    %v3443 = vmax.f32 %v3411, 0.0
    %v3444 = vmax.f32 %v3412, 0.0
    %v3445 = vmax.f32 %v3413, 0.0
    %v3446 = vmax.f32 %v3414, 0.0
    %v3447 = vmax.f32 %v3415, 0.0
    %v3448 = vmax.f32 %v3416, 0.0
    %v3449 = vmax.f32 %v3417, 0.0
    %v3450 = vmax.f32 %v3418, 0.0
    %v3451 = vmax.f32 %v3419, 0.0
    %v3452 = vmax.f32 %v3420, 0.0
    %v3453 = vmax.f32 %v3421, 0.0
    %v3454 = vmax.f32 %v3422, 0.0
    %v3455 = vmax.f32 %v3423, 0.0
    %v3456 = vmax.f32 %v3424, 0.0
    %v3457 = vmax.f32 %v3425, 0.0
    %v3458 = vmax.f32 %v3426, 0.0
    %v3459 = vmax.f32 %v3427, 0.0
    %3460 = vst [vmem:[#allocation2] sm:$0xff] %v3428
    %3461 = vst [vmem:[#allocation2 + $0x8] sm:$0xff] %v3429
    %3462 = vst [vmem:[#allocation2 + $0x10] sm:$0xff] %v3430
    %3463 = vst [vmem:[#allocation2 + $0x18] sm:$0xff] %v3431
    %3464 = vst [vmem:[#allocation2 + $0x20] sm:$0xff] %v3432
    %3465 = vst [vmem:[#allocation2 + $0x28] sm:$0xff] %v3433
    %3466 = vst [vmem:[#allocation2 + $0x30] sm:$0xff] %v3434
    %3467 = vst [vmem:[#allocation2 + $0x38] sm:$0xff] %v3435
    %3468 = vst [vmem:[#allocation2 + $0x40] sm:$0xff] %v3436
    %3469 = vst [vmem:[#allocation2 + $0x48] sm:$0xff] %v3437
    %3470 = vst [vmem:[#allocation2 + $0x50] sm:$0xff] %v3438
    %3471 = vst [vmem:[#allocation2 + $0x58] sm:$0xff] %v3439
    %3472 = vst [vmem:[#allocation2 + $0x60] sm:$0xff] %v3440
    %3473 = vst [vmem:[#allocation2 + $0x68] sm:$0xff] %v3441
    %3474 = vst [vmem:[#allocation2 + $0x70] sm:$0xff] %v3442
    %3475 = vst [vmem:[#allocation2 + $0x78] sm:$0xff] %v3443
    %3476 = vst [vmem:[#allocation2 + $0x80] sm:$0xff] %v3444
    %3477 = vst [vmem:[#allocation2 + $0x88] sm:$0xff] %v3445
    %3478 = vst [vmem:[#allocation2 + $0x90] sm:$0xff] %v3446
    %3479 = vst [vmem:[#allocation2 + $0x98] sm:$0xff] %v3447
    %3480 = vst [vmem:[#allocation2 + $0xa0] sm:$0xff] %v3448
    %3481 = vst [vmem:[#allocation2 + $0xa8] sm:$0xff] %v3449
    %3482 = vst [vmem:[#allocation2 + $0xb0] sm:$0xff] %v3450
    %3483 = vst [vmem:[#allocation2 + $0xb8] sm:$0xff] %v3451
    %3484 = vst [vmem:[#allocation2 + $0xc0] sm:$0xff] %v3452
    %3485 = vst [vmem:[#allocation2 + $0xc8] sm:$0xff] %v3453
    %3486 = vst [vmem:[#allocation2 + $0xd0] sm:$0xff] %v3454
    %3487 = vst [vmem:[#allocation2 + $0xd8] sm:$0xff] %v3455
    %3488 = vst [vmem:[#allocation2 + $0xe0] sm:$0xff] %v3456
    %3489 = vst [vmem:[#allocation2 + $0xe8] sm:$0xff] %v3457
    %3490 = vst [vmem:[#allocation2 + $0xf0] sm:$0xff] %v3458
    %3491 = vst [vmem:[#allocation2 + $0xf8] sm:$0xff] %v3459
    %v3492 = vld [vmem:[#allocation2] sm:$0xff]
    %v3493 = vld [vmem:[#allocation2 + $0x8] sm:$0xff]
    %v3494 = vld [vmem:[#allocation2 + $0x10] sm:$0xff]
    %v3495 = vld [vmem:[#allocation2 + $0x18] sm:$0xff]
    %v3496 = vld [vmem:[#allocation2 + $0x20] sm:$0xff]
    %v3497 = vld [vmem:[#allocation2 + $0x28] sm:$0xff]
    %v3498 = vld [vmem:[#allocation2 + $0x30] sm:$0xff]
    %v3499 = vld [vmem:[#allocation2 + $0x38] sm:$0xff]
    %v3500 = vld [vmem:[#allocation2 + $0x40] sm:$0xff]
    %v3501 = vld [vmem:[#allocation2 + $0x48] sm:$0xff]
    %v3502 = vld [vmem:[#allocation2 + $0x50] sm:$0xff]
    %v3503 = vld [vmem:[#allocation2 + $0x58] sm:$0xff]
    %v3504 = vld [vmem:[#allocation2 + $0x60] sm:$0xff]
    %v3505 = vld [vmem:[#allocation2 + $0x68] sm:$0xff]
    %v3506 = vld [vmem:[#allocation2 + $0x70] sm:$0xff]
    %v3507 = vld [vmem:[#allocation2 + $0x78] sm:$0xff]
    %v3508 = vld [vmem:[#allocation2 + $0x80] sm:$0xff]
    %v3509 = vld [vmem:[#allocation2 + $0x88] sm:$0xff]
    %v3510 = vld [vmem:[#allocation2 + $0x90] sm:$0xff]
    %v3511 = vld [vmem:[#allocation2 + $0x98] sm:$0xff]
    %v3512 = vld [vmem:[#allocation2 + $0xa0] sm:$0xff]
    %v3513 = vld [vmem:[#allocation2 + $0xa8] sm:$0xff]
    %v3514 = vld [vmem:[#allocation2 + $0xb0] sm:$0xff]
    %v3515 = vld [vmem:[#allocation2 + $0xb8] sm:$0xff]
    %v3516 = vld [vmem:[#allocation2 + $0xc0] sm:$0xff]
    %v3517 = vld [vmem:[#allocation2 + $0xc8] sm:$0xff]
    %v3518 = vld [vmem:[#allocation2 + $0xd0] sm:$0xff]
    %v3519 = vld [vmem:[#allocation2 + $0xd8] sm:$0xff]
    %v3520 = vld [vmem:[#allocation2 + $0xe0] sm:$0xff]
    %v3521 = vld [vmem:[#allocation2 + $0xe8] sm:$0xff]
    %v3522 = vld [vmem:[#allocation2 + $0xf0] sm:$0xff]
    %v3523 = vld [vmem:[#allocation2 + $0xf8] sm:$0xff]
    %v3524 = vpack.c.bf16 %v3493, %v3492
    %v3525 = vpack.c.bf16 %v3495, %v3494
    %v3526 = vpack.c.bf16 %v3497, %v3496
    %v3527 = vpack.c.bf16 %v3499, %v3498
    %v3528 = vpack.c.bf16 %v3501, %v3500
    %v3529 = vpack.c.bf16 %v3503, %v3502
    %v3530 = vpack.c.bf16 %v3505, %v3504
    %v3531 = vpack.c.bf16 %v3507, %v3506
    %v3532 = vpack.c.bf16 %v3509, %v3508
    %v3533 = vpack.c.bf16 %v3511, %v3510
    %v3534 = vpack.c.bf16 %v3513, %v3512
    %v3535 = vpack.c.bf16 %v3515, %v3514
    %v3536 = vpack.c.bf16 %v3517, %v3516
    %v3537 = vpack.c.bf16 %v3519, %v3518
    %v3538 = vpack.c.bf16 %v3521, %v3520
    %v3539 = vpack.c.bf16 %v3523, %v3522
    %v3540 = vld [vmem:[#allocation15] sm:$0xf]
    %v3541 = vld [vmem:[#allocation15 + $0x4] sm:$0xf]
    %v3542 = vld [vmem:[#allocation15 + $0x8] sm:$0xf]
    %v3543 = vld [vmem:[#allocation15 + $0xc] sm:$0xf]
    %v3544 = vld [vmem:[#allocation15 + $0x10] sm:$0xf]
    %v3545 = vld [vmem:[#allocation15 + $0x14] sm:$0xf]
    %v3546 = vld [vmem:[#allocation15 + $0x18] sm:$0xf]
    %v3547 = vld [vmem:[#allocation15 + $0x1c] sm:$0xf]
    %v3548 = vld [vmem:[#allocation15 + $0x20] sm:$0xf]
    %v3549 = vld [vmem:[#allocation15 + $0x24] sm:$0xf]
    %v3550 = vld [vmem:[#allocation15 + $0x28] sm:$0xf]
    %v3551 = vld [vmem:[#allocation15 + $0x2c] sm:$0xf]
    %v3552 = vld [vmem:[#allocation15 + $0x30] sm:$0xf]
    %v3553 = vld [vmem:[#allocation15 + $0x34] sm:$0xf]
    %v3554 = vld [vmem:[#allocation15 + $0x38] sm:$0xf]
    %v3555 = vld [vmem:[#allocation15 + $0x3c] sm:$0xf]
    %v3556 = vld [vmem:[%s7] sm:$0x1]
    %v3558 = vlaneseq
    %v3559 = vshrl.u32 %v3558, 7
    %v3560 = vsub.s32 0, %v3559
    %v3561 = vrot.slane %v3556, %v3560
    %v3579 = vunpack.c.l.b16 %v3540
    %v3580 = vunpack.c.l.b16 %v3541
    %v3581 = vunpack.c.l.b16 %v3542
    %v3582 = vunpack.c.l.b16 %v3543
    %v3583 = vunpack.c.l.b16 %v3544
    %v3584 = vunpack.c.l.b16 %v3545
    %v3585 = vunpack.c.l.b16 %v3546
    %v3586 = vunpack.c.l.b16 %v3547
    %v3587 = vunpack.c.l.b16 %v3548
    %v3588 = vunpack.c.l.b16 %v3549
    %v3589 = vunpack.c.l.b16 %v3550
    %v3590 = vunpack.c.l.b16 %v3551
    %v3591 = vunpack.c.l.b16 %v3552
    %v3592 = vunpack.c.l.b16 %v3553
    %v3593 = vunpack.c.l.b16 %v3554
    %v3594 = vunpack.c.l.b16 %v3555
    %v3595 = vpack.c.b16 %v3580, %v3579
    %v3596 = vpack.c.b16 %v3582, %v3581
    %v3597 = vpack.c.b16 %v3584, %v3583
    %v3598 = vpack.c.b16 %v3586, %v3585
    %v3599 = vpack.c.b16 %v3588, %v3587
    %v3600 = vpack.c.b16 %v3590, %v3589
    %v3601 = vpack.c.b16 %v3592, %v3591
    %v3602 = vpack.c.b16 %v3594, %v3593
    %3611 = vmatprep.subr.bf16.mxu0 0
    %3612 = vmatpush1.bf16.msra.mxu0 %v3602
    %3613 = vmatprep.subr.bf16.mxu0 0
    %3614 = vmatpush1.bf16.msra.mxu0 %v3601
    %3615 = vmatprep.subr.bf16.mxu0 0
    %3616 = vmatpush1.bf16.msra.mxu0 %v3600
    %3617 = vmatprep.subr.bf16.mxu0 0
    %3618 = vmatpush1.bf16.msra.mxu0 %v3599
    %3619 = vmatprep.subr.bf16.mxu0 0
    %3620 = vmatpush1.bf16.msra.mxu0 %v3598
    %3621 = vmatprep.subr.bf16.mxu0 0
    %3622 = vmatpush1.bf16.msra.mxu0 %v3597
    %3623 = vmatprep.subr.bf16.mxu0 0
    %3624 = vmatpush1.bf16.msra.mxu0 %v3596
    %3625 = vmatprep.subr.bf16.mxu0 0
    %3626 = vmatpush1.bf16.msra.mxu0 %v3595
    %3627 = vmatprep.subr.bf16.mxu0 0
    %3628 = vmatpush2.bf16.msra.mxu0 0
    %3629 = vmatprep.subr.bf16.mxu0 0
    %3630 = vmatpush2.bf16.msra.mxu0 0
    %3631 = vmatprep.subr.bf16.mxu0 0
    %3632 = vmatpush2.bf16.msra.mxu0 0
    %3633 = vmatprep.subr.bf16.mxu0 0
    %3634 = vmatpush2.bf16.msra.mxu0 0
    %3635 = vmatprep.subr.bf16.mxu0 0
    %3636 = vmatpush2.bf16.msra.mxu0 0
    %3637 = vmatprep.subr.bf16.mxu0 0
    %3638 = vmatpush2.bf16.msra.mxu0 0
    %3639 = vmatprep.subr.bf16.mxu0 0
    %3640 = vmatpush2.bf16.msra.mxu0 0
    %3641 = vmatprep.subr.bf16.mxu0 0
    %3642 = vmatpush2.bf16.msra.mxu0 0
    %3643 = vmatprep.mubr.bf16.mxu0 0
    %3644 = vmatmul.mubr.bf16.gmra.mxu0 %v3524
    %v3645 = vpop.f32.mrf.mxu0
    %v3646 = vadd.f32 %v3561, %v3645
    %v3647 = vpop.f32.mrf.mxu0
    %v3648 = vpop.f32.mrf.mxu0
    %v3649 = vadd.f32 %v3561, %v3648
    %v3650 = vpop.f32.mrf.mxu0
    %3651 = vmatprep.mubr.bf16.mxu0 0
    %3652 = vmatmul.mubr.bf16.gmra.mxu0 %v3525
    %v3653 = vpop.f32.mrf.mxu0
    %v3654 = vadd.f32 %v3561, %v3653
    %v3655 = vpop.f32.mrf.mxu0
    %v3656 = vpop.f32.mrf.mxu0
    %v3657 = vadd.f32 %v3561, %v3656
    %v3658 = vpop.f32.mrf.mxu0
    %3659 = vmatprep.mubr.bf16.mxu0 0
    %3660 = vmatmul.mubr.bf16.gmra.mxu0 %v3526
    %v3661 = vpop.f32.mrf.mxu0
    %v3662 = vadd.f32 %v3561, %v3661
    %v3663 = vpop.f32.mrf.mxu0
    %v3664 = vpop.f32.mrf.mxu0
    %v3665 = vadd.f32 %v3561, %v3664
    %v3666 = vpop.f32.mrf.mxu0
    %3667 = vmatprep.mubr.bf16.mxu0 0
    %3668 = vmatmul.mubr.bf16.gmra.mxu0 %v3527
    %v3669 = vpop.f32.mrf.mxu0
    %v3670 = vadd.f32 %v3561, %v3669
    %v3671 = vpop.f32.mrf.mxu0
    %v3672 = vpop.f32.mrf.mxu0
    %v3673 = vadd.f32 %v3561, %v3672
    %v3674 = vpop.f32.mrf.mxu0
    %3675 = vmatprep.mubr.bf16.mxu0 0
    %3676 = vmatmul.mubr.bf16.gmra.mxu0 %v3528
    %v3677 = vpop.f32.mrf.mxu0
    %v3678 = vadd.f32 %v3561, %v3677
    %v3679 = vpop.f32.mrf.mxu0
    %v3680 = vpop.f32.mrf.mxu0
    %v3681 = vadd.f32 %v3561, %v3680
    %v3682 = vpop.f32.mrf.mxu0
    %3683 = vmatprep.mubr.bf16.mxu0 0
    %3684 = vmatmul.mubr.bf16.gmra.mxu0 %v3529
    %v3685 = vpop.f32.mrf.mxu0
    %v3686 = vadd.f32 %v3561, %v3685
    %v3687 = vpop.f32.mrf.mxu0
    %v3688 = vpop.f32.mrf.mxu0
    %v3689 = vadd.f32 %v3561, %v3688
    %v3690 = vpop.f32.mrf.mxu0
    %3691 = vmatprep.mubr.bf16.mxu0 0
    %3692 = vmatmul.mubr.bf16.gmra.mxu0 %v3530
    %v3693 = vpop.f32.mrf.mxu0
    %v3694 = vadd.f32 %v3561, %v3693
    %v3695 = vpop.f32.mrf.mxu0
    %v3696 = vpop.f32.mrf.mxu0
    %v3697 = vadd.f32 %v3561, %v3696
    %v3698 = vpop.f32.mrf.mxu0
    %3699 = vmatprep.mubr.bf16.mxu0 0
    %3700 = vmatmul.mubr.bf16.gmra.mxu0 %v3531
    %v3701 = vpop.f32.mrf.mxu0
    %v3702 = vadd.f32 %v3561, %v3701
    %v3703 = vpop.f32.mrf.mxu0
    %v3704 = vpop.f32.mrf.mxu0
    %v3705 = vadd.f32 %v3561, %v3704
    %v3706 = vpop.f32.mrf.mxu0
    %3707 = vmatprep.mubr.bf16.mxu0 0
    %3708 = vmatmul.mubr.bf16.gmra.mxu0 %v3532
    %v3709 = vpop.f32.mrf.mxu0
    %v3710 = vadd.f32 %v3561, %v3709
    %v3711 = vpop.f32.mrf.mxu0
    %v3712 = vpop.f32.mrf.mxu0
    %v3713 = vadd.f32 %v3561, %v3712
    %v3714 = vpop.f32.mrf.mxu0
    %3715 = vmatprep.mubr.bf16.mxu0 0
    %3716 = vmatmul.mubr.bf16.gmra.mxu0 %v3533
    %v3717 = vpop.f32.mrf.mxu0
    %v3718 = vadd.f32 %v3561, %v3717
    %v3719 = vpop.f32.mrf.mxu0
    %v3720 = vpop.f32.mrf.mxu0
    %v3721 = vadd.f32 %v3561, %v3720
    %v3722 = vpop.f32.mrf.mxu0
    %3723 = vmatprep.mubr.bf16.mxu0 0
    %3724 = vmatmul.mubr.bf16.gmra.mxu0 %v3534
    %v3725 = vpop.f32.mrf.mxu0
    %v3726 = vadd.f32 %v3561, %v3725
    %v3727 = vpop.f32.mrf.mxu0
    %v3728 = vpop.f32.mrf.mxu0
    %v3729 = vadd.f32 %v3561, %v3728
    %v3730 = vpop.f32.mrf.mxu0
    %3731 = vmatprep.mubr.bf16.mxu0 0
    %3732 = vmatmul.mubr.bf16.gmra.mxu0 %v3535
    %v3733 = vpop.f32.mrf.mxu0
    %v3734 = vadd.f32 %v3561, %v3733
    %v3735 = vpop.f32.mrf.mxu0
    %v3736 = vpop.f32.mrf.mxu0
    %v3737 = vadd.f32 %v3561, %v3736
    %v3738 = vpop.f32.mrf.mxu0
    %3739 = vmatprep.mubr.bf16.mxu0 0
    %3740 = vmatmul.mubr.bf16.gmra.mxu0 %v3536
    %v3741 = vpop.f32.mrf.mxu0
    %v3742 = vadd.f32 %v3561, %v3741
    %v3743 = vpop.f32.mrf.mxu0
    %v3744 = vpop.f32.mrf.mxu0
    %v3745 = vadd.f32 %v3561, %v3744
    %v3746 = vpop.f32.mrf.mxu0
    %3747 = vmatprep.mubr.bf16.mxu0 0
    %3748 = vmatmul.mubr.bf16.gmra.mxu0 %v3537
    %v3749 = vpop.f32.mrf.mxu0
    %v3750 = vadd.f32 %v3561, %v3749
    %v3751 = vpop.f32.mrf.mxu0
    %v3752 = vpop.f32.mrf.mxu0
    %v3753 = vadd.f32 %v3561, %v3752
    %v3754 = vpop.f32.mrf.mxu0
    %3755 = vmatprep.mubr.bf16.mxu0 0
    %3756 = vmatmul.mubr.bf16.gmra.mxu0 %v3538
    %v3757 = vpop.f32.mrf.mxu0
    %v3758 = vadd.f32 %v3561, %v3757
    %v3759 = vpop.f32.mrf.mxu0
    %v3760 = vpop.f32.mrf.mxu0
    %v3761 = vadd.f32 %v3561, %v3760
    %v3762 = vpop.f32.mrf.mxu0
    %3763 = vmatprep.mubr.bf16.mxu0 0
    %3764 = vmatmul.mubr.bf16.gmra.mxu0 %v3539
    %v3765 = vpop.f32.mrf.mxu0
    %v3766 = vadd.f32 %v3561, %v3765
    %v3767 = vpop.f32.mrf.mxu0
    %v3768 = vpop.f32.mrf.mxu0
    %v3769 = vadd.f32 %v3561, %v3768
    %v3770 = vpop.f32.mrf.mxu0
    %3771 = vdwg.mxu0
    %v3772 = vsub.f32 0.0, %v3646
    %v3773 = vsub.f32 0.0, %v3649
    %v3774 = vsub.f32 0.0, %v3654
    %v3775 = vsub.f32 0.0, %v3657
    %v3776 = vsub.f32 0.0, %v3662
    %v3777 = vsub.f32 0.0, %v3665
    %v3778 = vsub.f32 0.0, %v3670
    %v3779 = vsub.f32 0.0, %v3673
    %v3780 = vsub.f32 0.0, %v3678
    %v3781 = vsub.f32 0.0, %v3681
    %v3782 = vsub.f32 0.0, %v3686
    %v3783 = vsub.f32 0.0, %v3689
    %v3784 = vsub.f32 0.0, %v3694
    %v3785 = vsub.f32 0.0, %v3697
    %v3786 = vsub.f32 0.0, %v3702
    %v3787 = vsub.f32 0.0, %v3705
    %v3788 = vsub.f32 0.0, %v3710
    %v3789 = vsub.f32 0.0, %v3713
    %v3790 = vsub.f32 0.0, %v3718
    %v3791 = vsub.f32 0.0, %v3721
    %v3792 = vsub.f32 0.0, %v3726
    %v3793 = vsub.f32 0.0, %v3729
    %v3794 = vsub.f32 0.0, %v3734
    %v3795 = vsub.f32 0.0, %v3737
    %v3796 = vsub.f32 0.0, %v3742
    %v3797 = vsub.f32 0.0, %v3745
    %v3798 = vsub.f32 0.0, %v3750
    %v3799 = vsub.f32 0.0, %v3753
    %v3800 = vsub.f32 0.0, %v3758
    %v3801 = vsub.f32 0.0, %v3761
    %v3802 = vsub.f32 0.0, %v3766
    %v3803 = vsub.f32 0.0, %v3769
    %v3804 = vmul.f32 %v3772, 1.442695
    %v3805 = vpow.pop %v3804
    %v3806 = vmul.f32 %v3773, 1.442695
    %v3807 = vpow.pop %v3806
    %v3808 = vmul.f32 %v3774, 1.442695
    %v3809 = vpow.pop %v3808
    %v3810 = vmul.f32 %v3775, 1.442695
    %v3811 = vpow.pop %v3810
    %v3812 = vmul.f32 %v3776, 1.442695
    %v3813 = vpow.pop %v3812
    %v3814 = vmul.f32 %v3777, 1.442695
    %v3815 = vpow.pop %v3814
    %v3816 = vmul.f32 %v3778, 1.442695
    %v3817 = vpow.pop %v3816
    %v3818 = vmul.f32 %v3779, 1.442695
    %v3819 = vpow.pop %v3818
    %v3820 = vmul.f32 %v3780, 1.442695
    %v3821 = vpow.pop %v3820
    %v3822 = vmul.f32 %v3781, 1.442695
    %v3823 = vpow.pop %v3822
    %v3824 = vmul.f32 %v3782, 1.442695
    %v3825 = vpow.pop %v3824
    %v3826 = vmul.f32 %v3783, 1.442695
    %v3827 = vpow.pop %v3826
    %v3828 = vmul.f32 %v3784, 1.442695
    %v3829 = vpow.pop %v3828
    %v3830 = vmul.f32 %v3785, 1.442695
    %v3831 = vpow.pop %v3830
    %v3832 = vmul.f32 %v3786, 1.442695
    %v3833 = vpow.pop %v3832
    %v3834 = vmul.f32 %v3787, 1.442695
    %v3835 = vpow.pop %v3834
    %v3836 = vmul.f32 %v3788, 1.442695
    %v3837 = vpow.pop %v3836
    %v3838 = vmul.f32 %v3789, 1.442695
    %v3839 = vpow.pop %v3838
    %v3840 = vmul.f32 %v3790, 1.442695
    %v3841 = vpow.pop %v3840
    %v3842 = vmul.f32 %v3791, 1.442695
    %v3843 = vpow.pop %v3842
    %v3844 = vmul.f32 %v3792, 1.442695
    %v3845 = vpow.pop %v3844
    %v3846 = vmul.f32 %v3793, 1.442695
    %v3847 = vpow.pop %v3846
    %v3848 = vmul.f32 %v3794, 1.442695
    %v3849 = vpow.pop %v3848
    %v3850 = vmul.f32 %v3795, 1.442695
    %v3851 = vpow.pop %v3850
    %v3852 = vmul.f32 %v3796, 1.442695
    %v3853 = vpow.pop %v3852
    %v3854 = vmul.f32 %v3797, 1.442695
    %v3855 = vpow.pop %v3854
    %v3856 = vmul.f32 %v3798, 1.442695
    %v3857 = vpow.pop %v3856
    %v3858 = vmul.f32 %v3799, 1.442695
    %v3859 = vpow.pop %v3858
    %v3860 = vmul.f32 %v3800, 1.442695
    %v3861 = vpow.pop %v3860
    %v3862 = vmul.f32 %v3801, 1.442695
    %v3863 = vpow.pop %v3862
    %v3864 = vmul.f32 %v3802, 1.442695
    %v3865 = vpow.pop %v3864
    %v3866 = vmul.f32 %v3803, 1.442695
    %v3867 = vpow.pop %v3866
    %v3868 = vadd.f32 %v3805, 1.0
    %v3869 = vadd.f32 %v3807, 1.0
    %v3870 = vadd.f32 %v3809, 1.0
    %v3871 = vadd.f32 %v3811, 1.0
    %v3872 = vadd.f32 %v3813, 1.0
    %v3873 = vadd.f32 %v3815, 1.0
    %v3874 = vadd.f32 %v3817, 1.0
    %v3875 = vadd.f32 %v3819, 1.0
    %v3876 = vadd.f32 %v3821, 1.0
    %v3877 = vadd.f32 %v3823, 1.0
    %v3878 = vadd.f32 %v3825, 1.0
    %v3879 = vadd.f32 %v3827, 1.0
    %v3880 = vadd.f32 %v3829, 1.0
    %v3881 = vadd.f32 %v3831, 1.0
    %v3882 = vadd.f32 %v3833, 1.0
    %v3883 = vadd.f32 %v3835, 1.0
    %v3884 = vadd.f32 %v3837, 1.0
    %v3885 = vadd.f32 %v3839, 1.0
    %v3886 = vadd.f32 %v3841, 1.0
    %v3887 = vadd.f32 %v3843, 1.0
    %v3888 = vadd.f32 %v3845, 1.0
    %v3889 = vadd.f32 %v3847, 1.0
    %v3890 = vadd.f32 %v3849, 1.0
    %v3891 = vadd.f32 %v3851, 1.0
    %v3892 = vadd.f32 %v3853, 1.0
    %v3893 = vadd.f32 %v3855, 1.0
    %v3894 = vadd.f32 %v3857, 1.0
    %v3895 = vadd.f32 %v3859, 1.0
    %v3896 = vadd.f32 %v3861, 1.0
    %v3897 = vadd.f32 %v3863, 1.0
    %v3898 = vadd.f32 %v3865, 1.0
    %v3899 = vadd.f32 %v3867, 1.0
    %v3900 = vrcp.pop %v3868
    %v3901 = vmul.f32 1.0, %v3900
    %v3902 = vrcp.pop %v3869
    %v3903 = vmul.f32 1.0, %v3902
    %v3904 = vrcp.pop %v3870
    %v3905 = vmul.f32 1.0, %v3904
    %v3906 = vrcp.pop %v3871
    %v3907 = vmul.f32 1.0, %v3906
    %v3908 = vrcp.pop %v3872
    %v3909 = vmul.f32 1.0, %v3908
    %v3910 = vrcp.pop %v3873
    %v3911 = vmul.f32 1.0, %v3910
    %v3912 = vrcp.pop %v3874
    %v3913 = vmul.f32 1.0, %v3912
    %v3914 = vrcp.pop %v3875
    %v3915 = vmul.f32 1.0, %v3914
    %v3916 = vrcp.pop %v3876
    %v3917 = vmul.f32 1.0, %v3916
    %v3918 = vrcp.pop %v3877
    %v3919 = vmul.f32 1.0, %v3918
    %v3920 = vrcp.pop %v3878
    %v3921 = vmul.f32 1.0, %v3920
    %v3922 = vrcp.pop %v3879
    %v3923 = vmul.f32 1.0, %v3922
    %v3924 = vrcp.pop %v3880
    %v3925 = vmul.f32 1.0, %v3924
    %v3926 = vrcp.pop %v3881
    %v3927 = vmul.f32 1.0, %v3926
    %v3928 = vrcp.pop %v3882
    %v3929 = vmul.f32 1.0, %v3928
    %v3930 = vrcp.pop %v3883
    %v3931 = vmul.f32 1.0, %v3930
    %v3932 = vrcp.pop %v3884
    %v3933 = vmul.f32 1.0, %v3932
    %v3934 = vrcp.pop %v3885
    %v3935 = vmul.f32 1.0, %v3934
    %v3936 = vrcp.pop %v3886
    %v3937 = vmul.f32 1.0, %v3936
    %v3938 = vrcp.pop %v3887
    %v3939 = vmul.f32 1.0, %v3938
    %v3940 = vrcp.pop %v3888
    %v3941 = vmul.f32 1.0, %v3940
    %v3942 = vrcp.pop %v3889
    %v3943 = vmul.f32 1.0, %v3942
    %v3944 = vrcp.pop %v3890
    %v3945 = vmul.f32 1.0, %v3944
    %v3946 = vrcp.pop %v3891
    %v3947 = vmul.f32 1.0, %v3946
    %v3948 = vrcp.pop %v3892
    %v3949 = vmul.f32 1.0, %v3948
    %v3950 = vrcp.pop %v3893
    %v3951 = vmul.f32 1.0, %v3950
    %v3952 = vrcp.pop %v3894
    %v3953 = vmul.f32 1.0, %v3952
    %v3954 = vrcp.pop %v3895
    %v3955 = vmul.f32 1.0, %v3954
    %v3956 = vrcp.pop %v3896
    %v3957 = vmul.f32 1.0, %v3956
    %v3958 = vrcp.pop %v3897
    %v3959 = vmul.f32 1.0, %v3958
    %v3960 = vrcp.pop %v3898
    %v3961 = vmul.f32 1.0, %v3960
    %v3962 = vrcp.pop %v3899
    %v3963 = vmul.f32 1.0, %v3962
    %3964 = vst [vmem:[#allocation17] sm:$0xff] %v3901
    %3965 = vst [vmem:[#allocation17 + $0x8] sm:$0xff] %v3903
    %3966 = vst [vmem:[#allocation17 + $0x10] sm:$0xff] %v3905
    %3967 = vst [vmem:[#allocation17 + $0x18] sm:$0xff] %v3907
    %3968 = vst [vmem:[#allocation17 + $0x20] sm:$0xff] %v3909
    %3969 = vst [vmem:[#allocation17 + $0x28] sm:$0xff] %v3911
    %3970 = vst [vmem:[#allocation17 + $0x30] sm:$0xff] %v3913
    %3971 = vst [vmem:[#allocation17 + $0x38] sm:$0xff] %v3915
    %3972 = vst [vmem:[#allocation17 + $0x40] sm:$0xff] %v3917
    %3973 = vst [vmem:[#allocation17 + $0x48] sm:$0xff] %v3919
    %3974 = vst [vmem:[#allocation17 + $0x50] sm:$0xff] %v3921
    %3975 = vst [vmem:[#allocation17 + $0x58] sm:$0xff] %v3923
    %3976 = vst [vmem:[#allocation17 + $0x60] sm:$0xff] %v3925
    %3977 = vst [vmem:[#allocation17 + $0x68] sm:$0xff] %v3927
    %3978 = vst [vmem:[#allocation17 + $0x70] sm:$0xff] %v3929
    %3979 = vst [vmem:[#allocation17 + $0x78] sm:$0xff] %v3931
    %3980 = vst [vmem:[#allocation17 + $0x80] sm:$0xff] %v3933
    %3981 = vst [vmem:[#allocation17 + $0x88] sm:$0xff] %v3935
    %3982 = vst [vmem:[#allocation17 + $0x90] sm:$0xff] %v3937
    %3983 = vst [vmem:[#allocation17 + $0x98] sm:$0xff] %v3939
    %3984 = vst [vmem:[#allocation17 + $0xa0] sm:$0xff] %v3941
    %3985 = vst [vmem:[#allocation17 + $0xa8] sm:$0xff] %v3943
    %3986 = vst [vmem:[#allocation17 + $0xb0] sm:$0xff] %v3945
    %3987 = vst [vmem:[#allocation17 + $0xb8] sm:$0xff] %v3947
    %3988 = vst [vmem:[#allocation17 + $0xc0] sm:$0xff] %v3949
    %3989 = vst [vmem:[#allocation17 + $0xc8] sm:$0xff] %v3951
    %3990 = vst [vmem:[#allocation17 + $0xd0] sm:$0xff] %v3953
    %3991 = vst [vmem:[#allocation17 + $0xd8] sm:$0xff] %v3955
    %3992 = vst [vmem:[#allocation17 + $0xe0] sm:$0xff] %v3957
    %3993 = vst [vmem:[#allocation17 + $0xe8] sm:$0xff] %v3959
    %3994 = vst [vmem:[#allocation17 + $0xf0] sm:$0xff] %v3961
    %3995 = vst [vmem:[#allocation17 + $0xf8] sm:$0xff] %v3963
    // Predicated region
    $region62: #{gcnii_ppi_forward.1} parent=1 // pred_check
      _
    $region63: #{gcnii_ppi_forward.1} parent=1 // pred_check_branch
      %3997 = sbr.rel (0) target = $region65
    $region64: #{gcnii_ppi_forward.1} parent=1 // pred_region
      %s3999 = ssub.s32 4096, 4096
      %4000 = vsyncadd [#allocation6], %s3999
      %s4001 = sshll.u32 [#allocation17], 4
      %s4002 = int_to_ptr.vmem [resolvable:$true] %s4001
      %4007 = dma.vmem_to_hbm [thread:$0]  %s4002, 4096, %s8, [#allocation6], 128, 128, 8
    $region65: #{gcnii_ppi_forward.1} parent=1 // pred_fallthru
      _
    // Predicated region
    $region66: #{gcnii_ppi_forward.1} parent=1 // pred_check
      _
    $region67: #{gcnii_ppi_forward.1} parent=1 // pred_check_branch
      %4009 = sbr.rel (0) target = $region69
    $region68: #{gcnii_ppi_forward.1} parent=1 // pred_region
      %4010 = dma.done [#allocation6], 4096
    $region69: #{gcnii_ppi_forward.1} parent=1 // pred_fallthru
      _
    %4011 = vsyncpa [#allocation5], 1
    %4012 = vsyncpa [#allocation10], 1
    %4013 = vsyncpa [#allocation13], 1
    %4014 = vsyncpa [#allocation16], 1
    %4015 = vsyncpa [#allocation6], 1
    %4016 = vsyncpa [#allocation7], 1

</llo_original>
